<compile_context>
chip_gen: v6e
topology: v6e:2x2x1
jax: 0.10.0
libtpu: 0.0.40
codegen_flags: <defaults>
</compile_context>

<pallas_src>
import numpy as np
import jax
import jax.numpy as jnp
from jax.experimental import pallas as pl
from jax.experimental.pallas import tpu as pltpu


# ---------------------------------------------------------------------------
# Fused kernel: conv1 -> pool1 -> conv2 -> pool2 -> fc1 -> fc2 -> fc3
# ---------------------------------------------------------------------------

def _lenet5_kernel(x_ref, t1_ref, b1_ref, t2_ref, b2_ref,
                   w3_ref, b3_ref, w4_ref, b4_ref, w5_ref, b5_ref,
                   out_ref, p1_ref):
    f32 = jnp.float32
    TB = x_ref.shape[1]                      # batch tile (multiple of 8)

    # ---- conv1 (1->6, k=5) as 5 banded matmuls, bias + ReLU fused ----------
    # x_ref: (28, TB, 28) = (h, b, w).  Rows of the matmul are (oh, b).
    # Lane layout of the 256-wide output: (ow%2)*128 + (ow//2)*6 + co,
    # i.e. the two pool-W parity halves sit at lane offsets 0 and 128.
    acc1 = jnp.dot(x_ref[0:24].reshape(24 * TB, 28), t1_ref[0],
                   preferred_element_type=f32)
    for ki in range(1, 5):
        slab = x_ref[ki:ki + 24].reshape(24 * TB, 28)          # free regroup
        acc1 = acc1 + jnp.dot(slab, t1_ref[ki], preferred_element_type=f32)
    y1 = jnp.maximum(acc1 + b1_ref[...], 0.0)                  # (24*TB, 256)

    # pool-W: both halves start on a vreg boundary -> plain VALU max.
    yw1 = jnp.maximum(y1[:, :72], y1[:, 128:200])              # (24*TB, 72)

    # pool-H: rows are (oh, b); adjacent oh are contiguous TB-row blocks.
    r1 = yw1.reshape(12, 2, TB, 72)
    p1_ref[...] = jnp.maximum(r1[:, 0], r1[:, 1])              # one store

    # ---- conv2 (6->16, k=5) as 5 banded matmuls, bias + ReLU fused ---------
    # p1_ref: (12, TB, 72) = (ph, b, (pw, ci)).  Rows of the matmul: (oh2, b).
    acc2 = jnp.dot(p1_ref[0:8].reshape(8 * TB, 72), t2_ref[0],
                   preferred_element_type=f32)
    for ki in range(1, 5):
        slab = p1_ref[ki:ki + 8].reshape(8 * TB, 72)           # free regroup
        acc2 = acc2 + jnp.dot(slab, t2_ref[ki], preferred_element_type=f32)
    y2 = jnp.maximum(acc2 + b2_ref[...], 0.0)                  # (8*TB, 256)
    yw2 = jnp.maximum(y2[:, :64], y2[:, 128:192])              # (8*TB, 64)

    # ---- pool2-H fused with fc1 (flatten order folded into w3 packing) -----
    q0 = jnp.maximum(yw2[0:TB], yw2[TB:2 * TB])                # (TB, 64)
    acc3 = jnp.dot(q0, w3_ref[0], preferred_element_type=f32)
    for ph2 in range(1, 4):
        q = jnp.maximum(yw2[(2 * ph2) * TB:(2 * ph2 + 1) * TB],
                        yw2[(2 * ph2 + 1) * TB:(2 * ph2 + 2) * TB])
        acc3 = acc3 + jnp.dot(q, w3_ref[ph2], preferred_element_type=f32)
    h1 = jnp.maximum(acc3 + b3_ref[...], 0.0)                  # fc1 + ReLU

    # ---- fc2 / fc3 (both with ReLU, matching the reference module) ---------
    h2 = jnp.maximum(jnp.dot(h1, w4_ref[...],
                             preferred_element_type=f32) + b4_ref[...], 0.0)
    out = jnp.maximum(jnp.dot(h2, w5_ref[...],
                              preferred_element_type=f32) + b5_ref[...], 0.0)
    out_ref[...] = out.astype(out_ref.dtype)


# ---------------------------------------------------------------------------
# Parameter preparation (done ONCE): banded/Toeplitz conv matrices, fc repack
# ---------------------------------------------------------------------------

def prepare_params(params):
    f32 = np.float32
    w1 = np.asarray(params["conv1_w"], f32)        # (6, 1, 5, 5)  (co,ci,ki,kj)
    w2 = np.asarray(params["conv2_w"], f32)        # (16, 6, 5, 5)

    # conv1 banded matrix T1: (5, 28, 256), lane = (ow%2)*128 + (ow//2)*6 + co
    ki, ow, kj, co = np.meshgrid(np.arange(5), np.arange(24), np.arange(5),
                                 np.arange(6), indexing="ij")
    t1 = np.zeros((5, 28, 256), f32)
    t1[ki, ow + kj, (ow % 2) * 128 + (ow // 2) * 6 + co] = w1[:, 0][co, ki, kj]

    # conv2 banded matrix T2: (5, 72, 256), lane = (ow2%2)*128 + (ow2//2)*16+co
    ki, ow2, kj, ci, co = np.meshgrid(np.arange(5), np.arange(8), np.arange(5),
                                      np.arange(6), np.arange(16), indexing="ij")
    t2 = np.zeros((5, 72, 256), f32)
    t2[ki, (ow2 + kj) * 6 + ci,
       (ow2 % 2) * 128 + (ow2 // 2) * 16 + co] = w2[co, ci, ki, kj]

    # biases padded to the same 256-lane (parity-half) layout; pad lanes = 0.
    b1_half = np.tile(np.asarray(params["conv1_b"], f32), 12)       # 72
    b1t = np.zeros((1, 256), f32)
    b1t[0, :72] = b1_half
    b1t[0, 128:200] = b1_half

    b2_half = np.tile(np.asarray(params["conv2_b"], f32), 4)        # 64
    b2t = np.zeros((1, 256), f32)
    b2t[0, :64] = b2_half
    b2t[0, 128:192] = b2_half

    # fc1 weight repacked so K order matches the kernel's (ph2, pw2*16+co)
    # layout while reproducing torch's NCHW flatten (co*16 + ph2*4 + pw2).
    fc1_w = np.asarray(params["fc1_w"], f32)
    R = fc1_w.shape[0]
    F = np.asarray(params["fc3_w"]).shape[0]
    w3 = (fc1_w.reshape(R, 16, 4, 4)            # (n, co, ph2, pw2)
               .transpose(2, 3, 1, 0)           # (ph2, pw2, co, n)
               .reshape(4, 64, R))

    return {
        "t1": jnp.asarray(t1), "b1t": jnp.asarray(b1t),
        "t2": jnp.asarray(t2), "b2t": jnp.asarray(b2t),
        "w3": jnp.asarray(w3),
        "b3": jnp.asarray(np.asarray(params["fc1_b"], f32).reshape(1, R)),
        "w4": jnp.asarray(np.asarray(params["fc2_w"], f32).T),
        "b4": jnp.asarray(np.asarray(params["fc2_b"], f32).reshape(1, R)),
        "w5": jnp.asarray(np.asarray(params["fc3_w"], f32).T),
        "b5": jnp.asarray(np.asarray(params["fc3_b"], f32).reshape(1, F)),
    }


# ---------------------------------------------------------------------------
# Forward wrapper: one pallas_call, gridded over batch tiles
# ---------------------------------------------------------------------------

def _round_up(a, m):
    return ((a + m - 1) // m) * m


def lenet5_forward(x, prep, *, batch_tile=256):
    assert batch_tile % 8 == 0
    B = x.shape[0]
    x = x.reshape(B, 28, 28).astype(jnp.float32)

    # Batch tile: multiple of 8, capped at batch_tile, and always >= 2 grid
    # steps so v7x can shard the grid over both TensorCores.
    B8 = _round_up(B, 8)
    half = _round_up(max(1, (B8 + 1) // 2), 8)
    TB = min(batch_tile, max(8, half))
    Bp = max(_round_up(B8, TB), 2 * TB)
    grid = (Bp // TB,)

    if Bp != B:
        x = jnp.pad(x, ((0, Bp - B), (0, 0), (0, 0)))
    # TODO(synk): if the producer can supply x already as (28, B, 28), this
    # transpose (an extra HBM read+write of x) can be dropped.
    x_t = jnp.transpose(x, (1, 0, 2))          # (28, Bp, 28): rows are (h, b)

    R = prep["w4"].shape[0]
    F = prep["w5"].shape[1]

    const3 = lambda i: (0, 0, 0)
    const2 = lambda i: (0, 0)

    flops = 2 * Bp * (24 * 28 * 256 * 5 + 8 * 72 * 256 * 5
                      + 4 * 64 * R + R * R + R * F)
    bytes_accessed = 4 * (x_t.size + Bp * F
                          + int(sum(int(np.prod(v.shape)) for v in prep.values())))

    out = pl.pallas_call(
        _lenet5_kernel,
        out_shape=jax.ShapeDtypeStruct((Bp, F), jnp.float32),
        grid_spec=pltpu.PrefetchScalarGridSpec(
            num_scalar_prefetch=0,
            grid=grid,
            in_specs=[
                pl.BlockSpec((28, TB, 28), lambda i: (0, i, 0)),   # x (h,b,w)
                pl.BlockSpec((5, 28, 256), const3),                # conv1 banded
                pl.BlockSpec((1, 256), const2),                    # conv1 bias
                pl.BlockSpec((5, 72, 256), const3),                # conv2 banded
                pl.BlockSpec((1, 256), const2),                    # conv2 bias
                pl.BlockSpec((4, 64, R), const3),                  # fc1 (split)
                pl.BlockSpec((1, R), const2),                      # fc1 bias
                pl.BlockSpec((R, R), const2),                      # fc2
                pl.BlockSpec((1, R), const2),                      # fc2 bias
                pl.BlockSpec((R, F), const2),                      # fc3
                pl.BlockSpec((1, F), const2),                      # fc3 bias
            ],
            out_specs=pl.BlockSpec((TB, F), lambda i: (i, 0)),
            scratch_shapes=[pltpu.VMEM((12, TB, 72), jnp.float32)],
        ),
        compiler_params=pltpu.CompilerParams(
            dimension_semantics=("parallel",),
            vmem_limit_bytes=48 * 1024 * 1024,
        ),
        cost_estimate=pl.CostEstimate(flops=flops, transcendentals=0,
                                      bytes_accessed=bytes_accessed),
    )(x_t, prep["t1"], prep["b1t"], prep["t2"], prep["b2t"],
      prep["w3"], prep["b3"], prep["w4"], prep["b4"], prep["w5"], prep["b5"])

    return out[:B]


# ---------------------------------------------------------------------------
# Parameter init (torch-like uniform init) + pure-JAX reference for checking
# ---------------------------------------------------------------------------

def init_params(key, representation_dim, final_dim):
    ks = jax.random.split(key, 10)

    def u(k, shape, fan_in):
        bound = 1.0 / float(fan_in) ** 0.5
        return jax.random.uniform(k, shape, jnp.float32, -bound, bound)

    return {
        "conv1_w": u(ks[0], (6, 1, 5, 5), 1 * 5 * 5),
        "conv1_b": u(ks[1], (6,), 1 * 5 * 5),
        "conv2_w": u(ks[2], (16, 6, 5, 5), 6 * 5 * 5),
        "conv2_b": u(ks[3], (16,), 6 * 5 * 5),
        "fc1_w": u(ks[4], (representation_dim, 16 * 4 * 4), 16 * 4 * 4),
        "fc1_b": u(ks[5], (representation_dim,), 16 * 4 * 4),
        "fc2_w": u(ks[6], (representation_dim, representation_dim), representation_dim),
        "fc2_b": u(ks[7], (representation_dim,), representation_dim),
        "fc3_w": u(ks[8], (final_dim, representation_dim), representation_dim),
        "fc3_b": u(ks[9], (final_dim,), representation_dim),
    }


def lenet5_reference(x, params):
    """Plain-JAX (XLA) replica of the PyTorch module, for correctness check."""
    B = x.shape[0]
    x = x.reshape(B, 1, 28, 28).astype(jnp.float32)

    def conv(x, w, b):
        y = jax.lax.conv_general_dilated(
            x, w, (1, 1), "VALID",
            dimension_numbers=("NCHW", "OIHW", "NCHW"))
        return y + b.reshape(1, -1, 1, 1)

    def pool(x):
        b_, c, h, w = x.shape
        return x.reshape(b_, c, h // 2, 2, w // 2, 2).max(axis=(3, 5))

    y = pool(jax.nn.relu(conv(x, params["conv1_w"], params["conv1_b"])))
    y = pool(jax.nn.relu(conv(y, params["conv2_w"], params["conv2_b"])))
    flat = y.reshape(B, 16 * 4 * 4)
    h = jax.nn.relu(flat @ params["fc1_w"].T + params["fc1_b"])
    h = jax.nn.relu(h @ params["fc2_w"].T + params["fc2_b"])
    return jax.nn.relu(h @ params["fc3_w"].T + params["fc3_b"])


# ---------------------------------------------------------------------------
# Demo
# ---------------------------------------------------------------------------

if __name__ == "__main__":
    representation_dim = 32
    final_dim = 16
    batch = 2

    key = jax.random.PRNGKey(0)
    k_params, k_x = jax.random.split(key)
    params = init_params(k_params, representation_dim, final_dim)
    prep = prepare_params(params)
    x = jax.random.normal(k_x, (batch, 28 * 28), dtype=jnp.float32)

    fwd = jax.jit(lenet5_forward)
    out = jax.block_until_ready(fwd(x, prep))
    assert out.shape == (batch, final_dim), out.shape

    ref = jax.block_until_ready(lenet5_reference(x, params))
    max_err = float(jnp.max(jnp.abs(out - ref)))
    assert bool(jnp.allclose(out, ref, rtol=1e-3, atol=1e-3)), max_err

    print("KERNEL_OK")
</pallas_src>

<mosaic_0001>
module attributes {stable_mosaic.version = 11 : i64} {
  func.func @_lenet5_kernel(%arg0: i32, %arg1: memref<28x8x28xf32, #tpu.memory_space<vmem>>, %arg2: memref<5x28x256xf32, #tpu.memory_space<vmem>>, %arg3: memref<1x256xf32, #tpu.memory_space<vmem>>, %arg4: memref<5x72x256xf32, #tpu.memory_space<vmem>>, %arg5: memref<1x256xf32, #tpu.memory_space<vmem>>, %arg6: memref<4x64x32xf32, #tpu.memory_space<vmem>>, %arg7: memref<1x32xf32, #tpu.memory_space<vmem>>, %arg8: memref<32x32xf32, #tpu.memory_space<vmem>>, %arg9: memref<1x32xf32, #tpu.memory_space<vmem>>, %arg10: memref<32x16xf32, #tpu.memory_space<vmem>>, %arg11: memref<1x16xf32, #tpu.memory_space<vmem>>, %arg12: memref<8x16xf32, #tpu.memory_space<vmem>>, %arg13: memref<12x8x72xf32, #tpu.memory_space<vmem>>) attributes {dimension_semantics = [#tpu.dimension_semantics<parallel>], iteration_bounds = array<i64: 2>, scalar_prefetch = 0 : i64, scratch_operands = 1 : i64, tpu.core_type = #tpu.core_type<tc>, window_params = [{transform_indices = @transform_0, window_bounds = array<i64: 28, 8, 28>}, {pipeline_mode = #tpu.pipeline_mode<synchronous>, transform_indices = @transform_1, window_bounds = array<i64: 5, 28, 256>}, {pipeline_mode = #tpu.pipeline_mode<synchronous>, transform_indices = @transform_2, window_bounds = array<i64: 1, 256>}, {pipeline_mode = #tpu.pipeline_mode<synchronous>, transform_indices = @transform_3, window_bounds = array<i64: 5, 72, 256>}, {pipeline_mode = #tpu.pipeline_mode<synchronous>, transform_indices = @transform_4, window_bounds = array<i64: 1, 256>}, {pipeline_mode = #tpu.pipeline_mode<synchronous>, transform_indices = @transform_5, window_bounds = array<i64: 4, 64, 32>}, {pipeline_mode = #tpu.pipeline_mode<synchronous>, transform_indices = @transform_6, window_bounds = array<i64: 1, 32>}, {pipeline_mode = #tpu.pipeline_mode<synchronous>, transform_indices = @transform_7, window_bounds = array<i64: 32, 32>}, {pipeline_mode = #tpu.pipeline_mode<synchronous>, transform_indices = @transform_8, window_bounds = array<i64: 1, 32>}, {pipeline_mode = #tpu.pipeline_mode<synchronous>, transform_indices = @transform_9, window_bounds = array<i64: 32, 16>}, {pipeline_mode = #tpu.pipeline_mode<synchronous>, transform_indices = @transform_10, window_bounds = array<i64: 1, 16>}, {transform_indices = @transform_11, window_bounds = array<i64: 8, 16>}]} {
    %c0 = arith.constant 0 : index
    %c0_0 = arith.constant 0 : index
    %c0_1 = arith.constant 0 : index
    %0 = vector.load %arg1[%c0, %c0_0, %c0_1] : memref<28x8x28xf32, #tpu.memory_space<vmem>>, vector<24x8x28xf32>
    %1 = vector.shape_cast %0 : vector<24x8x28xf32> to vector<192x28xf32>
    %c0_2 = arith.constant 0 : index
    %c0_3 = arith.constant 0 : index
    %c0_4 = arith.constant 0 : index
    %2 = vector.load %arg2[%c0_2, %c0_3, %c0_4] : memref<5x28x256xf32, #tpu.memory_space<vmem>>, vector<1x28x256xf32>
    %3 = vector.shape_cast %2 : vector<1x28x256xf32> to vector<28x256xf32>
    %cst = arith.constant dense<0.000000e+00> : vector<192x256xf32>
    %4 = tpu.matmul %1, %3, %cst {dimension_numbers = #tpu.dot_dimension_numbers<[1], [0], [0], [1], [0, 0, 1, 1], [], []>} : vector<192x28xf32>, vector<28x256xf32>, vector<192x256xf32> -> vector<192x256xf32>
    %c1 = arith.constant 1 : index
    %c0_5 = arith.constant 0 : index
    %c0_6 = arith.constant 0 : index
    %5 = vector.load %arg1[%c1, %c0_5, %c0_6] : memref<28x8x28xf32, #tpu.memory_space<vmem>>, vector<24x8x28xf32>
    %6 = vector.shape_cast %5 : vector<24x8x28xf32> to vector<192x28xf32>
    %c1_7 = arith.constant 1 : index
    %c0_8 = arith.constant 0 : index
    %c0_9 = arith.constant 0 : index
    %7 = vector.load %arg2[%c1_7, %c0_8, %c0_9] : memref<5x28x256xf32, #tpu.memory_space<vmem>>, vector<1x28x256xf32>
    %8 = vector.shape_cast %7 : vector<1x28x256xf32> to vector<28x256xf32>
    %cst_10 = arith.constant dense<0.000000e+00> : vector<192x256xf32>
    %9 = tpu.matmul %6, %8, %cst_10 {dimension_numbers = #tpu.dot_dimension_numbers<[1], [0], [0], [1], [0, 0, 1, 1], [], []>} : vector<192x28xf32>, vector<28x256xf32>, vector<192x256xf32> -> vector<192x256xf32>
    %10 = arith.addf %4, %9 : vector<192x256xf32>
    %c2 = arith.constant 2 : index
    %c0_11 = arith.constant 0 : index
    %c0_12 = arith.constant 0 : index
    %11 = vector.load %arg1[%c2, %c0_11, %c0_12] : memref<28x8x28xf32, #tpu.memory_space<vmem>>, vector<24x8x28xf32>
    %12 = vector.shape_cast %11 : vector<24x8x28xf32> to vector<192x28xf32>
    %c2_13 = arith.constant 2 : index
    %c0_14 = arith.constant 0 : index
    %c0_15 = arith.constant 0 : index
    %13 = vector.load %arg2[%c2_13, %c0_14, %c0_15] : memref<5x28x256xf32, #tpu.memory_space<vmem>>, vector<1x28x256xf32>
    %14 = vector.shape_cast %13 : vector<1x28x256xf32> to vector<28x256xf32>
    %cst_16 = arith.constant dense<0.000000e+00> : vector<192x256xf32>
    %15 = tpu.matmul %12, %14, %cst_16 {dimension_numbers = #tpu.dot_dimension_numbers<[1], [0], [0], [1], [0, 0, 1, 1], [], []>} : vector<192x28xf32>, vector<28x256xf32>, vector<192x256xf32> -> vector<192x256xf32>
    %16 = arith.addf %10, %15 : vector<192x256xf32>
    %c3 = arith.constant 3 : index
    %c0_17 = arith.constant 0 : index
    %c0_18 = arith.constant 0 : index
    %17 = vector.load %arg1[%c3, %c0_17, %c0_18] : memref<28x8x28xf32, #tpu.memory_space<vmem>>, vector<24x8x28xf32>
    %18 = vector.shape_cast %17 : vector<24x8x28xf32> to vector<192x28xf32>
    %c3_19 = arith.constant 3 : index
    %c0_20 = arith.constant 0 : index
    %c0_21 = arith.constant 0 : index
    %19 = vector.load %arg2[%c3_19, %c0_20, %c0_21] : memref<5x28x256xf32, #tpu.memory_space<vmem>>, vector<1x28x256xf32>
    %20 = vector.shape_cast %19 : vector<1x28x256xf32> to vector<28x256xf32>
    %cst_22 = arith.constant dense<0.000000e+00> : vector<192x256xf32>
    %21 = tpu.matmul %18, %20, %cst_22 {dimension_numbers = #tpu.dot_dimension_numbers<[1], [0], [0], [1], [0, 0, 1, 1], [], []>} : vector<192x28xf32>, vector<28x256xf32>, vector<192x256xf32> -> vector<192x256xf32>
    %22 = arith.addf %16, %21 : vector<192x256xf32>
    %c4 = arith.constant 4 : index
    %c0_23 = arith.constant 0 : index
    %c0_24 = arith.constant 0 : index
    %23 = vector.load %arg1[%c4, %c0_23, %c0_24] : memref<28x8x28xf32, #tpu.memory_space<vmem>>, vector<24x8x28xf32>
    %24 = vector.shape_cast %23 : vector<24x8x28xf32> to vector<192x28xf32>
    %c4_25 = arith.constant 4 : index
    %c0_26 = arith.constant 0 : index
    %c0_27 = arith.constant 0 : index
    %25 = vector.load %arg2[%c4_25, %c0_26, %c0_27] : memref<5x28x256xf32, #tpu.memory_space<vmem>>, vector<1x28x256xf32>
    %26 = vector.shape_cast %25 : vector<1x28x256xf32> to vector<28x256xf32>
    %cst_28 = arith.constant dense<0.000000e+00> : vector<192x256xf32>
    %27 = tpu.matmul %24, %26, %cst_28 {dimension_numbers = #tpu.dot_dimension_numbers<[1], [0], [0], [1], [0, 0, 1, 1], [], []>} : vector<192x28xf32>, vector<28x256xf32>, vector<192x256xf32> -> vector<192x256xf32>
    %28 = arith.addf %22, %27 : vector<192x256xf32>
    %c0_29 = arith.constant 0 : index
    %c0_30 = arith.constant 0 : index
    %29 = vector.load %arg3[%c0_29, %c0_30] : memref<1x256xf32, #tpu.memory_space<vmem>>, vector<1x256xf32>
    %30 = vector.broadcast %29 : vector<1x256xf32> to vector<192x256xf32>
    %31 = arith.addf %28, %30 : vector<192x256xf32>
    %cst_31 = arith.constant 0.000000e+00 : f32
    %32 = vector.broadcast %cst_31 : f32 to vector<192x256xf32>
    %33 = arith.maximumf %31, %32 : vector<192x256xf32>
    %34 = vector.extract_strided_slice %33 {offsets = [0, 0], sizes = [192, 72], strides = [1, 1]} : vector<192x256xf32> to vector<192x72xf32>
    %35 = vector.extract_strided_slice %33 {offsets = [0, 128], sizes = [192, 72], strides = [1, 1]} : vector<192x256xf32> to vector<192x72xf32>
    %36 = arith.maximumf %34, %35 : vector<192x72xf32>
    %37 = vector.shape_cast %36 : vector<192x72xf32> to vector<12x2x8x72xf32>
    %38 = vector.extract_strided_slice %37 {offsets = [0, 0, 0, 0], sizes = [12, 1, 8, 72], strides = [1, 1, 1, 1]} : vector<12x2x8x72xf32> to vector<12x1x8x72xf32>
    %39 = vector.shape_cast %38 : vector<12x1x8x72xf32> to vector<12x8x72xf32>
    %40 = vector.extract_strided_slice %37 {offsets = [0, 1, 0, 0], sizes = [12, 1, 8, 72], strides = [1, 1, 1, 1]} : vector<12x2x8x72xf32> to vector<12x1x8x72xf32>
    %41 = vector.shape_cast %40 : vector<12x1x8x72xf32> to vector<12x8x72xf32>
    %42 = arith.maximumf %39, %41 : vector<12x8x72xf32>
    %c0_32 = arith.constant 0 : index
    %c0_33 = arith.constant 0 : index
    %c0_34 = arith.constant 0 : index
    %43 = vector.load %arg13[%c0_32, %c0_33, %c0_34] : memref<12x8x72xf32, #tpu.memory_space<vmem>>, vector<12x8x72xf32>
    tpu.vector_store %arg13[%c0_32, %c0_33, %c0_34], %42 {strides = array<i32>} : memref<12x8x72xf32, #tpu.memory_space<vmem>>, vector<12x8x72xf32>,
    %c0_35 = arith.constant 0 : index
    %c0_36 = arith.constant 0 : index
    %c0_37 = arith.constant 0 : index
    %44 = vector.load %arg13[%c0_35, %c0_36, %c0_37] : memref<12x8x72xf32, #tpu.memory_space<vmem>>, vector<8x8x72xf32>
    %45 = vector.shape_cast %44 : vector<8x8x72xf32> to vector<64x72xf32>
    %c0_38 = arith.constant 0 : index
    %c0_39 = arith.constant 0 : index
    %c0_40 = arith.constant 0 : index
    %46 = vector.load %arg4[%c0_38, %c0_39, %c0_40] : memref<5x72x256xf32, #tpu.memory_space<vmem>>, vector<1x72x256xf32>
    %47 = vector.shape_cast %46 : vector<1x72x256xf32> to vector<72x256xf32>
    %cst_41 = arith.constant dense<0.000000e+00> : vector<64x256xf32>
    %48 = tpu.matmul %45, %47, %cst_41 {dimension_numbers = #tpu.dot_dimension_numbers<[1], [0], [0], [1], [0, 0, 1, 1], [], []>} : vector<64x72xf32>, vector<72x256xf32>, vector<64x256xf32> -> vector<64x256xf32>
    %c1_42 = arith.constant 1 : index
    %c0_43 = arith.constant 0 : index
    %c0_44 = arith.constant 0 : index
    %49 = vector.load %arg13[%c1_42, %c0_43, %c0_44] : memref<12x8x72xf32, #tpu.memory_space<vmem>>, vector<8x8x72xf32>
    %50 = vector.shape_cast %49 : vector<8x8x72xf32> to vector<64x72xf32>
    %c1_45 = arith.constant 1 : index
    %c0_46 = arith.constant 0 : index
    %c0_47 = arith.constant 0 : index
    %51 = vector.load %arg4[%c1_45, %c0_46, %c0_47] : memref<5x72x256xf32, #tpu.memory_space<vmem>>, vector<1x72x256xf32>
    %52 = vector.shape_cast %51 : vector<1x72x256xf32> to vector<72x256xf32>
    %cst_48 = arith.constant dense<0.000000e+00> : vector<64x256xf32>
    %53 = tpu.matmul %50, %52, %cst_48 {dimension_numbers = #tpu.dot_dimension_numbers<[1], [0], [0], [1], [0, 0, 1, 1], [], []>} : vector<64x72xf32>, vector<72x256xf32>, vector<64x256xf32> -> vector<64x256xf32>
    %54 = arith.addf %48, %53 : vector<64x256xf32>
    %c2_49 = arith.constant 2 : index
    %c0_50 = arith.constant 0 : index
    %c0_51 = arith.constant 0 : index
    %55 = vector.load %arg13[%c2_49, %c0_50, %c0_51] : memref<12x8x72xf32, #tpu.memory_space<vmem>>, vector<8x8x72xf32>
    %56 = vector.shape_cast %55 : vector<8x8x72xf32> to vector<64x72xf32>
    %c2_52 = arith.constant 2 : index
    %c0_53 = arith.constant 0 : index
    %c0_54 = arith.constant 0 : index
    %57 = vector.load %arg4[%c2_52, %c0_53, %c0_54] : memref<5x72x256xf32, #tpu.memory_space<vmem>>, vector<1x72x256xf32>
    %58 = vector.shape_cast %57 : vector<1x72x256xf32> to vector<72x256xf32>
    %cst_55 = arith.constant dense<0.000000e+00> : vector<64x256xf32>
    %59 = tpu.matmul %56, %58, %cst_55 {dimension_numbers = #tpu.dot_dimension_numbers<[1], [0], [0], [1], [0, 0, 1, 1], [], []>} : vector<64x72xf32>, vector<72x256xf32>, vector<64x256xf32> -> vector<64x256xf32>
    %60 = arith.addf %54, %59 : vector<64x256xf32>
    %c3_56 = arith.constant 3 : index
    %c0_57 = arith.constant 0 : index
    %c0_58 = arith.constant 0 : index
    %61 = vector.load %arg13[%c3_56, %c0_57, %c0_58] : memref<12x8x72xf32, #tpu.memory_space<vmem>>, vector<8x8x72xf32>
    %62 = vector.shape_cast %61 : vector<8x8x72xf32> to vector<64x72xf32>
    %c3_59 = arith.constant 3 : index
    %c0_60 = arith.constant 0 : index
    %c0_61 = arith.constant 0 : index
    %63 = vector.load %arg4[%c3_59, %c0_60, %c0_61] : memref<5x72x256xf32, #tpu.memory_space<vmem>>, vector<1x72x256xf32>
    %64 = vector.shape_cast %63 : vector<1x72x256xf32> to vector<72x256xf32>
    %cst_62 = arith.constant dense<0.000000e+00> : vector<64x256xf32>
    %65 = tpu.matmul %62, %64, %cst_62 {dimension_numbers = #tpu.dot_dimension_numbers<[1], [0], [0], [1], [0, 0, 1, 1], [], []>} : vector<64x72xf32>, vector<72x256xf32>, vector<64x256xf32> -> vector<64x256xf32>
    %66 = arith.addf %60, %65 : vector<64x256xf32>
    %c4_63 = arith.constant 4 : index
    %c0_64 = arith.constant 0 : index
    %c0_65 = arith.constant 0 : index
    %67 = vector.load %arg13[%c4_63, %c0_64, %c0_65] : memref<12x8x72xf32, #tpu.memory_space<vmem>>, vector<8x8x72xf32>
    %68 = vector.shape_cast %67 : vector<8x8x72xf32> to vector<64x72xf32>
    %c4_66 = arith.constant 4 : index
    %c0_67 = arith.constant 0 : index
    %c0_68 = arith.constant 0 : index
    %69 = vector.load %arg4[%c4_66, %c0_67, %c0_68] : memref<5x72x256xf32, #tpu.memory_space<vmem>>, vector<1x72x256xf32>
    %70 = vector.shape_cast %69 : vector<1x72x256xf32> to vector<72x256xf32>
    %cst_69 = arith.constant dense<0.000000e+00> : vector<64x256xf32>
    %71 = tpu.matmul %68, %70, %cst_69 {dimension_numbers = #tpu.dot_dimension_numbers<[1], [0], [0], [1], [0, 0, 1, 1], [], []>} : vector<64x72xf32>, vector<72x256xf32>, vector<64x256xf32> -> vector<64x256xf32>
    %72 = arith.addf %66, %71 : vector<64x256xf32>
    %c0_70 = arith.constant 0 : index
    %c0_71 = arith.constant 0 : index
    %73 = vector.load %arg5[%c0_70, %c0_71] : memref<1x256xf32, #tpu.memory_space<vmem>>, vector<1x256xf32>
    %74 = vector.broadcast %73 : vector<1x256xf32> to vector<64x256xf32>
    %75 = arith.addf %72, %74 : vector<64x256xf32>
    %cst_72 = arith.constant 0.000000e+00 : f32
    %76 = vector.broadcast %cst_72 : f32 to vector<64x256xf32>
    %77 = arith.maximumf %75, %76 : vector<64x256xf32>
    %78 = vector.extract_strided_slice %77 {offsets = [0, 0], sizes = [64, 64], strides = [1, 1]} : vector<64x256xf32> to vector<64x64xf32>
    %79 = vector.extract_strided_slice %77 {offsets = [0, 128], sizes = [64, 64], strides = [1, 1]} : vector<64x256xf32> to vector<64x64xf32>
    %80 = arith.maximumf %78, %79 : vector<64x64xf32>
    %81 = vector.extract_strided_slice %80 {offsets = [0, 0], sizes = [8, 64], strides = [1, 1]} : vector<64x64xf32> to vector<8x64xf32>
    %82 = vector.extract_strided_slice %80 {offsets = [8, 0], sizes = [8, 64], strides = [1, 1]} : vector<64x64xf32> to vector<8x64xf32>
    %83 = arith.maximumf %81, %82 : vector<8x64xf32>
    %c0_73 = arith.constant 0 : index
    %c0_74 = arith.constant 0 : index
    %c0_75 = arith.constant 0 : index
    %84 = vector.load %arg6[%c0_73, %c0_74, %c0_75] : memref<4x64x32xf32, #tpu.memory_space<vmem>>, vector<1x64x32xf32>
    %85 = vector.shape_cast %84 : vector<1x64x32xf32> to vector<64x32xf32>
    %cst_76 = arith.constant dense<0.000000e+00> : vector<8x32xf32>
    %86 = tpu.matmul %83, %85, %cst_76 {dimension_numbers = #tpu.dot_dimension_numbers<[1], [0], [0], [1], [0, 0, 1, 1], [], []>} : vector<8x64xf32>, vector<64x32xf32>, vector<8x32xf32> -> vector<8x32xf32>
    %87 = vector.extract_strided_slice %80 {offsets = [16, 0], sizes = [8, 64], strides = [1, 1]} : vector<64x64xf32> to vector<8x64xf32>
    %88 = vector.extract_strided_slice %80 {offsets = [24, 0], sizes = [8, 64], strides = [1, 1]} : vector<64x64xf32> to vector<8x64xf32>
    %89 = arith.maximumf %87, %88 : vector<8x64xf32>
    %c1_77 = arith.constant 1 : index
    %c0_78 = arith.constant 0 : index
    %c0_79 = arith.constant 0 : index
    %90 = vector.load %arg6[%c1_77, %c0_78, %c0_79] : memref<4x64x32xf32, #tpu.memory_space<vmem>>, vector<1x64x32xf32>
    %91 = vector.shape_cast %90 : vector<1x64x32xf32> to vector<64x32xf32>
    %cst_80 = arith.constant dense<0.000000e+00> : vector<8x32xf32>
    %92 = tpu.matmul %89, %91, %cst_80 {dimension_numbers = #tpu.dot_dimension_numbers<[1], [0], [0], [1], [0, 0, 1, 1], [], []>} : vector<8x64xf32>, vector<64x32xf32>, vector<8x32xf32> -> vector<8x32xf32>
    %93 = arith.addf %86, %92 : vector<8x32xf32>
    %94 = vector.extract_strided_slice %80 {offsets = [32, 0], sizes = [8, 64], strides = [1, 1]} : vector<64x64xf32> to vector<8x64xf32>
    %95 = vector.extract_strided_slice %80 {offsets = [40, 0], sizes = [8, 64], strides = [1, 1]} : vector<64x64xf32> to vector<8x64xf32>
    %96 = arith.maximumf %94, %95 : vector<8x64xf32>
    %c2_81 = arith.constant 2 : index
    %c0_82 = arith.constant 0 : index
    %c0_83 = arith.constant 0 : index
    %97 = vector.load %arg6[%c2_81, %c0_82, %c0_83] : memref<4x64x32xf32, #tpu.memory_space<vmem>>, vector<1x64x32xf32>
    %98 = vector.shape_cast %97 : vector<1x64x32xf32> to vector<64x32xf32>
    %cst_84 = arith.constant dense<0.000000e+00> : vector<8x32xf32>
    %99 = tpu.matmul %96, %98, %cst_84 {dimension_numbers = #tpu.dot_dimension_numbers<[1], [0], [0], [1], [0, 0, 1, 1], [], []>} : vector<8x64xf32>, vector<64x32xf32>, vector<8x32xf32> -> vector<8x32xf32>
    %100 = arith.addf %93, %99 : vector<8x32xf32>
    %101 = vector.extract_strided_slice %80 {offsets = [48, 0], sizes = [8, 64], strides = [1, 1]} : vector<64x64xf32> to vector<8x64xf32>
    %102 = vector.extract_strided_slice %80 {offsets = [56, 0], sizes = [8, 64], strides = [1, 1]} : vector<64x64xf32> to vector<8x64xf32>
    %103 = arith.maximumf %101, %102 : vector<8x64xf32>
    %c3_85 = arith.constant 3 : index
    %c0_86 = arith.constant 0 : index
    %c0_87 = arith.constant 0 : index
    %104 = vector.load %arg6[%c3_85, %c0_86, %c0_87] : memref<4x64x32xf32, #tpu.memory_space<vmem>>, vector<1x64x32xf32>
    %105 = vector.shape_cast %104 : vector<1x64x32xf32> to vector<64x32xf32>
    %cst_88 = arith.constant dense<0.000000e+00> : vector<8x32xf32>
    %106 = tpu.matmul %103, %105, %cst_88 {dimension_numbers = #tpu.dot_dimension_numbers<[1], [0], [0], [1], [0, 0, 1, 1], [], []>} : vector<8x64xf32>, vector<64x32xf32>, vector<8x32xf32> -> vector<8x32xf32>
    %107 = arith.addf %100, %106 : vector<8x32xf32>
    %c0_89 = arith.constant 0 : index
    %c0_90 = arith.constant 0 : index
    %108 = vector.load %arg7[%c0_89, %c0_90] : memref<1x32xf32, #tpu.memory_space<vmem>>, vector<1x32xf32>
    %109 = vector.broadcast %108 : vector<1x32xf32> to vector<8x32xf32>
    %110 = arith.addf %107, %109 : vector<8x32xf32>
    %cst_91 = arith.constant 0.000000e+00 : f32
    %111 = vector.broadcast %cst_91 : f32 to vector<8x32xf32>
    %112 = arith.maximumf %110, %111 : vector<8x32xf32>
    %c0_92 = arith.constant 0 : index
    %c0_93 = arith.constant 0 : index
    %113 = vector.load %arg8[%c0_92, %c0_93] : memref<32x32xf32, #tpu.memory_space<vmem>>, vector<32x32xf32>
    %cst_94 = arith.constant dense<0.000000e+00> : vector<8x32xf32>
    %114 = tpu.matmul %112, %113, %cst_94 {dimension_numbers = #tpu.dot_dimension_numbers<[1], [0], [0], [1], [0, 0, 1, 1], [], []>} : vector<8x32xf32>, vector<32x32xf32>, vector<8x32xf32> -> vector<8x32xf32>
    %c0_95 = arith.constant 0 : index
    %c0_96 = arith.constant 0 : index
    %115 = vector.load %arg9[%c0_95, %c0_96] : memref<1x32xf32, #tpu.memory_space<vmem>>, vector<1x32xf32>
    %116 = vector.broadcast %115 : vector<1x32xf32> to vector<8x32xf32>
    %117 = arith.addf %114, %116 : vector<8x32xf32>
    %cst_97 = arith.constant 0.000000e+00 : f32
    %118 = vector.broadcast %cst_97 : f32 to vector<8x32xf32>
    %119 = arith.maximumf %117, %118 : vector<8x32xf32>
    %c0_98 = arith.constant 0 : index
    %c0_99 = arith.constant 0 : index
    %120 = vector.load %arg10[%c0_98, %c0_99] : memref<32x16xf32, #tpu.memory_space<vmem>>, vector<32x16xf32>
    %cst_100 = arith.constant dense<0.000000e+00> : vector<8x16xf32>
    %121 = tpu.matmul %119, %120, %cst_100 {dimension_numbers = #tpu.dot_dimension_numbers<[1], [0], [0], [1], [0, 0, 1, 1], [], []>} : vector<8x32xf32>, vector<32x16xf32>, vector<8x16xf32> -> vector<8x16xf32>
    %c0_101 = arith.constant 0 : index
    %c0_102 = arith.constant 0 : index
    %122 = vector.load %arg11[%c0_101, %c0_102] : memref<1x16xf32, #tpu.memory_space<vmem>>, vector<1x16xf32>
    %123 = vector.broadcast %122 : vector<1x16xf32> to vector<8x16xf32>
    %124 = arith.addf %121, %123 : vector<8x16xf32>
    %cst_103 = arith.constant 0.000000e+00 : f32
    %125 = vector.broadcast %cst_103 : f32 to vector<8x16xf32>
    %126 = arith.maximumf %124, %125 : vector<8x16xf32>
    %c0_104 = arith.constant 0 : index
    %c0_105 = arith.constant 0 : index
    %127 = vector.load %arg12[%c0_104, %c0_105] : memref<8x16xf32, #tpu.memory_space<vmem>>, vector<8x16xf32>
    tpu.vector_store %arg12[%c0_104, %c0_105], %126 {strides = array<i32>} : memref<8x16xf32, #tpu.memory_space<vmem>>, vector<8x16xf32>,
    return
  }
  func.func @transform_0(%arg0: i32) -> (i32, i32, i32) {
    %c0_i32 = arith.constant 0 : i32
    %c0_i32_0 = arith.constant 0 : i32
    %c0_i32_1 = arith.constant 0 : i32
    return %c0_i32, %arg0, %c0_i32_0 : i32, i32, i32
  }
  func.func @transform_1(%arg0: i32) -> (i32, i32, i32) {
    %c0_i32 = arith.constant 0 : i32
    %c0_i32_0 = arith.constant 0 : i32
    %c0_i32_1 = arith.constant 0 : i32
    %c0_i32_2 = arith.constant 0 : i32
    return %c0_i32, %c0_i32_0, %c0_i32_1 : i32, i32, i32
  }
  func.func @transform_2(%arg0: i32) -> (i32, i32) {
    %c0_i32 = arith.constant 0 : i32
    %c0_i32_0 = arith.constant 0 : i32
    %c0_i32_1 = arith.constant 0 : i32
    return %c0_i32, %c0_i32_0 : i32, i32
  }
  func.func @transform_3(%arg0: i32) -> (i32, i32, i32) {
    %c0_i32 = arith.constant 0 : i32
    %c0_i32_0 = arith.constant 0 : i32
    %c0_i32_1 = arith.constant 0 : i32
    %c0_i32_2 = arith.constant 0 : i32
    return %c0_i32, %c0_i32_0, %c0_i32_1 : i32, i32, i32
  }
  func.func @transform_4(%arg0: i32) -> (i32, i32) {
    %c0_i32 = arith.constant 0 : i32
    %c0_i32_0 = arith.constant 0 : i32
    %c0_i32_1 = arith.constant 0 : i32
    return %c0_i32, %c0_i32_0 : i32, i32
  }
  func.func @transform_5(%arg0: i32) -> (i32, i32, i32) {
    %c0_i32 = arith.constant 0 : i32
    %c0_i32_0 = arith.constant 0 : i32
    %c0_i32_1 = arith.constant 0 : i32
    %c0_i32_2 = arith.constant 0 : i32
    return %c0_i32, %c0_i32_0, %c0_i32_1 : i32, i32, i32
  }
  func.func @transform_6(%arg0: i32) -> (i32, i32) {
    %c0_i32 = arith.constant 0 : i32
    %c0_i32_0 = arith.constant 0 : i32
    %c0_i32_1 = arith.constant 0 : i32
    return %c0_i32, %c0_i32_0 : i32, i32
  }
  func.func @transform_7(%arg0: i32) -> (i32, i32) {
    %c0_i32 = arith.constant 0 : i32
    %c0_i32_0 = arith.constant 0 : i32
    %c0_i32_1 = arith.constant 0 : i32
    return %c0_i32, %c0_i32_0 : i32, i32
  }
  func.func @transform_8(%arg0: i32) -> (i32, i32) {
    %c0_i32 = arith.constant 0 : i32
    %c0_i32_0 = arith.constant 0 : i32
    %c0_i32_1 = arith.constant 0 : i32
    return %c0_i32, %c0_i32_0 : i32, i32
  }
  func.func @transform_9(%arg0: i32) -> (i32, i32) {
    %c0_i32 = arith.constant 0 : i32
    %c0_i32_0 = arith.constant 0 : i32
    %c0_i32_1 = arith.constant 0 : i32
    return %c0_i32, %c0_i32_0 : i32, i32
  }
  func.func @transform_10(%arg0: i32) -> (i32, i32) {
    %c0_i32 = arith.constant 0 : i32
    %c0_i32_0 = arith.constant 0 : i32
    %c0_i32_1 = arith.constant 0 : i32
    return %c0_i32, %c0_i32_0 : i32, i32
  }
  func.func @transform_11(%arg0: i32) -> (i32, i32) {
    %c0_i32 = arith.constant 0 : i32
    %c0_i32_0 = arith.constant 0 : i32
    return %arg0, %c0_i32 : i32, i32
  }
}

</mosaic_0001>

<llo_original>
// kernel: lenet5_forward.1
$region0: #{lenet5_forward.1}
  #allocation0 [shape = 'u32[]', space=smem, size = 0x4, offset = 0x4, fixed_abs, tag = 'smem constant byte address 0x4 - core index']
  #allocation1 [shape = 'u32[144,128]{1,0:T(1,128)}', space=vmem, size = 0x12000, scoped, tag = 'internal scratch']
  #allocation2 [shape = 'f32[12,8,72]{2,1,0:T(8,128)}', space=vmem, size = 0xc000, scoped, tag = 'scratch operand']
  %s0 = inlined_call_operand.vmem [shape: f32[28,16,28], index: 0, kind: input, shape index: {}]
  %s1 = inlined_call_operand.vmem [shape: f32[5,28,256], index: 1, kind: input, shape index: {}]
  %s2 = inlined_call_operand.vmem [shape: f32[1,256], index: 2, kind: input, shape index: {}]
  %s3 = inlined_call_operand.vmem [shape: f32[5,72,256], index: 3, kind: input, shape index: {}]
  %s4 = inlined_call_operand.vmem [shape: f32[1,256], index: 4, kind: input, shape index: {}]
  %s5 = inlined_call_operand.vmem [shape: f32[4,64,32], index: 5, kind: input, shape index: {}]
  %s6 = inlined_call_operand.vmem [shape: f32[1,32], index: 6, kind: input, shape index: {}]
  %s7 = inlined_call_operand.vmem [shape: f32[32,32], index: 7, kind: input, shape index: {}]
  %s8 = inlined_call_operand.vmem [shape: f32[1,32], index: 8, kind: input, shape index: {}]
  %s9 = inlined_call_operand.vmem [shape: f32[32,16], index: 9, kind: input, shape index: {}]
  %s10 = inlined_call_operand.vmem [shape: f32[1,16], index: 10, kind: input, shape index: {}]
  %s11 = inlined_call_operand.vmem [shape: f32[16,16], index: 11, kind: output, shape index: {}]
  %s12 = sld [smem:[#allocation0]]
  $region115: #{lenet5_forward.1} parent=0
    _
  %s14 = ssub.s32 1, %s12
  %s15 = scalar_select 0, %s14, %s12
  $region1: #{lenet5_forward.1} parent=0
    #allocation3 [shape = 'u8[229376]{0}', space=vmem, size = 0x38000, scoped, tag = 'input window, operand 0']
    loop: start=0, step=1, limit=4
    $region2: #{lenet5_forward.1} parent=1 // loop_pre_header
      _
    $region3: #{lenet5_forward.1} parent=1 // loop_header
      %s17 = sphi 0, %s21
      %p18 = scmp.ge.s32.totalorder %s17, 4
      %s27 = sphi 0, %s29
      %s30 = sphi 0, %s27
      %s31 = sphi 0, %s30
      %s47 = sphi 0, %s31
      %s51 = sphi 0, %s51
      %s53 = sphi 0, %s51
      %s54 = sphi 0, %s53
      %s68 = sphi 0, %s54
      %s72 = sphi 0, %s72
      %s74 = sphi 0, %s72
      %s75 = sphi 0, %s74
      %s89 = sphi 0, %s75
      %s93 = sphi 0, %s93
      %s95 = sphi 0, %s93
      %s96 = sphi 0, %s95
      %s110 = sphi 0, %s96
      %s114 = sphi 0, %s114
      %s116 = sphi 0, %s114
      %s117 = sphi 0, %s116
      %s131 = sphi 0, %s117
      %s135 = sphi 0, %s135
      %s137 = sphi 0, %s135
      %s138 = sphi 0, %s137
      %s152 = sphi 0, %s138
      %s156 = sphi 0, %s156
      %s158 = sphi 0, %s156
      %s159 = sphi 0, %s158
      %s173 = sphi 0, %s159
      %s177 = sphi 0, %s177
      %s179 = sphi 0, %s177
      %s180 = sphi 0, %s179
      %s194 = sphi 0, %s180
      %s198 = sphi 0, %s198
      %s200 = sphi 0, %s198
      %s201 = sphi 0, %s200
      %s215 = sphi 0, %s201
      %s219 = sphi 0, %s219
      %s221 = sphi 0, %s219
      %s222 = sphi 0, %s221
      %s236 = sphi 0, %s222
      %s240 = sphi 0, %s240
      %s242 = sphi 0, %s240
      %s243 = sphi 0, %s242
      %s257 = sphi 0, %s243
      %s263 = sphi 0, %s265
      %s266 = sphi 0, %s263
      %s267 = sphi 0, %s266
      %s283 = sphi 0, %s267
    $region4: #{lenet5_forward.1} parent=1 // loop_header_branch
      %20 = sbr.rel (%p18) target = $region8
    $region5: #{lenet5_forward.1} parent=1 // loop_body
      %s22 = ssub.s32 %s17, 1
      %s23 = ssub.s32 %s17, 2
      %s24 = sadd.s32 %s17, 1
      %s25 = ssub.s32 %s17, %s24
      %p26 = scmp.eq.s32.totalorder %s25, 0
      %s28 = sadd.s32 %s27, 1
      %s29 = scalar_select %p26, %s27, %s28
      %p32 = pneg %p26
      %p33 = scmp.eq.s32.totalorder %s17, 1
      %p34 = por %p32, %p33
      %p35 = scmp.ne.s32.totalorder %s27, %s30
      %p36 = scmp.eq.s32.totalorder %s17, 0
      %p37 = por %p35, %p36
      %p38 = scmp.ne.s32.totalorder %s27, %s30
      %p39 = scmp.eq.s32.totalorder %s22, 1
      %p40 = por %p38, %p39
      %p41 = scmp.ne.s32.totalorder %s30, %s31
      %p42 = scmp.eq.s32.totalorder %s22, 0
      %p43 = por %p41, %p42
      %p44 = scmp.ne.s32.totalorder %s30, %s31
      %p45 = scmp.eq.s32.totalorder %s23, 1
      %p46 = por %p44, %p45
      %p48 = scmp.ne.s32.totalorder %s31, %s47
      %p49 = scmp.eq.s32.totalorder %s23, 0
      %p50 = por %p48, %p49
      %s52 = sadd.s32 %s51, 1
      %p55 = scmp.eq.s32.totalorder %s17, 1
      %p56 = scmp.ne.s32.totalorder %s51, %s53
      %p57 = scmp.eq.s32.totalorder %s17, 0
      %p58 = por %p56, %p57
      %p59 = scmp.ne.s32.totalorder %s51, %s53
      %p60 = scmp.eq.s32.totalorder %s22, 1
      %p61 = por %p59, %p60
      %p62 = scmp.ne.s32.totalorder %s53, %s54
      %p63 = scmp.eq.s32.totalorder %s22, 0
      %p64 = por %p62, %p63
      %p65 = scmp.ne.s32.totalorder %s53, %s54
      %p66 = scmp.eq.s32.totalorder %s23, 1
      %p67 = por %p65, %p66
      %p69 = scmp.ne.s32.totalorder %s54, %s68
      %p70 = scmp.eq.s32.totalorder %s23, 0
      %p71 = por %p69, %p70
      %s73 = sadd.s32 %s72, 1
      %p76 = scmp.eq.s32.totalorder %s17, 1
      %p77 = scmp.ne.s32.totalorder %s72, %s74
      %p78 = scmp.eq.s32.totalorder %s17, 0
      %p79 = por %p77, %p78
      %p80 = scmp.ne.s32.totalorder %s72, %s74
      %p81 = scmp.eq.s32.totalorder %s22, 1
      %p82 = por %p80, %p81
      %p83 = scmp.ne.s32.totalorder %s74, %s75
      %p84 = scmp.eq.s32.totalorder %s22, 0
      %p85 = por %p83, %p84
      %p86 = scmp.ne.s32.totalorder %s74, %s75
      %p87 = scmp.eq.s32.totalorder %s23, 1
      %p88 = por %p86, %p87
      %p90 = scmp.ne.s32.totalorder %s75, %s89
      %p91 = scmp.eq.s32.totalorder %s23, 0
      %p92 = por %p90, %p91
      %s94 = sadd.s32 %s93, 1
      %p97 = scmp.eq.s32.totalorder %s17, 1
      %p98 = scmp.ne.s32.totalorder %s93, %s95
      %p99 = scmp.eq.s32.totalorder %s17, 0
      %p100 = por %p98, %p99
      %p101 = scmp.ne.s32.totalorder %s93, %s95
      %p102 = scmp.eq.s32.totalorder %s22, 1
      %p103 = por %p101, %p102
      %p104 = scmp.ne.s32.totalorder %s95, %s96
      %p105 = scmp.eq.s32.totalorder %s22, 0
      %p106 = por %p104, %p105
      %p107 = scmp.ne.s32.totalorder %s95, %s96
      %p108 = scmp.eq.s32.totalorder %s23, 1
      %p109 = por %p107, %p108
      %p111 = scmp.ne.s32.totalorder %s96, %s110
      %p112 = scmp.eq.s32.totalorder %s23, 0
      %p113 = por %p111, %p112
      %s115 = sadd.s32 %s114, 1
      %p118 = scmp.eq.s32.totalorder %s17, 1
      %p119 = scmp.ne.s32.totalorder %s114, %s116
      %p120 = scmp.eq.s32.totalorder %s17, 0
      %p121 = por %p119, %p120
      %p122 = scmp.ne.s32.totalorder %s114, %s116
      %p123 = scmp.eq.s32.totalorder %s22, 1
      %p124 = por %p122, %p123
      %p125 = scmp.ne.s32.totalorder %s116, %s117
      %p126 = scmp.eq.s32.totalorder %s22, 0
      %p127 = por %p125, %p126
      %p128 = scmp.ne.s32.totalorder %s116, %s117
      %p129 = scmp.eq.s32.totalorder %s23, 1
      %p130 = por %p128, %p129
      %p132 = scmp.ne.s32.totalorder %s117, %s131
      %p133 = scmp.eq.s32.totalorder %s23, 0
      %p134 = por %p132, %p133
      %s136 = sadd.s32 %s135, 1
      %p139 = scmp.eq.s32.totalorder %s17, 1
      %p140 = scmp.ne.s32.totalorder %s135, %s137
      %p141 = scmp.eq.s32.totalorder %s17, 0
      %p142 = por %p140, %p141
      %p143 = scmp.ne.s32.totalorder %s135, %s137
      %p144 = scmp.eq.s32.totalorder %s22, 1
      %p145 = por %p143, %p144
      %p146 = scmp.ne.s32.totalorder %s137, %s138
      %p147 = scmp.eq.s32.totalorder %s22, 0
      %p148 = por %p146, %p147
      %p149 = scmp.ne.s32.totalorder %s137, %s138
      %p150 = scmp.eq.s32.totalorder %s23, 1
      %p151 = por %p149, %p150
      %p153 = scmp.ne.s32.totalorder %s138, %s152
      %p154 = scmp.eq.s32.totalorder %s23, 0
      %p155 = por %p153, %p154
      %s157 = sadd.s32 %s156, 1
      %p160 = scmp.eq.s32.totalorder %s17, 1
      %p161 = scmp.ne.s32.totalorder %s156, %s158
      %p162 = scmp.eq.s32.totalorder %s17, 0
      %p163 = por %p161, %p162
      %p164 = scmp.ne.s32.totalorder %s156, %s158
      %p165 = scmp.eq.s32.totalorder %s22, 1
      %p166 = por %p164, %p165
      %p167 = scmp.ne.s32.totalorder %s158, %s159
      %p168 = scmp.eq.s32.totalorder %s22, 0
      %p169 = por %p167, %p168
      %p170 = scmp.ne.s32.totalorder %s158, %s159
      %p171 = scmp.eq.s32.totalorder %s23, 1
      %p172 = por %p170, %p171
      %p174 = scmp.ne.s32.totalorder %s159, %s173
      %p175 = scmp.eq.s32.totalorder %s23, 0
      %p176 = por %p174, %p175
      %s178 = sadd.s32 %s177, 1
      %p181 = scmp.eq.s32.totalorder %s17, 1
      %p182 = scmp.ne.s32.totalorder %s177, %s179
      %p183 = scmp.eq.s32.totalorder %s17, 0
      %p184 = por %p182, %p183
      %p185 = scmp.ne.s32.totalorder %s177, %s179
      %p186 = scmp.eq.s32.totalorder %s22, 1
      %p187 = por %p185, %p186
      %p188 = scmp.ne.s32.totalorder %s179, %s180
      %p189 = scmp.eq.s32.totalorder %s22, 0
      %p190 = por %p188, %p189
      %p191 = scmp.ne.s32.totalorder %s179, %s180
      %p192 = scmp.eq.s32.totalorder %s23, 1
      %p193 = por %p191, %p192
      %p195 = scmp.ne.s32.totalorder %s180, %s194
      %p196 = scmp.eq.s32.totalorder %s23, 0
      %p197 = por %p195, %p196
      %s199 = sadd.s32 %s198, 1
      %p202 = scmp.eq.s32.totalorder %s17, 1
      %p203 = scmp.ne.s32.totalorder %s198, %s200
      %p204 = scmp.eq.s32.totalorder %s17, 0
      %p205 = por %p203, %p204
      %p206 = scmp.ne.s32.totalorder %s198, %s200
      %p207 = scmp.eq.s32.totalorder %s22, 1
      %p208 = por %p206, %p207
      %p209 = scmp.ne.s32.totalorder %s200, %s201
      %p210 = scmp.eq.s32.totalorder %s22, 0
      %p211 = por %p209, %p210
      %p212 = scmp.ne.s32.totalorder %s200, %s201
      %p213 = scmp.eq.s32.totalorder %s23, 1
      %p214 = por %p212, %p213
      %p216 = scmp.ne.s32.totalorder %s201, %s215
      %p217 = scmp.eq.s32.totalorder %s23, 0
      %p218 = por %p216, %p217
      %s220 = sadd.s32 %s219, 1
      %p223 = scmp.eq.s32.totalorder %s17, 1
      %p224 = scmp.ne.s32.totalorder %s219, %s221
      %p225 = scmp.eq.s32.totalorder %s17, 0
      %p226 = por %p224, %p225
      %p227 = scmp.ne.s32.totalorder %s219, %s221
      %p228 = scmp.eq.s32.totalorder %s22, 1
      %p229 = por %p227, %p228
      %p230 = scmp.ne.s32.totalorder %s221, %s222
      %p231 = scmp.eq.s32.totalorder %s22, 0
      %p232 = por %p230, %p231
      %p233 = scmp.ne.s32.totalorder %s221, %s222
      %p234 = scmp.eq.s32.totalorder %s23, 1
      %p235 = por %p233, %p234
      %p237 = scmp.ne.s32.totalorder %s222, %s236
      %p238 = scmp.eq.s32.totalorder %s23, 0
      %p239 = por %p237, %p238
      %s241 = sadd.s32 %s240, 1
      %p244 = scmp.eq.s32.totalorder %s17, 1
      %p245 = scmp.ne.s32.totalorder %s240, %s242
      %p246 = scmp.eq.s32.totalorder %s17, 0
      %p247 = por %p245, %p246
      %p248 = scmp.ne.s32.totalorder %s240, %s242
      %p249 = scmp.eq.s32.totalorder %s22, 1
      %p250 = por %p248, %p249
      %p251 = scmp.ne.s32.totalorder %s242, %s243
      %p252 = scmp.eq.s32.totalorder %s22, 0
      %p253 = por %p251, %p252
      %p254 = scmp.ne.s32.totalorder %s242, %s243
      %p255 = scmp.eq.s32.totalorder %s23, 1
      %p256 = por %p254, %p255
      %p258 = scmp.ne.s32.totalorder %s243, %s257
      %p259 = scmp.eq.s32.totalorder %s23, 0
      %p260 = por %p258, %p259
      %s261 = ssub.s32 %s17, %s24
      %p262 = scmp.eq.s32.totalorder %s261, 0
      %s264 = sadd.s32 %s263, 1
      %s265 = scalar_select %p262, %s263, %s264
      %p268 = pneg %p262
      %p269 = scmp.eq.s32.totalorder %s17, 1
      %p270 = por %p268, %p269
      %p271 = scmp.ne.s32.totalorder %s263, %s266
      %p272 = scmp.eq.s32.totalorder %s17, 0
      %p273 = por %p271, %p272
      %p274 = scmp.ne.s32.totalorder %s263, %s266
      %p275 = scmp.eq.s32.totalorder %s22, 1
      %p276 = por %p274, %p275
      %p277 = scmp.ne.s32.totalorder %s266, %s267
      %p278 = scmp.eq.s32.totalorder %s22, 0
      %p279 = por %p277, %p278
      %p280 = scmp.ne.s32.totalorder %s266, %s267
      %p281 = scmp.eq.s32.totalorder %s23, 1
      %p282 = por %p280, %p281
      %p284 = scmp.ne.s32.totalorder %s267, %s283
      %p285 = scmp.eq.s32.totalorder %s23, 0
      %p286 = por %p284, %p285
      %p287 = scmp.le.s32.totalorder 1, %s17
      %p288 = scmp.lt.s32.totalorder %s17, 3
      %p289 = pnand %p287, %p288
      %p290 = pneg %p289
      // Predicated region
      $region9: #{lenet5_forward.1} parent=5 // pred_check
        _
      $region10: #{lenet5_forward.1} parent=5 // pred_check_branch
        %292 = sbr.rel (%p289) target = $region12
      $region11: #{lenet5_forward.1} parent=5 // pred_region
        %s293 = ssub.s32 %s17, 1
        // Predicated region
        $region13: #{lenet5_forward.1} parent=11 // pred_check
          %p294 = pneg %p64
        $region14: #{lenet5_forward.1} parent=11 // pred_check_branch
          %296 = sbr.rel (%p294) target = $region16
        $region15: #{lenet5_forward.1} parent=11 // pred_region
          _
        $region16: #{lenet5_forward.1} parent=11 // pred_fallthru
          _
        // Predicated region
        $region17: #{lenet5_forward.1} parent=11 // pred_check
          %p297 = pneg %p85
        $region18: #{lenet5_forward.1} parent=11 // pred_check_branch
          %299 = sbr.rel (%p297) target = $region20
        $region19: #{lenet5_forward.1} parent=11 // pred_region
          _
        $region20: #{lenet5_forward.1} parent=11 // pred_fallthru
          _
        // Predicated region
        $region21: #{lenet5_forward.1} parent=11 // pred_check
          %p300 = pneg %p106
        $region22: #{lenet5_forward.1} parent=11 // pred_check_branch
          %302 = sbr.rel (%p300) target = $region24
        $region23: #{lenet5_forward.1} parent=11 // pred_region
          _
        $region24: #{lenet5_forward.1} parent=11 // pred_fallthru
          _
        // Predicated region
        $region25: #{lenet5_forward.1} parent=11 // pred_check
          %p303 = pneg %p127
        $region26: #{lenet5_forward.1} parent=11 // pred_check_branch
          %305 = sbr.rel (%p303) target = $region28
        $region27: #{lenet5_forward.1} parent=11 // pred_region
          _
        $region28: #{lenet5_forward.1} parent=11 // pred_fallthru
          _
        // Predicated region
        $region29: #{lenet5_forward.1} parent=11 // pred_check
          %p306 = pneg %p148
        $region30: #{lenet5_forward.1} parent=11 // pred_check_branch
          %308 = sbr.rel (%p306) target = $region32
        $region31: #{lenet5_forward.1} parent=11 // pred_region
          _
        $region32: #{lenet5_forward.1} parent=11 // pred_fallthru
          _
        // Predicated region
        $region33: #{lenet5_forward.1} parent=11 // pred_check
          %p309 = pneg %p169
        $region34: #{lenet5_forward.1} parent=11 // pred_check_branch
          %311 = sbr.rel (%p309) target = $region36
        $region35: #{lenet5_forward.1} parent=11 // pred_region
          _
        $region36: #{lenet5_forward.1} parent=11 // pred_fallthru
          _
        // Predicated region
        $region37: #{lenet5_forward.1} parent=11 // pred_check
          %p312 = pneg %p190
        $region38: #{lenet5_forward.1} parent=11 // pred_check_branch
          %314 = sbr.rel (%p312) target = $region40
        $region39: #{lenet5_forward.1} parent=11 // pred_region
          _
        $region40: #{lenet5_forward.1} parent=11 // pred_fallthru
          _
        // Predicated region
        $region41: #{lenet5_forward.1} parent=11 // pred_check
          %p315 = pneg %p211
        $region42: #{lenet5_forward.1} parent=11 // pred_check_branch
          %317 = sbr.rel (%p315) target = $region44
        $region43: #{lenet5_forward.1} parent=11 // pred_region
          _
        $region44: #{lenet5_forward.1} parent=11 // pred_fallthru
          _
        // Predicated region
        $region45: #{lenet5_forward.1} parent=11 // pred_check
          %p318 = pneg %p232
        $region46: #{lenet5_forward.1} parent=11 // pred_check_branch
          %320 = sbr.rel (%p318) target = $region48
        $region47: #{lenet5_forward.1} parent=11 // pred_region
          _
        $region48: #{lenet5_forward.1} parent=11 // pred_fallthru
          _
        // Predicated region
        $region49: #{lenet5_forward.1} parent=11 // pred_check
          %p321 = pneg %p253
        $region50: #{lenet5_forward.1} parent=11 // pred_check_branch
          %323 = sbr.rel (%p321) target = $region52
        $region51: #{lenet5_forward.1} parent=11 // pred_region
          _
        $region52: #{lenet5_forward.1} parent=11 // pred_fallthru
          _
      $region12: #{lenet5_forward.1} parent=5 // pred_fallthru
        _
      %p324 = scmp.lt.s32.totalorder %s17, 2
      // Predicated region
      $region53: #{lenet5_forward.1} parent=5 // pred_check
        %p325 = pneg %p324
      $region54: #{lenet5_forward.1} parent=5 // pred_check_branch
        %327 = sbr.rel (%p325) target = $region56
      $region55: #{lenet5_forward.1} parent=5 // pred_region
        // Predicated region
        $region57: #{lenet5_forward.1} parent=55 // pred_check
          %p328 = pneg %p37
        $region58: #{lenet5_forward.1} parent=55 // pred_check_branch
          %330 = sbr.rel (%p328) target = $region60
        $region59: #{lenet5_forward.1} parent=55 // pred_region
          %s331 = sand.u32 %s27, 1
          %s332 = sand.u32 %s27, 1
          %s333 = smul.addr %s332, 224
          %s334 = scalar_lea.vmem [#allocation3], %s333
          %s335 = smul.addr %s17, 8
          %s336 = scalar_lea.vmem %s0, %s335
          // Predicated region
          $region61: #{lenet5_forward.1} parent=59 // pred_check
            _
          $region62: #{lenet5_forward.1} parent=59 // pred_check_branch
            %338 = sbr.rel (0) target = $region64
          $region63: #{lenet5_forward.1} parent=59 // pred_region
            // Predicated region
            $region65: #{lenet5_forward.1} parent=63 // pred_check
              _
            $region66: #{lenet5_forward.1} parent=63 // pred_check_branch
              %340 = sbr.rel (0) target = $region68
            $region67: #{lenet5_forward.1} parent=63 // pred_region
              // Predicated region
              $region80: #{lenet5_forward.1} parent=67 // pred_check
                _
              $region81: #{lenet5_forward.1} parent=67 // pred_check_branch
                %410 = sbr.rel (0) target = $region83
              $region82: #{lenet5_forward.1} parent=67 // pred_region
                loop: start=0, step=1, limit=1
                $region84: #{lenet5_forward.1} parent=82 // loop_pre_header
                  _
                $region85: #{lenet5_forward.1} parent=82 // loop_header
                  %s412 = sphi 0, %s416
                  %p413 = scmp.ge.s32.totalorder %s412, 1
                  %s417 = sphi %s336, %s336
                  %s418 = sphi %s334, %s334
                $region86: #{lenet5_forward.1} parent=82 // loop_header_branch
                  %415 = sbr.rel (%p413) target = $region90
                $region87: #{lenet5_forward.1} parent=82 // loop_body
                  %v419 = vld [vmem:[%s417] sm:$0xff]
                  %420 = vst [vmem:[%s418] sm:$0xff] %v419
                  %v421 = vld [vmem:[%s417 + $0x10] sm:$0xff]
                  %422 = vst [vmem:[%s418 + $0x8] sm:$0xff] %v421
                  %v423 = vld [vmem:[%s417 + $0x20] sm:$0xff]
                  %424 = vst [vmem:[%s418 + $0x10] sm:$0xff] %v423
                  %v425 = vld [vmem:[%s417 + $0x30] sm:$0xff]
                  %426 = vst [vmem:[%s418 + $0x18] sm:$0xff] %v425
                  %v427 = vld [vmem:[%s417 + $0x40] sm:$0xff]
                  %428 = vst [vmem:[%s418 + $0x20] sm:$0xff] %v427
                  %v429 = vld [vmem:[%s417 + $0x50] sm:$0xff]
                  %430 = vst [vmem:[%s418 + $0x28] sm:$0xff] %v429
                  %v431 = vld [vmem:[%s417 + $0x60] sm:$0xff]
                  %432 = vst [vmem:[%s418 + $0x30] sm:$0xff] %v431
                  %v433 = vld [vmem:[%s417 + $0x70] sm:$0xff]
                  %434 = vst [vmem:[%s418 + $0x38] sm:$0xff] %v433
                  %v435 = vld [vmem:[%s417 + $0x80] sm:$0xff]
                  %436 = vst [vmem:[%s418 + $0x40] sm:$0xff] %v435
                  %v437 = vld [vmem:[%s417 + $0x90] sm:$0xff]
                  %438 = vst [vmem:[%s418 + $0x48] sm:$0xff] %v437
                  %v439 = vld [vmem:[%s417 + $0xa0] sm:$0xff]
                  %440 = vst [vmem:[%s418 + $0x50] sm:$0xff] %v439
                  %v441 = vld [vmem:[%s417 + $0xb0] sm:$0xff]
                  %442 = vst [vmem:[%s418 + $0x58] sm:$0xff] %v441
                  %v443 = vld [vmem:[%s417 + $0xc0] sm:$0xff]
                  %444 = vst [vmem:[%s418 + $0x60] sm:$0xff] %v443
                  %v445 = vld [vmem:[%s417 + $0xd0] sm:$0xff]
                  %446 = vst [vmem:[%s418 + $0x68] sm:$0xff] %v445
                  %v447 = vld [vmem:[%s417 + $0xe0] sm:$0xff]
                  %448 = vst [vmem:[%s418 + $0x70] sm:$0xff] %v447
                  %v449 = vld [vmem:[%s417 + $0xf0] sm:$0xff]
                  %450 = vst [vmem:[%s418 + $0x78] sm:$0xff] %v449
                  %v451 = vld [vmem:[%s417 + $0x100] sm:$0xff]
                  %452 = vst [vmem:[%s418 + $0x80] sm:$0xff] %v451
                  %v453 = vld [vmem:[%s417 + $0x110] sm:$0xff]
                  %454 = vst [vmem:[%s418 + $0x88] sm:$0xff] %v453
                  %v455 = vld [vmem:[%s417 + $0x120] sm:$0xff]
                  %456 = vst [vmem:[%s418 + $0x90] sm:$0xff] %v455
                  %v457 = vld [vmem:[%s417 + $0x130] sm:$0xff]
                  %458 = vst [vmem:[%s418 + $0x98] sm:$0xff] %v457
                  %v459 = vld [vmem:[%s417 + $0x140] sm:$0xff]
                  %460 = vst [vmem:[%s418 + $0xa0] sm:$0xff] %v459
                  %v461 = vld [vmem:[%s417 + $0x150] sm:$0xff]
                  %462 = vst [vmem:[%s418 + $0xa8] sm:$0xff] %v461
                  %v463 = vld [vmem:[%s417 + $0x160] sm:$0xff]
                  %464 = vst [vmem:[%s418 + $0xb0] sm:$0xff] %v463
                  %v465 = vld [vmem:[%s417 + $0x170] sm:$0xff]
                  %466 = vst [vmem:[%s418 + $0xb8] sm:$0xff] %v465
                  %v467 = vld [vmem:[%s417 + $0x180] sm:$0xff]
                  %468 = vst [vmem:[%s418 + $0xc0] sm:$0xff] %v467
                  %v469 = vld [vmem:[%s417 + $0x190] sm:$0xff]
                  %470 = vst [vmem:[%s418 + $0xc8] sm:$0xff] %v469
                  %v471 = vld [vmem:[%s417 + $0x1a0] sm:$0xff]
                  %472 = vst [vmem:[%s418 + $0xd0] sm:$0xff] %v471
                  %v473 = vld [vmem:[%s417 + $0x1b0] sm:$0xff]
                  %474 = vst [vmem:[%s418 + $0xd8] sm:$0xff] %v473
                $region88: #{lenet5_forward.1} parent=82 // loop_footer
                  %s416 = sadd.s32 1, %s412
                $region89: #{lenet5_forward.1} parent=82 // loop_footer_branch
                  %411 = sbr.rel target = $region85
                $region90: #{lenet5_forward.1} parent=82 // loop_exit
                  _
              $region83: #{lenet5_forward.1} parent=67 // pred_fallthru
                _
              // Predicated region
              $region91: #{lenet5_forward.1} parent=67 // pred_check
                _
              $region92: #{lenet5_forward.1} parent=67 // pred_check_branch
                %476 = sbr.rel target = $region94
              $region93: #{lenet5_forward.1} parent=67 // pred_region
                _
              $region94: #{lenet5_forward.1} parent=67 // pred_fallthru
                _
            $region68: #{lenet5_forward.1} parent=63 // pred_fallthru
              _
            // Predicated region
            $region69: #{lenet5_forward.1} parent=63 // pred_check
              _
            $region70: #{lenet5_forward.1} parent=63 // pred_check_branch
              %342 = sbr.rel target = $region72
            $region71: #{lenet5_forward.1} parent=63 // pred_region
              %s344 = ssub.s32 256, 1
              loop: start=0, step=1, limit=1
              $region73: #{lenet5_forward.1} parent=71 // loop_pre_header
                _
              $region74: #{lenet5_forward.1} parent=71 // loop_header
                %s346 = sphi 0, %s350
                %p347 = scmp.ge.s32.totalorder %s346, 1
                %s351 = sphi %s336, %s336
                %s352 = sphi %s334, %s334
              $region75: #{lenet5_forward.1} parent=71 // loop_header_branch
                %349 = sbr.rel (%p347) target = $region79
              $region76: #{lenet5_forward.1} parent=71 // loop_body
                %v353 = vld [vmem:[%s351] sm:%s344]
                %354 = vst [vmem:[%s352] sm:%s344] %v353
                %v355 = vld [vmem:[%s351 + $0x10] sm:%s344]
                %356 = vst [vmem:[%s352 + $0x8] sm:%s344] %v355
                %v357 = vld [vmem:[%s351 + $0x20] sm:%s344]
                %358 = vst [vmem:[%s352 + $0x10] sm:%s344] %v357
                %v359 = vld [vmem:[%s351 + $0x30] sm:%s344]
                %360 = vst [vmem:[%s352 + $0x18] sm:%s344] %v359
                %v361 = vld [vmem:[%s351 + $0x40] sm:%s344]
                %362 = vst [vmem:[%s352 + $0x20] sm:%s344] %v361
                %v363 = vld [vmem:[%s351 + $0x50] sm:%s344]
                %364 = vst [vmem:[%s352 + $0x28] sm:%s344] %v363
                %v365 = vld [vmem:[%s351 + $0x60] sm:%s344]
                %366 = vst [vmem:[%s352 + $0x30] sm:%s344] %v365
                %v367 = vld [vmem:[%s351 + $0x70] sm:%s344]
                %368 = vst [vmem:[%s352 + $0x38] sm:%s344] %v367
                %v369 = vld [vmem:[%s351 + $0x80] sm:%s344]
                %370 = vst [vmem:[%s352 + $0x40] sm:%s344] %v369
                %v371 = vld [vmem:[%s351 + $0x90] sm:%s344]
                %372 = vst [vmem:[%s352 + $0x48] sm:%s344] %v371
                %v373 = vld [vmem:[%s351 + $0xa0] sm:%s344]
                %374 = vst [vmem:[%s352 + $0x50] sm:%s344] %v373
                %v375 = vld [vmem:[%s351 + $0xb0] sm:%s344]
                %376 = vst [vmem:[%s352 + $0x58] sm:%s344] %v375
                %v377 = vld [vmem:[%s351 + $0xc0] sm:%s344]
                %378 = vst [vmem:[%s352 + $0x60] sm:%s344] %v377
                %v379 = vld [vmem:[%s351 + $0xd0] sm:%s344]
                %380 = vst [vmem:[%s352 + $0x68] sm:%s344] %v379
                %v381 = vld [vmem:[%s351 + $0xe0] sm:%s344]
                %382 = vst [vmem:[%s352 + $0x70] sm:%s344] %v381
                %v383 = vld [vmem:[%s351 + $0xf0] sm:%s344]
                %384 = vst [vmem:[%s352 + $0x78] sm:%s344] %v383
                %v385 = vld [vmem:[%s351 + $0x100] sm:%s344]
                %386 = vst [vmem:[%s352 + $0x80] sm:%s344] %v385
                %v387 = vld [vmem:[%s351 + $0x110] sm:%s344]
                %388 = vst [vmem:[%s352 + $0x88] sm:%s344] %v387
                %v389 = vld [vmem:[%s351 + $0x120] sm:%s344]
                %390 = vst [vmem:[%s352 + $0x90] sm:%s344] %v389
                %v391 = vld [vmem:[%s351 + $0x130] sm:%s344]
                %392 = vst [vmem:[%s352 + $0x98] sm:%s344] %v391
                %v393 = vld [vmem:[%s351 + $0x140] sm:%s344]
                %394 = vst [vmem:[%s352 + $0xa0] sm:%s344] %v393
                %v395 = vld [vmem:[%s351 + $0x150] sm:%s344]
                %396 = vst [vmem:[%s352 + $0xa8] sm:%s344] %v395
                %v397 = vld [vmem:[%s351 + $0x160] sm:%s344]
                %398 = vst [vmem:[%s352 + $0xb0] sm:%s344] %v397
                %v399 = vld [vmem:[%s351 + $0x170] sm:%s344]
                %400 = vst [vmem:[%s352 + $0xb8] sm:%s344] %v399
                %v401 = vld [vmem:[%s351 + $0x180] sm:%s344]
                %402 = vst [vmem:[%s352 + $0xc0] sm:%s344] %v401
                %v403 = vld [vmem:[%s351 + $0x190] sm:%s344]
                %404 = vst [vmem:[%s352 + $0xc8] sm:%s344] %v403
                %v405 = vld [vmem:[%s351 + $0x1a0] sm:%s344]
                %406 = vst [vmem:[%s352 + $0xd0] sm:%s344] %v405
                %v407 = vld [vmem:[%s351 + $0x1b0] sm:%s344]
                %408 = vst [vmem:[%s352 + $0xd8] sm:%s344] %v407
              $region77: #{lenet5_forward.1} parent=71 // loop_footer
                %s350 = sadd.s32 1, %s346
              $region78: #{lenet5_forward.1} parent=71 // loop_footer_branch
                %345 = sbr.rel target = $region74
              $region79: #{lenet5_forward.1} parent=71 // loop_exit
                _
            $region72: #{lenet5_forward.1} parent=63 // pred_fallthru
              _
          $region64: #{lenet5_forward.1} parent=59 // pred_fallthru
            _
          %477 = vnop
        $region60: #{lenet5_forward.1} parent=55 // pred_fallthru
          _
      $region56: #{lenet5_forward.1} parent=5 // pred_fallthru
        _
      %p478 = scmp.le.s32.totalorder 1, %s17
      %p479 = scmp.lt.s32.totalorder %s17, 3
      %p480 = pnand %p478, %p479
      %p481 = pneg %p480
      // Predicated region
      $region95: #{lenet5_forward.1} parent=5 // pred_check
        _
      $region96: #{lenet5_forward.1} parent=5 // pred_check_branch
        %483 = sbr.rel (%p480) target = $region98
      $region97: #{lenet5_forward.1} parent=5 // pred_region
        %s484 = ssub.s32 %s17, 1
        %s485 = sand.u32 %s30, 1
        %s486 = sand.u32 %s30, 1
        %s487 = smul.addr %s486, 224
        %s488 = scalar_lea.vmem [#allocation3], %s487
        // Predicated region
        $region99: #{lenet5_forward.1} parent=97 // pred_check
          %p489 = pneg %p43
        $region100: #{lenet5_forward.1} parent=97 // pred_check_branch
          %491 = sbr.rel (%p489) target = $region102
        $region101: #{lenet5_forward.1} parent=97 // pred_region
          _
        $region102: #{lenet5_forward.1} parent=97 // pred_fallthru
          _
        %s492 = sand.u32 %s30, 1
        %s493 = sand.u32 %s30, 1
        %s494 = smul.addr %s493, 224
        %s495 = scalar_lea.vmem [#allocation3], %s494
        %p496 = pneg %p43
        %p497 = pneg %p40
        %p498 = pneg %p64
        %p499 = pneg %p61
        %p500 = pneg %p85
        %p501 = pneg %p82
        %p502 = pneg %p106
        %p503 = pneg %p103
        %p504 = pneg %p127
        %p505 = pneg %p124
        %p506 = pneg %p148
        %p507 = pneg %p145
        %p508 = pneg %p169
        %p509 = pneg %p166
        %p510 = pneg %p190
        %p511 = pneg %p187
        %p512 = pneg %p211
        %p513 = pneg %p208
        %p514 = pneg %p232
        %p515 = pneg %p229
        %p516 = pneg %p253
        %p517 = pneg %p250
        %p518 = pneg %p279
        %p519 = pneg %p276
        %p520 = scmp.lt.s32.totalorder %s22, 1
        %s521 = scalar_select %p520, %s22, 1
        %s522 = smul.addr %s521, 8
        %s523 = scalar_lea.vmem %s11, %s522
        %p524 = scmp.lt.s32.totalorder %s22, 1
        %s525 = scalar_select %p524, %s22, 1
        %s526 = smul.addr %s525, 8
        %s527 = scalar_lea.vmem %s11, %s526
        %v528 = vld [vmem:[%s488] sm:$0xff]
        %v529 = vld [vmem:[%s488 + $0x8] sm:$0xff]
        %v530 = vld [vmem:[%s488 + $0x10] sm:$0xff]
        %v531 = vld [vmem:[%s488 + $0x18] sm:$0xff]
        %v532 = vld [vmem:[%s488 + $0x20] sm:$0xff]
        %v533 = vld [vmem:[%s488 + $0x28] sm:$0xff]
        %v534 = vld [vmem:[%s488 + $0x30] sm:$0xff]
        %v535 = vld [vmem:[%s488 + $0x38] sm:$0xff]
        %v536 = vld [vmem:[%s488 + $0x40] sm:$0xff]
        %v537 = vld [vmem:[%s488 + $0x48] sm:$0xff]
        %v538 = vld [vmem:[%s488 + $0x50] sm:$0xff]
        %v539 = vld [vmem:[%s488 + $0x58] sm:$0xff]
        %v540 = vld [vmem:[%s488 + $0x60] sm:$0xff]
        %v541 = vld [vmem:[%s488 + $0x68] sm:$0xff]
        %v542 = vld [vmem:[%s488 + $0x70] sm:$0xff]
        %v543 = vld [vmem:[%s488 + $0x78] sm:$0xff]
        %v544 = vld [vmem:[%s488 + $0x80] sm:$0xff]
        %v545 = vld [vmem:[%s488 + $0x88] sm:$0xff]
        %v546 = vld [vmem:[%s488 + $0x90] sm:$0xff]
        %v547 = vld [vmem:[%s488 + $0x98] sm:$0xff]
        %v548 = vld [vmem:[%s488 + $0xa0] sm:$0xff]
        %v549 = vld [vmem:[%s488 + $0xa8] sm:$0xff]
        %v550 = vld [vmem:[%s488 + $0xb0] sm:$0xff]
        %v551 = vld [vmem:[%s488 + $0xb8] sm:$0xff]
        %v552 = vld [vmem:[%s1] sm:$0xff]
        %v553 = vld [vmem:[%s1 + $0x8] sm:$0xff]
        %v554 = vld [vmem:[%s1 + $0x10] sm:$0xff]
        %v555 = vld [vmem:[%s1 + $0x18] sm:$0xff]
        %v556 = vld [vmem:[%s1 + $0x20] sm:$0xff]
        %v557 = vld [vmem:[%s1 + $0x28] sm:$0xff]
        %v558 = vld [vmem:[%s1 + $0x30] sm:$0xf]
        %v559 = vld [vmem:[%s1 + $0x38] sm:$0xf]
        %s560 = scalar_lea.vmem %s488, 8 [#allocation3]
        %v561 = vld [vmem:[%s560] sm:$0xff]
        %v562 = vld [vmem:[%s560 + $0x8] sm:$0xff]
        %v563 = vld [vmem:[%s560 + $0x10] sm:$0xff]
        %v564 = vld [vmem:[%s560 + $0x18] sm:$0xff]
        %v565 = vld [vmem:[%s560 + $0x20] sm:$0xff]
        %v566 = vld [vmem:[%s560 + $0x28] sm:$0xff]
        %v567 = vld [vmem:[%s560 + $0x30] sm:$0xff]
        %v568 = vld [vmem:[%s560 + $0x38] sm:$0xff]
        %v569 = vld [vmem:[%s560 + $0x40] sm:$0xff]
        %v570 = vld [vmem:[%s560 + $0x48] sm:$0xff]
        %v571 = vld [vmem:[%s560 + $0x50] sm:$0xff]
        %v572 = vld [vmem:[%s560 + $0x58] sm:$0xff]
        %v573 = vld [vmem:[%s560 + $0x60] sm:$0xff]
        %v574 = vld [vmem:[%s560 + $0x68] sm:$0xff]
        %v575 = vld [vmem:[%s560 + $0x70] sm:$0xff]
        %v576 = vld [vmem:[%s560 + $0x78] sm:$0xff]
        %v577 = vld [vmem:[%s560 + $0x80] sm:$0xff]
        %v578 = vld [vmem:[%s560 + $0x88] sm:$0xff]
        %v579 = vld [vmem:[%s560 + $0x90] sm:$0xff]
        %v580 = vld [vmem:[%s560 + $0x98] sm:$0xff]
        %v581 = vld [vmem:[%s560 + $0xa0] sm:$0xff]
        %v582 = vld [vmem:[%s560 + $0xa8] sm:$0xff]
        %v583 = vld [vmem:[%s560 + $0xb0] sm:$0xff]
        %v584 = vld [vmem:[%s560 + $0xb8] sm:$0xff]
        %s585 = scalar_lea.vmem %s1, 64
        %v586 = vld [vmem:[%s585] sm:$0xff]
        %v587 = vld [vmem:[%s585 + $0x8] sm:$0xff]
        %v588 = vld [vmem:[%s585 + $0x10] sm:$0xff]
        %v589 = vld [vmem:[%s585 + $0x18] sm:$0xff]
        %v590 = vld [vmem:[%s585 + $0x20] sm:$0xff]
        %v591 = vld [vmem:[%s585 + $0x28] sm:$0xff]
        %v592 = vld [vmem:[%s585 + $0x30] sm:$0xf]
        %v593 = vld [vmem:[%s585 + $0x38] sm:$0xf]
        %vm594 = vcmask 228352
        %v596 = vsel %vm594, %v561, 0
        %v599 = vsel %vm594, %v562, 0
        %v602 = vsel %vm594, %v563, 0
        %v605 = vsel %vm594, %v564, 0
        %v608 = vsel %vm594, %v565, 0
        %v611 = vsel %vm594, %v566, 0
        %v614 = vsel %vm594, %v567, 0
        %v617 = vsel %vm594, %v568, 0
        %v620 = vsel %vm594, %v569, 0
        %v623 = vsel %vm594, %v570, 0
        %v626 = vsel %vm594, %v571, 0
        %v629 = vsel %vm594, %v572, 0
        %v632 = vsel %vm594, %v573, 0
        %v635 = vsel %vm594, %v574, 0
        %v638 = vsel %vm594, %v575, 0
        %v641 = vsel %vm594, %v576, 0
        %v644 = vsel %vm594, %v577, 0
        %v647 = vsel %vm594, %v578, 0
        %v650 = vsel %vm594, %v579, 0
        %v653 = vsel %vm594, %v580, 0
        %v656 = vsel %vm594, %v581, 0
        %v659 = vsel %vm594, %v582, 0
        %v662 = vsel %vm594, %v583, 0
        %v665 = vsel %vm594, %v584, 0
        %vm667 = vcmask 1043456
        %v669 = vsel %vm667, %v592, 0
        %v672 = vsel %vm667, %v593, 0
        %674 = vmatprep.subr.mxu0 0.0
        %675 = vmatpush1.msra.mxu0 0.0
        %676 = vmatprep.subr.mxu0 0.0
        %677 = vmatpush1.msra.mxu0 0.0
        %678 = vmatprep.subr.mxu0 0.0
        %679 = vmatpush1.msra.mxu0 0.0
        %680 = vmatprep.subr.mxu0 0.0
        %681 = vmatpush1.msra.mxu0 0.0
        %682 = vmatprep.subr.mxu0 0.0
        %683 = vmatpush1.msra.mxu0 0.0
        %684 = vmatprep.subr.mxu0 0.0
        %685 = vmatpush1.msra.mxu0 0.0
        %686 = vmatprep.subr.mxu0 0.0
        %687 = vmatpush1.msra.mxu0 0.0
        %688 = vmatprep.subr.mxu0 0.0
        %689 = vmatpush1.msra.mxu0 0.0
        %690 = vmatprep.subr.mxu0 0.0
        %691 = vmatpush1.msra.mxu0 0.0
        %692 = vmatprep.subr.mxu0 0.0
        %693 = vmatpush1.msra.mxu0 0.0
        %694 = vmatprep.subr.mxu0 0.0
        %695 = vmatpush1.msra.mxu0 0.0
        %696 = vmatprep.subr.mxu0 0.0
        %697 = vmatpush1.msra.mxu0 0.0
        %698 = vmatprep.subr.mxu0 %v672
        %699 = vmatpush1.msra.mxu0 %v669
        %700 = vmatprep.subr.mxu0 %v591
        %701 = vmatpush1.msra.mxu0 %v590
        %702 = vmatprep.subr.mxu0 %v589
        %703 = vmatpush1.msra.mxu0 %v588
        %704 = vmatprep.subr.mxu0 %v587
        %705 = vmatpush1.msra.mxu0 %v586
        %706 = vmatprep.subr.mxu0 0.0
        %707 = vmatpush2.msra.mxu0 0.0
        %708 = vmatprep.subr.mxu0 0.0
        %709 = vmatpush2.msra.mxu0 0.0
        %710 = vmatprep.subr.mxu0 0.0
        %711 = vmatpush2.msra.mxu0 0.0
        %712 = vmatprep.subr.mxu0 0.0
        %713 = vmatpush2.msra.mxu0 0.0
        %714 = vmatprep.subr.mxu0 0.0
        %715 = vmatpush2.msra.mxu0 0.0
        %716 = vmatprep.subr.mxu0 0.0
        %717 = vmatpush2.msra.mxu0 0.0
        %718 = vmatprep.subr.mxu0 0.0
        %719 = vmatpush2.msra.mxu0 0.0
        %720 = vmatprep.subr.mxu0 0.0
        %721 = vmatpush2.msra.mxu0 0.0
        %722 = vmatprep.subr.mxu0 0.0
        %723 = vmatpush2.msra.mxu0 0.0
        %724 = vmatprep.subr.mxu0 0.0
        %725 = vmatpush2.msra.mxu0 0.0
        %726 = vmatprep.subr.mxu0 0.0
        %727 = vmatpush2.msra.mxu0 0.0
        %728 = vmatprep.subr.mxu0 0.0
        %729 = vmatpush2.msra.mxu0 0.0
        %730 = vmatprep.subr.mxu0 0.0
        %731 = vmatpush2.msra.mxu0 0.0
        %732 = vmatprep.subr.mxu0 0.0
        %733 = vmatpush2.msra.mxu0 0.0
        %734 = vmatprep.subr.mxu0 0.0
        %735 = vmatpush2.msra.mxu0 0.0
        %736 = vmatprep.subr.mxu0 0.0
        %737 = vmatpush2.msra.mxu0 0.0
        %738 = vmatprep.mubr.f32.mxu0 0.0
        %739 = vmatmul.mubr.f32.gmra.mxu0 %v596
        %v740 = vpop.f32.mrf.mxu0
        %v741 = vadd.f32 0.0, %v740
        %v742 = vpop.f32.mrf.mxu0
        %v743 = vadd.f32 0.0, %v742
        %744 = vmatprep.mubr.f32.mxu0 0.0
        %745 = vmatmul.mubr.f32.gmra.mxu0 %v599
        %v746 = vpop.f32.mrf.mxu0
        %v747 = vadd.f32 0.0, %v746
        %v748 = vpop.f32.mrf.mxu0
        %v749 = vadd.f32 0.0, %v748
        %750 = vmatprep.mubr.f32.mxu0 0.0
        %751 = vmatmul.mubr.f32.gmra.mxu0 %v602
        %v752 = vpop.f32.mrf.mxu0
        %v753 = vadd.f32 0.0, %v752
        %v754 = vpop.f32.mrf.mxu0
        %v755 = vadd.f32 0.0, %v754
        %756 = vmatprep.mubr.f32.mxu0 0.0
        %757 = vmatmul.mubr.f32.gmra.mxu0 %v605
        %v758 = vpop.f32.mrf.mxu0
        %v759 = vadd.f32 0.0, %v758
        %v760 = vpop.f32.mrf.mxu0
        %v761 = vadd.f32 0.0, %v760
        %762 = vmatprep.mubr.f32.mxu0 0.0
        %763 = vmatmul.mubr.f32.gmra.mxu0 %v608
        %v764 = vpop.f32.mrf.mxu0
        %v765 = vadd.f32 0.0, %v764
        %v766 = vpop.f32.mrf.mxu0
        %v767 = vadd.f32 0.0, %v766
        %768 = vmatprep.mubr.f32.mxu0 0.0
        %769 = vmatmul.mubr.f32.gmra.mxu0 %v611
        %v770 = vpop.f32.mrf.mxu0
        %v771 = vadd.f32 0.0, %v770
        %v772 = vpop.f32.mrf.mxu0
        %v773 = vadd.f32 0.0, %v772
        %774 = vmatprep.mubr.f32.mxu0 0.0
        %775 = vmatmul.mubr.f32.gmra.mxu0 %v614
        %v776 = vpop.f32.mrf.mxu0
        %v777 = vadd.f32 0.0, %v776
        %v778 = vpop.f32.mrf.mxu0
        %v779 = vadd.f32 0.0, %v778
        %780 = vmatprep.mubr.f32.mxu0 0.0
        %781 = vmatmul.mubr.f32.gmra.mxu0 %v617
        %v782 = vpop.f32.mrf.mxu0
        %v783 = vadd.f32 0.0, %v782
        %v784 = vpop.f32.mrf.mxu0
        %v785 = vadd.f32 0.0, %v784
        %786 = vmatprep.mubr.f32.mxu0 0.0
        %787 = vmatmul.mubr.f32.gmra.mxu0 %v620
        %v788 = vpop.f32.mrf.mxu0
        %v789 = vadd.f32 0.0, %v788
        %v790 = vpop.f32.mrf.mxu0
        %v791 = vadd.f32 0.0, %v790
        %792 = vmatprep.mubr.f32.mxu0 0.0
        %793 = vmatmul.mubr.f32.gmra.mxu0 %v623
        %v794 = vpop.f32.mrf.mxu0
        %v795 = vadd.f32 0.0, %v794
        %v796 = vpop.f32.mrf.mxu0
        %v797 = vadd.f32 0.0, %v796
        %798 = vmatprep.mubr.f32.mxu0 0.0
        %799 = vmatmul.mubr.f32.gmra.mxu0 %v626
        %v800 = vpop.f32.mrf.mxu0
        %v801 = vadd.f32 0.0, %v800
        %v802 = vpop.f32.mrf.mxu0
        %v803 = vadd.f32 0.0, %v802
        %804 = vmatprep.mubr.f32.mxu0 0.0
        %805 = vmatmul.mubr.f32.gmra.mxu0 %v629
        %v806 = vpop.f32.mrf.mxu0
        %v807 = vadd.f32 0.0, %v806
        %v808 = vpop.f32.mrf.mxu0
        %v809 = vadd.f32 0.0, %v808
        %810 = vmatprep.mubr.f32.mxu0 0.0
        %811 = vmatmul.mubr.f32.gmra.mxu0 %v632
        %v812 = vpop.f32.mrf.mxu0
        %v813 = vadd.f32 0.0, %v812
        %v814 = vpop.f32.mrf.mxu0
        %v815 = vadd.f32 0.0, %v814
        %816 = vmatprep.mubr.f32.mxu0 0.0
        %817 = vmatmul.mubr.f32.gmra.mxu0 %v635
        %v818 = vpop.f32.mrf.mxu0
        %v819 = vadd.f32 0.0, %v818
        %v820 = vpop.f32.mrf.mxu0
        %v821 = vadd.f32 0.0, %v820
        %822 = vmatprep.mubr.f32.mxu0 0.0
        %823 = vmatmul.mubr.f32.gmra.mxu0 %v638
        %v824 = vpop.f32.mrf.mxu0
        %v825 = vadd.f32 0.0, %v824
        %v826 = vpop.f32.mrf.mxu0
        %v827 = vadd.f32 0.0, %v826
        %828 = vmatprep.mubr.f32.mxu0 0.0
        %829 = vmatmul.mubr.f32.gmra.mxu0 %v641
        %v830 = vpop.f32.mrf.mxu0
        %v831 = vadd.f32 0.0, %v830
        %v832 = vpop.f32.mrf.mxu0
        %v833 = vadd.f32 0.0, %v832
        %834 = vmatprep.mubr.f32.mxu0 0.0
        %835 = vmatmul.mubr.f32.gmra.mxu0 %v644
        %v836 = vpop.f32.mrf.mxu0
        %v837 = vadd.f32 0.0, %v836
        %v838 = vpop.f32.mrf.mxu0
        %v839 = vadd.f32 0.0, %v838
        %840 = vmatprep.mubr.f32.mxu0 0.0
        %841 = vmatmul.mubr.f32.gmra.mxu0 %v647
        %v842 = vpop.f32.mrf.mxu0
        %v843 = vadd.f32 0.0, %v842
        %v844 = vpop.f32.mrf.mxu0
        %v845 = vadd.f32 0.0, %v844
        %846 = vmatprep.mubr.f32.mxu0 0.0
        %847 = vmatmul.mubr.f32.gmra.mxu0 %v650
        %v848 = vpop.f32.mrf.mxu0
        %v849 = vadd.f32 0.0, %v848
        %v850 = vpop.f32.mrf.mxu0
        %v851 = vadd.f32 0.0, %v850
        %852 = vmatprep.mubr.f32.mxu0 0.0
        %853 = vmatmul.mubr.f32.gmra.mxu0 %v653
        %v854 = vpop.f32.mrf.mxu0
        %v855 = vadd.f32 0.0, %v854
        %v856 = vpop.f32.mrf.mxu0
        %v857 = vadd.f32 0.0, %v856
        %858 = vmatprep.mubr.f32.mxu0 0.0
        %859 = vmatmul.mubr.f32.gmra.mxu0 %v656
        %v860 = vpop.f32.mrf.mxu0
        %v861 = vadd.f32 0.0, %v860
        %v862 = vpop.f32.mrf.mxu0
        %v863 = vadd.f32 0.0, %v862
        %864 = vmatprep.mubr.f32.mxu0 0.0
        %865 = vmatmul.mubr.f32.gmra.mxu0 %v659
        %v866 = vpop.f32.mrf.mxu0
        %v867 = vadd.f32 0.0, %v866
        %v868 = vpop.f32.mrf.mxu0
        %v869 = vadd.f32 0.0, %v868
        %870 = vmatprep.mubr.f32.mxu0 0.0
        %871 = vmatmul.mubr.f32.gmra.mxu0 %v662
        %v872 = vpop.f32.mrf.mxu0
        %v873 = vadd.f32 0.0, %v872
        %v874 = vpop.f32.mrf.mxu0
        %v875 = vadd.f32 0.0, %v874
        %876 = vmatprep.mubr.f32.mxu0 0.0
        %877 = vmatmul.mubr.f32.gmra.mxu0 %v665
        %v878 = vpop.f32.mrf.mxu0
        %v879 = vadd.f32 0.0, %v878
        %v880 = vpop.f32.mrf.mxu0
        %v881 = vadd.f32 0.0, %v880
        %882 = vdwg.mxu0
        %v884 = vsel %vm594, %v528, 0
        %v887 = vsel %vm594, %v529, 0
        %v890 = vsel %vm594, %v530, 0
        %v893 = vsel %vm594, %v531, 0
        %v896 = vsel %vm594, %v532, 0
        %v899 = vsel %vm594, %v533, 0
        %v902 = vsel %vm594, %v534, 0
        %v905 = vsel %vm594, %v535, 0
        %v908 = vsel %vm594, %v536, 0
        %v911 = vsel %vm594, %v537, 0
        %v914 = vsel %vm594, %v538, 0
        %v917 = vsel %vm594, %v539, 0
        %v920 = vsel %vm594, %v540, 0
        %v923 = vsel %vm594, %v541, 0
        %v926 = vsel %vm594, %v542, 0
        %v929 = vsel %vm594, %v543, 0
        %v932 = vsel %vm594, %v544, 0
        %v935 = vsel %vm594, %v545, 0
        %v938 = vsel %vm594, %v546, 0
        %v941 = vsel %vm594, %v547, 0
        %v944 = vsel %vm594, %v548, 0
        %v947 = vsel %vm594, %v549, 0
        %v950 = vsel %vm594, %v550, 0
        %v953 = vsel %vm594, %v551, 0
        %v956 = vsel %vm667, %v558, 0
        %v959 = vsel %vm667, %v559, 0
        %961 = vmatprep.subr.mxu0 0.0
        %962 = vmatpush1.msra.mxu0 0.0
        %963 = vmatprep.subr.mxu0 0.0
        %964 = vmatpush1.msra.mxu0 0.0
        %965 = vmatprep.subr.mxu0 0.0
        %966 = vmatpush1.msra.mxu0 0.0
        %967 = vmatprep.subr.mxu0 0.0
        %968 = vmatpush1.msra.mxu0 0.0
        %969 = vmatprep.subr.mxu0 0.0
        %970 = vmatpush1.msra.mxu0 0.0
        %971 = vmatprep.subr.mxu0 0.0
        %972 = vmatpush1.msra.mxu0 0.0
        %973 = vmatprep.subr.mxu0 0.0
        %974 = vmatpush1.msra.mxu0 0.0
        %975 = vmatprep.subr.mxu0 0.0
        %976 = vmatpush1.msra.mxu0 0.0
        %977 = vmatprep.subr.mxu0 0.0
        %978 = vmatpush1.msra.mxu0 0.0
        %979 = vmatprep.subr.mxu0 0.0
        %980 = vmatpush1.msra.mxu0 0.0
        %981 = vmatprep.subr.mxu0 0.0
        %982 = vmatpush1.msra.mxu0 0.0
        %983 = vmatprep.subr.mxu0 0.0
        %984 = vmatpush1.msra.mxu0 0.0
        %985 = vmatprep.subr.mxu0 %v959
        %986 = vmatpush1.msra.mxu0 %v956
        %987 = vmatprep.subr.mxu0 %v557
        %988 = vmatpush1.msra.mxu0 %v556
        %989 = vmatprep.subr.mxu0 %v555
        %990 = vmatpush1.msra.mxu0 %v554
        %991 = vmatprep.subr.mxu0 %v553
        %992 = vmatpush1.msra.mxu0 %v552
        %993 = vmatprep.subr.mxu0 0.0
        %994 = vmatpush2.msra.mxu0 0.0
        %995 = vmatprep.subr.mxu0 0.0
        %996 = vmatpush2.msra.mxu0 0.0
        %997 = vmatprep.subr.mxu0 0.0
        %998 = vmatpush2.msra.mxu0 0.0
        %999 = vmatprep.subr.mxu0 0.0
        %1000 = vmatpush2.msra.mxu0 0.0
        %1001 = vmatprep.subr.mxu0 0.0
        %1002 = vmatpush2.msra.mxu0 0.0
        %1003 = vmatprep.subr.mxu0 0.0
        %1004 = vmatpush2.msra.mxu0 0.0
        %1005 = vmatprep.subr.mxu0 0.0
        %1006 = vmatpush2.msra.mxu0 0.0
        %1007 = vmatprep.subr.mxu0 0.0
        %1008 = vmatpush2.msra.mxu0 0.0
        %1009 = vmatprep.subr.mxu0 0.0
        %1010 = vmatpush2.msra.mxu0 0.0
        %1011 = vmatprep.subr.mxu0 0.0
        %1012 = vmatpush2.msra.mxu0 0.0
        %1013 = vmatprep.subr.mxu0 0.0
        %1014 = vmatpush2.msra.mxu0 0.0
        %1015 = vmatprep.subr.mxu0 0.0
        %1016 = vmatpush2.msra.mxu0 0.0
        %1017 = vmatprep.subr.mxu0 0.0
        %1018 = vmatpush2.msra.mxu0 0.0
        %1019 = vmatprep.subr.mxu0 0.0
        %1020 = vmatpush2.msra.mxu0 0.0
        %1021 = vmatprep.subr.mxu0 0.0
        %1022 = vmatpush2.msra.mxu0 0.0
        %1023 = vmatprep.subr.mxu0 0.0
        %1024 = vmatpush2.msra.mxu0 0.0
        %1025 = vmatprep.mubr.f32.mxu0 0.0
        %1026 = vmatmul.mubr.f32.gmra.mxu0 %v884
        %v1027 = vpop.f32.mrf.mxu0
        %v1028 = vadd.f32 %v741, %v1027
        %v1029 = vpop.f32.mrf.mxu0
        %v1030 = vadd.f32 %v743, %v1029
        %1031 = vmatprep.mubr.f32.mxu0 0.0
        %1032 = vmatmul.mubr.f32.gmra.mxu0 %v887
        %v1033 = vpop.f32.mrf.mxu0
        %v1034 = vadd.f32 %v747, %v1033
        %v1035 = vpop.f32.mrf.mxu0
        %v1036 = vadd.f32 %v749, %v1035
        %1037 = vmatprep.mubr.f32.mxu0 0.0
        %1038 = vmatmul.mubr.f32.gmra.mxu0 %v890
        %v1039 = vpop.f32.mrf.mxu0
        %v1040 = vadd.f32 %v753, %v1039
        %v1041 = vpop.f32.mrf.mxu0
        %v1042 = vadd.f32 %v755, %v1041
        %1043 = vmatprep.mubr.f32.mxu0 0.0
        %1044 = vmatmul.mubr.f32.gmra.mxu0 %v893
        %v1045 = vpop.f32.mrf.mxu0
        %v1046 = vadd.f32 %v759, %v1045
        %v1047 = vpop.f32.mrf.mxu0
        %v1048 = vadd.f32 %v761, %v1047
        %1049 = vmatprep.mubr.f32.mxu0 0.0
        %1050 = vmatmul.mubr.f32.gmra.mxu0 %v896
        %v1051 = vpop.f32.mrf.mxu0
        %v1052 = vadd.f32 %v765, %v1051
        %v1053 = vpop.f32.mrf.mxu0
        %v1054 = vadd.f32 %v767, %v1053
        %1055 = vmatprep.mubr.f32.mxu0 0.0
        %1056 = vmatmul.mubr.f32.gmra.mxu0 %v899
        %v1057 = vpop.f32.mrf.mxu0
        %v1058 = vadd.f32 %v771, %v1057
        %v1059 = vpop.f32.mrf.mxu0
        %v1060 = vadd.f32 %v773, %v1059
        %1061 = vmatprep.mubr.f32.mxu0 0.0
        %1062 = vmatmul.mubr.f32.gmra.mxu0 %v902
        %v1063 = vpop.f32.mrf.mxu0
        %v1064 = vadd.f32 %v777, %v1063
        %v1065 = vpop.f32.mrf.mxu0
        %v1066 = vadd.f32 %v779, %v1065
        %1067 = vmatprep.mubr.f32.mxu0 0.0
        %1068 = vmatmul.mubr.f32.gmra.mxu0 %v905
        %v1069 = vpop.f32.mrf.mxu0
        %v1070 = vadd.f32 %v783, %v1069
        %v1071 = vpop.f32.mrf.mxu0
        %v1072 = vadd.f32 %v785, %v1071
        %1073 = vmatprep.mubr.f32.mxu0 0.0
        %1074 = vmatmul.mubr.f32.gmra.mxu0 %v908
        %v1075 = vpop.f32.mrf.mxu0
        %v1076 = vadd.f32 %v789, %v1075
        %v1077 = vpop.f32.mrf.mxu0
        %v1078 = vadd.f32 %v791, %v1077
        %1079 = vmatprep.mubr.f32.mxu0 0.0
        %1080 = vmatmul.mubr.f32.gmra.mxu0 %v911
        %v1081 = vpop.f32.mrf.mxu0
        %v1082 = vadd.f32 %v795, %v1081
        %v1083 = vpop.f32.mrf.mxu0
        %v1084 = vadd.f32 %v797, %v1083
        %1085 = vmatprep.mubr.f32.mxu0 0.0
        %1086 = vmatmul.mubr.f32.gmra.mxu0 %v914
        %v1087 = vpop.f32.mrf.mxu0
        %v1088 = vadd.f32 %v801, %v1087
        %v1089 = vpop.f32.mrf.mxu0
        %v1090 = vadd.f32 %v803, %v1089
        %1091 = vmatprep.mubr.f32.mxu0 0.0
        %1092 = vmatmul.mubr.f32.gmra.mxu0 %v917
        %v1093 = vpop.f32.mrf.mxu0
        %v1094 = vadd.f32 %v807, %v1093
        %v1095 = vpop.f32.mrf.mxu0
        %v1096 = vadd.f32 %v809, %v1095
        %1097 = vmatprep.mubr.f32.mxu0 0.0
        %1098 = vmatmul.mubr.f32.gmra.mxu0 %v920
        %v1099 = vpop.f32.mrf.mxu0
        %v1100 = vadd.f32 %v813, %v1099
        %v1101 = vpop.f32.mrf.mxu0
        %v1102 = vadd.f32 %v815, %v1101
        %1103 = vmatprep.mubr.f32.mxu0 0.0
        %1104 = vmatmul.mubr.f32.gmra.mxu0 %v923
        %v1105 = vpop.f32.mrf.mxu0
        %v1106 = vadd.f32 %v819, %v1105
        %v1107 = vpop.f32.mrf.mxu0
        %v1108 = vadd.f32 %v821, %v1107
        %1109 = vmatprep.mubr.f32.mxu0 0.0
        %1110 = vmatmul.mubr.f32.gmra.mxu0 %v926
        %v1111 = vpop.f32.mrf.mxu0
        %v1112 = vadd.f32 %v825, %v1111
        %v1113 = vpop.f32.mrf.mxu0
        %v1114 = vadd.f32 %v827, %v1113
        %1115 = vmatprep.mubr.f32.mxu0 0.0
        %1116 = vmatmul.mubr.f32.gmra.mxu0 %v929
        %v1117 = vpop.f32.mrf.mxu0
        %v1118 = vadd.f32 %v831, %v1117
        %v1119 = vpop.f32.mrf.mxu0
        %v1120 = vadd.f32 %v833, %v1119
        %1121 = vmatprep.mubr.f32.mxu0 0.0
        %1122 = vmatmul.mubr.f32.gmra.mxu0 %v932
        %v1123 = vpop.f32.mrf.mxu0
        %v1124 = vadd.f32 %v837, %v1123
        %v1125 = vpop.f32.mrf.mxu0
        %v1126 = vadd.f32 %v839, %v1125
        %1127 = vmatprep.mubr.f32.mxu0 0.0
        %1128 = vmatmul.mubr.f32.gmra.mxu0 %v935
        %v1129 = vpop.f32.mrf.mxu0
        %v1130 = vadd.f32 %v843, %v1129
        %v1131 = vpop.f32.mrf.mxu0
        %v1132 = vadd.f32 %v845, %v1131
        %1133 = vmatprep.mubr.f32.mxu0 0.0
        %1134 = vmatmul.mubr.f32.gmra.mxu0 %v938
        %v1135 = vpop.f32.mrf.mxu0
        %v1136 = vadd.f32 %v849, %v1135
        %v1137 = vpop.f32.mrf.mxu0
        %v1138 = vadd.f32 %v851, %v1137
        %1139 = vmatprep.mubr.f32.mxu0 0.0
        %1140 = vmatmul.mubr.f32.gmra.mxu0 %v941
        %v1141 = vpop.f32.mrf.mxu0
        %v1142 = vadd.f32 %v855, %v1141
        %v1143 = vpop.f32.mrf.mxu0
        %v1144 = vadd.f32 %v857, %v1143
        %1145 = vmatprep.mubr.f32.mxu0 0.0
        %1146 = vmatmul.mubr.f32.gmra.mxu0 %v944
        %v1147 = vpop.f32.mrf.mxu0
        %v1148 = vadd.f32 %v861, %v1147
        %v1149 = vpop.f32.mrf.mxu0
        %v1150 = vadd.f32 %v863, %v1149
        %1151 = vmatprep.mubr.f32.mxu0 0.0
        %1152 = vmatmul.mubr.f32.gmra.mxu0 %v947
        %v1153 = vpop.f32.mrf.mxu0
        %v1154 = vadd.f32 %v867, %v1153
        %v1155 = vpop.f32.mrf.mxu0
        %v1156 = vadd.f32 %v869, %v1155
        %1157 = vmatprep.mubr.f32.mxu0 0.0
        %1158 = vmatmul.mubr.f32.gmra.mxu0 %v950
        %v1159 = vpop.f32.mrf.mxu0
        %v1160 = vadd.f32 %v873, %v1159
        %v1161 = vpop.f32.mrf.mxu0
        %v1162 = vadd.f32 %v875, %v1161
        %1163 = vmatprep.mubr.f32.mxu0 0.0
        %1164 = vmatmul.mubr.f32.gmra.mxu0 %v953
        %v1165 = vpop.f32.mrf.mxu0
        %v1166 = vadd.f32 %v879, %v1165
        %v1167 = vpop.f32.mrf.mxu0
        %v1168 = vadd.f32 %v881, %v1167
        %1169 = vdwg.mxu0
        %s1170 = scalar_lea.vmem %s488, 16 [#allocation3]
        %v1171 = vld [vmem:[%s1170] sm:$0xff]
        %v1172 = vld [vmem:[%s1170 + $0x8] sm:$0xff]
        %v1173 = vld [vmem:[%s1170 + $0x10] sm:$0xff]
        %v1174 = vld [vmem:[%s1170 + $0x18] sm:$0xff]
        %v1175 = vld [vmem:[%s1170 + $0x20] sm:$0xff]
        %v1176 = vld [vmem:[%s1170 + $0x28] sm:$0xff]
        %v1177 = vld [vmem:[%s1170 + $0x30] sm:$0xff]
        %v1178 = vld [vmem:[%s1170 + $0x38] sm:$0xff]
        %v1179 = vld [vmem:[%s1170 + $0x40] sm:$0xff]
        %v1180 = vld [vmem:[%s1170 + $0x48] sm:$0xff]
        %v1181 = vld [vmem:[%s1170 + $0x50] sm:$0xff]
        %v1182 = vld [vmem:[%s1170 + $0x58] sm:$0xff]
        %v1183 = vld [vmem:[%s1170 + $0x60] sm:$0xff]
        %v1184 = vld [vmem:[%s1170 + $0x68] sm:$0xff]
        %v1185 = vld [vmem:[%s1170 + $0x70] sm:$0xff]
        %v1186 = vld [vmem:[%s1170 + $0x78] sm:$0xff]
        %v1187 = vld [vmem:[%s1170 + $0x80] sm:$0xff]
        %v1188 = vld [vmem:[%s1170 + $0x88] sm:$0xff]
        %v1189 = vld [vmem:[%s1170 + $0x90] sm:$0xff]
        %v1190 = vld [vmem:[%s1170 + $0x98] sm:$0xff]
        %v1191 = vld [vmem:[%s1170 + $0xa0] sm:$0xff]
        %v1192 = vld [vmem:[%s1170 + $0xa8] sm:$0xff]
        %v1193 = vld [vmem:[%s1170 + $0xb0] sm:$0xff]
        %v1194 = vld [vmem:[%s1170 + $0xb8] sm:$0xff]
        %s1195 = scalar_lea.vmem %s1, 128
        %v1196 = vld [vmem:[%s1195] sm:$0xff]
        %v1197 = vld [vmem:[%s1195 + $0x8] sm:$0xff]
        %v1198 = vld [vmem:[%s1195 + $0x10] sm:$0xff]
        %v1199 = vld [vmem:[%s1195 + $0x18] sm:$0xff]
        %v1200 = vld [vmem:[%s1195 + $0x20] sm:$0xff]
        %v1201 = vld [vmem:[%s1195 + $0x28] sm:$0xff]
        %v1202 = vld [vmem:[%s1195 + $0x30] sm:$0xf]
        %v1203 = vld [vmem:[%s1195 + $0x38] sm:$0xf]
        %v1205 = vsel %vm594, %v1171, 0
        %v1208 = vsel %vm594, %v1172, 0
        %v1211 = vsel %vm594, %v1173, 0
        %v1214 = vsel %vm594, %v1174, 0
        %v1217 = vsel %vm594, %v1175, 0
        %v1220 = vsel %vm594, %v1176, 0
        %v1223 = vsel %vm594, %v1177, 0
        %v1226 = vsel %vm594, %v1178, 0
        %v1229 = vsel %vm594, %v1179, 0
        %v1232 = vsel %vm594, %v1180, 0
        %v1235 = vsel %vm594, %v1181, 0
        %v1238 = vsel %vm594, %v1182, 0
        %v1241 = vsel %vm594, %v1183, 0
        %v1244 = vsel %vm594, %v1184, 0
        %v1247 = vsel %vm594, %v1185, 0
        %v1250 = vsel %vm594, %v1186, 0
        %v1253 = vsel %vm594, %v1187, 0
        %v1256 = vsel %vm594, %v1188, 0
        %v1259 = vsel %vm594, %v1189, 0
        %v1262 = vsel %vm594, %v1190, 0
        %v1265 = vsel %vm594, %v1191, 0
        %v1268 = vsel %vm594, %v1192, 0
        %v1271 = vsel %vm594, %v1193, 0
        %v1274 = vsel %vm594, %v1194, 0
        %v1277 = vsel %vm667, %v1202, 0
        %v1280 = vsel %vm667, %v1203, 0
        %1282 = vmatprep.subr.mxu0 0.0
        %1283 = vmatpush1.msra.mxu0 0.0
        %1284 = vmatprep.subr.mxu0 0.0
        %1285 = vmatpush1.msra.mxu0 0.0
        %1286 = vmatprep.subr.mxu0 0.0
        %1287 = vmatpush1.msra.mxu0 0.0
        %1288 = vmatprep.subr.mxu0 0.0
        %1289 = vmatpush1.msra.mxu0 0.0
        %1290 = vmatprep.subr.mxu0 0.0
        %1291 = vmatpush1.msra.mxu0 0.0
        %1292 = vmatprep.subr.mxu0 0.0
        %1293 = vmatpush1.msra.mxu0 0.0
        %1294 = vmatprep.subr.mxu0 0.0
        %1295 = vmatpush1.msra.mxu0 0.0
        %1296 = vmatprep.subr.mxu0 0.0
        %1297 = vmatpush1.msra.mxu0 0.0
        %1298 = vmatprep.subr.mxu0 0.0
        %1299 = vmatpush1.msra.mxu0 0.0
        %1300 = vmatprep.subr.mxu0 0.0
        %1301 = vmatpush1.msra.mxu0 0.0
        %1302 = vmatprep.subr.mxu0 0.0
        %1303 = vmatpush1.msra.mxu0 0.0
        %1304 = vmatprep.subr.mxu0 0.0
        %1305 = vmatpush1.msra.mxu0 0.0
        %1306 = vmatprep.subr.mxu0 %v1280
        %1307 = vmatpush1.msra.mxu0 %v1277
        %1308 = vmatprep.subr.mxu0 %v1201
        %1309 = vmatpush1.msra.mxu0 %v1200
        %1310 = vmatprep.subr.mxu0 %v1199
        %1311 = vmatpush1.msra.mxu0 %v1198
        %1312 = vmatprep.subr.mxu0 %v1197
        %1313 = vmatpush1.msra.mxu0 %v1196
        %1314 = vmatprep.subr.mxu0 0.0
        %1315 = vmatpush2.msra.mxu0 0.0
        %1316 = vmatprep.subr.mxu0 0.0
        %1317 = vmatpush2.msra.mxu0 0.0
        %1318 = vmatprep.subr.mxu0 0.0
        %1319 = vmatpush2.msra.mxu0 0.0
        %1320 = vmatprep.subr.mxu0 0.0
        %1321 = vmatpush2.msra.mxu0 0.0
        %1322 = vmatprep.subr.mxu0 0.0
        %1323 = vmatpush2.msra.mxu0 0.0
        %1324 = vmatprep.subr.mxu0 0.0
        %1325 = vmatpush2.msra.mxu0 0.0
        %1326 = vmatprep.subr.mxu0 0.0
        %1327 = vmatpush2.msra.mxu0 0.0
        %1328 = vmatprep.subr.mxu0 0.0
        %1329 = vmatpush2.msra.mxu0 0.0
        %1330 = vmatprep.subr.mxu0 0.0
        %1331 = vmatpush2.msra.mxu0 0.0
        %1332 = vmatprep.subr.mxu0 0.0
        %1333 = vmatpush2.msra.mxu0 0.0
        %1334 = vmatprep.subr.mxu0 0.0
        %1335 = vmatpush2.msra.mxu0 0.0
        %1336 = vmatprep.subr.mxu0 0.0
        %1337 = vmatpush2.msra.mxu0 0.0
        %1338 = vmatprep.subr.mxu0 0.0
        %1339 = vmatpush2.msra.mxu0 0.0
        %1340 = vmatprep.subr.mxu0 0.0
        %1341 = vmatpush2.msra.mxu0 0.0
        %1342 = vmatprep.subr.mxu0 0.0
        %1343 = vmatpush2.msra.mxu0 0.0
        %1344 = vmatprep.subr.mxu0 0.0
        %1345 = vmatpush2.msra.mxu0 0.0
        %1346 = vmatprep.mubr.f32.mxu0 0.0
        %1347 = vmatmul.mubr.f32.gmra.mxu0 %v1205
        %v1348 = vpop.f32.mrf.mxu0
        %v1349 = vadd.f32 0.0, %v1348
        %v1350 = vpop.f32.mrf.mxu0
        %v1351 = vadd.f32 0.0, %v1350
        %1352 = vmatprep.mubr.f32.mxu0 0.0
        %1353 = vmatmul.mubr.f32.gmra.mxu0 %v1208
        %v1354 = vpop.f32.mrf.mxu0
        %v1355 = vadd.f32 0.0, %v1354
        %v1356 = vpop.f32.mrf.mxu0
        %v1357 = vadd.f32 0.0, %v1356
        %1358 = vmatprep.mubr.f32.mxu0 0.0
        %1359 = vmatmul.mubr.f32.gmra.mxu0 %v1211
        %v1360 = vpop.f32.mrf.mxu0
        %v1361 = vadd.f32 0.0, %v1360
        %v1362 = vpop.f32.mrf.mxu0
        %v1363 = vadd.f32 0.0, %v1362
        %1364 = vmatprep.mubr.f32.mxu0 0.0
        %1365 = vmatmul.mubr.f32.gmra.mxu0 %v1214
        %v1366 = vpop.f32.mrf.mxu0
        %v1367 = vadd.f32 0.0, %v1366
        %v1368 = vpop.f32.mrf.mxu0
        %v1369 = vadd.f32 0.0, %v1368
        %1370 = vmatprep.mubr.f32.mxu0 0.0
        %1371 = vmatmul.mubr.f32.gmra.mxu0 %v1217
        %v1372 = vpop.f32.mrf.mxu0
        %v1373 = vadd.f32 0.0, %v1372
        %v1374 = vpop.f32.mrf.mxu0
        %v1375 = vadd.f32 0.0, %v1374
        %1376 = vmatprep.mubr.f32.mxu0 0.0
        %1377 = vmatmul.mubr.f32.gmra.mxu0 %v1220
        %v1378 = vpop.f32.mrf.mxu0
        %v1379 = vadd.f32 0.0, %v1378
        %v1380 = vpop.f32.mrf.mxu0
        %v1381 = vadd.f32 0.0, %v1380
        %1382 = vmatprep.mubr.f32.mxu0 0.0
        %1383 = vmatmul.mubr.f32.gmra.mxu0 %v1223
        %v1384 = vpop.f32.mrf.mxu0
        %v1385 = vadd.f32 0.0, %v1384
        %v1386 = vpop.f32.mrf.mxu0
        %v1387 = vadd.f32 0.0, %v1386
        %1388 = vmatprep.mubr.f32.mxu0 0.0
        %1389 = vmatmul.mubr.f32.gmra.mxu0 %v1226
        %v1390 = vpop.f32.mrf.mxu0
        %v1391 = vadd.f32 0.0, %v1390
        %v1392 = vpop.f32.mrf.mxu0
        %v1393 = vadd.f32 0.0, %v1392
        %1394 = vmatprep.mubr.f32.mxu0 0.0
        %1395 = vmatmul.mubr.f32.gmra.mxu0 %v1229
        %v1396 = vpop.f32.mrf.mxu0
        %v1397 = vadd.f32 0.0, %v1396
        %v1398 = vpop.f32.mrf.mxu0
        %v1399 = vadd.f32 0.0, %v1398
        %1400 = vmatprep.mubr.f32.mxu0 0.0
        %1401 = vmatmul.mubr.f32.gmra.mxu0 %v1232
        %v1402 = vpop.f32.mrf.mxu0
        %v1403 = vadd.f32 0.0, %v1402
        %v1404 = vpop.f32.mrf.mxu0
        %v1405 = vadd.f32 0.0, %v1404
        %1406 = vmatprep.mubr.f32.mxu0 0.0
        %1407 = vmatmul.mubr.f32.gmra.mxu0 %v1235
        %v1408 = vpop.f32.mrf.mxu0
        %v1409 = vadd.f32 0.0, %v1408
        %v1410 = vpop.f32.mrf.mxu0
        %v1411 = vadd.f32 0.0, %v1410
        %1412 = vmatprep.mubr.f32.mxu0 0.0
        %1413 = vmatmul.mubr.f32.gmra.mxu0 %v1238
        %v1414 = vpop.f32.mrf.mxu0
        %v1415 = vadd.f32 0.0, %v1414
        %v1416 = vpop.f32.mrf.mxu0
        %v1417 = vadd.f32 0.0, %v1416
        %1418 = vmatprep.mubr.f32.mxu0 0.0
        %1419 = vmatmul.mubr.f32.gmra.mxu0 %v1241
        %v1420 = vpop.f32.mrf.mxu0
        %v1421 = vadd.f32 0.0, %v1420
        %v1422 = vpop.f32.mrf.mxu0
        %v1423 = vadd.f32 0.0, %v1422
        %1424 = vmatprep.mubr.f32.mxu0 0.0
        %1425 = vmatmul.mubr.f32.gmra.mxu0 %v1244
        %v1426 = vpop.f32.mrf.mxu0
        %v1427 = vadd.f32 0.0, %v1426
        %v1428 = vpop.f32.mrf.mxu0
        %v1429 = vadd.f32 0.0, %v1428
        %1430 = vmatprep.mubr.f32.mxu0 0.0
        %1431 = vmatmul.mubr.f32.gmra.mxu0 %v1247
        %v1432 = vpop.f32.mrf.mxu0
        %v1433 = vadd.f32 0.0, %v1432
        %v1434 = vpop.f32.mrf.mxu0
        %v1435 = vadd.f32 0.0, %v1434
        %1436 = vmatprep.mubr.f32.mxu0 0.0
        %1437 = vmatmul.mubr.f32.gmra.mxu0 %v1250
        %v1438 = vpop.f32.mrf.mxu0
        %v1439 = vadd.f32 0.0, %v1438
        %v1440 = vpop.f32.mrf.mxu0
        %v1441 = vadd.f32 0.0, %v1440
        %1442 = vmatprep.mubr.f32.mxu0 0.0
        %1443 = vmatmul.mubr.f32.gmra.mxu0 %v1253
        %v1444 = vpop.f32.mrf.mxu0
        %v1445 = vadd.f32 0.0, %v1444
        %v1446 = vpop.f32.mrf.mxu0
        %v1447 = vadd.f32 0.0, %v1446
        %1448 = vmatprep.mubr.f32.mxu0 0.0
        %1449 = vmatmul.mubr.f32.gmra.mxu0 %v1256
        %v1450 = vpop.f32.mrf.mxu0
        %v1451 = vadd.f32 0.0, %v1450
        %v1452 = vpop.f32.mrf.mxu0
        %v1453 = vadd.f32 0.0, %v1452
        %1454 = vmatprep.mubr.f32.mxu0 0.0
        %1455 = vmatmul.mubr.f32.gmra.mxu0 %v1259
        %v1456 = vpop.f32.mrf.mxu0
        %v1457 = vadd.f32 0.0, %v1456
        %v1458 = vpop.f32.mrf.mxu0
        %v1459 = vadd.f32 0.0, %v1458
        %1460 = vmatprep.mubr.f32.mxu0 0.0
        %1461 = vmatmul.mubr.f32.gmra.mxu0 %v1262
        %v1462 = vpop.f32.mrf.mxu0
        %v1463 = vadd.f32 0.0, %v1462
        %v1464 = vpop.f32.mrf.mxu0
        %v1465 = vadd.f32 0.0, %v1464
        %1466 = vmatprep.mubr.f32.mxu0 0.0
        %1467 = vmatmul.mubr.f32.gmra.mxu0 %v1265
        %v1468 = vpop.f32.mrf.mxu0
        %v1469 = vadd.f32 0.0, %v1468
        %v1470 = vpop.f32.mrf.mxu0
        %v1471 = vadd.f32 0.0, %v1470
        %1472 = vmatprep.mubr.f32.mxu0 0.0
        %1473 = vmatmul.mubr.f32.gmra.mxu0 %v1268
        %v1474 = vpop.f32.mrf.mxu0
        %v1475 = vadd.f32 0.0, %v1474
        %v1476 = vpop.f32.mrf.mxu0
        %v1477 = vadd.f32 0.0, %v1476
        %1478 = vmatprep.mubr.f32.mxu0 0.0
        %1479 = vmatmul.mubr.f32.gmra.mxu0 %v1271
        %v1480 = vpop.f32.mrf.mxu0
        %v1481 = vadd.f32 0.0, %v1480
        %v1482 = vpop.f32.mrf.mxu0
        %v1483 = vadd.f32 0.0, %v1482
        %1484 = vmatprep.mubr.f32.mxu0 0.0
        %1485 = vmatmul.mubr.f32.gmra.mxu0 %v1274
        %v1486 = vpop.f32.mrf.mxu0
        %v1487 = vadd.f32 0.0, %v1486
        %v1488 = vpop.f32.mrf.mxu0
        %v1489 = vadd.f32 0.0, %v1488
        %1490 = vdwg.mxu0
        %v1491 = vadd.f32 %v1028, %v1349
        %v1492 = vadd.f32 %v1030, %v1351
        %v1493 = vadd.f32 %v1034, %v1355
        %v1494 = vadd.f32 %v1036, %v1357
        %v1495 = vadd.f32 %v1040, %v1361
        %v1496 = vadd.f32 %v1042, %v1363
        %v1497 = vadd.f32 %v1046, %v1367
        %v1498 = vadd.f32 %v1048, %v1369
        %v1499 = vadd.f32 %v1052, %v1373
        %v1500 = vadd.f32 %v1054, %v1375
        %v1501 = vadd.f32 %v1058, %v1379
        %v1502 = vadd.f32 %v1060, %v1381
        %v1503 = vadd.f32 %v1064, %v1385
        %v1504 = vadd.f32 %v1066, %v1387
        %v1505 = vadd.f32 %v1070, %v1391
        %v1506 = vadd.f32 %v1072, %v1393
        %v1507 = vadd.f32 %v1076, %v1397
        %v1508 = vadd.f32 %v1078, %v1399
        %v1509 = vadd.f32 %v1082, %v1403
        %v1510 = vadd.f32 %v1084, %v1405
        %v1511 = vadd.f32 %v1088, %v1409
        %v1512 = vadd.f32 %v1090, %v1411
        %v1513 = vadd.f32 %v1094, %v1415
        %v1514 = vadd.f32 %v1096, %v1417
        %v1515 = vadd.f32 %v1100, %v1421
        %v1516 = vadd.f32 %v1102, %v1423
        %v1517 = vadd.f32 %v1106, %v1427
        %v1518 = vadd.f32 %v1108, %v1429
        %v1519 = vadd.f32 %v1112, %v1433
        %v1520 = vadd.f32 %v1114, %v1435
        %v1521 = vadd.f32 %v1118, %v1439
        %v1522 = vadd.f32 %v1120, %v1441
        %v1523 = vadd.f32 %v1124, %v1445
        %v1524 = vadd.f32 %v1126, %v1447
        %v1525 = vadd.f32 %v1130, %v1451
        %v1526 = vadd.f32 %v1132, %v1453
        %v1527 = vadd.f32 %v1136, %v1457
        %v1528 = vadd.f32 %v1138, %v1459
        %v1529 = vadd.f32 %v1142, %v1463
        %v1530 = vadd.f32 %v1144, %v1465
        %v1531 = vadd.f32 %v1148, %v1469
        %v1532 = vadd.f32 %v1150, %v1471
        %v1533 = vadd.f32 %v1154, %v1475
        %v1534 = vadd.f32 %v1156, %v1477
        %v1535 = vadd.f32 %v1160, %v1481
        %v1536 = vadd.f32 %v1162, %v1483
        %v1537 = vadd.f32 %v1166, %v1487
        %v1538 = vadd.f32 %v1168, %v1489
        %s1539 = scalar_lea.vmem %s488, 24 [#allocation3]
        %v1540 = vld [vmem:[%s1539] sm:$0xff]
        %v1541 = vld [vmem:[%s1539 + $0x8] sm:$0xff]
        %v1542 = vld [vmem:[%s1539 + $0x10] sm:$0xff]
        %v1543 = vld [vmem:[%s1539 + $0x18] sm:$0xff]
        %v1544 = vld [vmem:[%s1539 + $0x20] sm:$0xff]
        %v1545 = vld [vmem:[%s1539 + $0x28] sm:$0xff]
        %v1546 = vld [vmem:[%s1539 + $0x30] sm:$0xff]
        %v1547 = vld [vmem:[%s1539 + $0x38] sm:$0xff]
        %v1548 = vld [vmem:[%s1539 + $0x40] sm:$0xff]
        %v1549 = vld [vmem:[%s1539 + $0x48] sm:$0xff]
        %v1550 = vld [vmem:[%s1539 + $0x50] sm:$0xff]
        %v1551 = vld [vmem:[%s1539 + $0x58] sm:$0xff]
        %v1552 = vld [vmem:[%s1539 + $0x60] sm:$0xff]
        %v1553 = vld [vmem:[%s1539 + $0x68] sm:$0xff]
        %v1554 = vld [vmem:[%s1539 + $0x70] sm:$0xff]
        %v1555 = vld [vmem:[%s1539 + $0x78] sm:$0xff]
        %v1556 = vld [vmem:[%s1539 + $0x80] sm:$0xff]
        %v1557 = vld [vmem:[%s1539 + $0x88] sm:$0xff]
        %v1558 = vld [vmem:[%s1539 + $0x90] sm:$0xff]
        %v1559 = vld [vmem:[%s1539 + $0x98] sm:$0xff]
        %v1560 = vld [vmem:[%s1539 + $0xa0] sm:$0xff]
        %v1561 = vld [vmem:[%s1539 + $0xa8] sm:$0xff]
        %v1562 = vld [vmem:[%s1539 + $0xb0] sm:$0xff]
        %v1563 = vld [vmem:[%s1539 + $0xb8] sm:$0xff]
        %s1564 = scalar_lea.vmem %s1, 192
        %v1565 = vld [vmem:[%s1564] sm:$0xff]
        %v1566 = vld [vmem:[%s1564 + $0x8] sm:$0xff]
        %v1567 = vld [vmem:[%s1564 + $0x10] sm:$0xff]
        %v1568 = vld [vmem:[%s1564 + $0x18] sm:$0xff]
        %v1569 = vld [vmem:[%s1564 + $0x20] sm:$0xff]
        %v1570 = vld [vmem:[%s1564 + $0x28] sm:$0xff]
        %v1571 = vld [vmem:[%s1564 + $0x30] sm:$0xf]
        %v1572 = vld [vmem:[%s1564 + $0x38] sm:$0xf]
        %v1574 = vsel %vm594, %v1540, 0
        %v1577 = vsel %vm594, %v1541, 0
        %v1580 = vsel %vm594, %v1542, 0
        %v1583 = vsel %vm594, %v1543, 0
        %v1586 = vsel %vm594, %v1544, 0
        %v1589 = vsel %vm594, %v1545, 0
        %v1592 = vsel %vm594, %v1546, 0
        %v1595 = vsel %vm594, %v1547, 0
        %v1598 = vsel %vm594, %v1548, 0
        %v1601 = vsel %vm594, %v1549, 0
        %v1604 = vsel %vm594, %v1550, 0
        %v1607 = vsel %vm594, %v1551, 0
        %v1610 = vsel %vm594, %v1552, 0
        %v1613 = vsel %vm594, %v1553, 0
        %v1616 = vsel %vm594, %v1554, 0
        %v1619 = vsel %vm594, %v1555, 0
        %v1622 = vsel %vm594, %v1556, 0
        %v1625 = vsel %vm594, %v1557, 0
        %v1628 = vsel %vm594, %v1558, 0
        %v1631 = vsel %vm594, %v1559, 0
        %v1634 = vsel %vm594, %v1560, 0
        %v1637 = vsel %vm594, %v1561, 0
        %v1640 = vsel %vm594, %v1562, 0
        %v1643 = vsel %vm594, %v1563, 0
        %v1646 = vsel %vm667, %v1571, 0
        %v1649 = vsel %vm667, %v1572, 0
        %1651 = vmatprep.subr.mxu0 0.0
        %1652 = vmatpush1.msra.mxu0 0.0
        %1653 = vmatprep.subr.mxu0 0.0
        %1654 = vmatpush1.msra.mxu0 0.0
        %1655 = vmatprep.subr.mxu0 0.0
        %1656 = vmatpush1.msra.mxu0 0.0
        %1657 = vmatprep.subr.mxu0 0.0
        %1658 = vmatpush1.msra.mxu0 0.0
        %1659 = vmatprep.subr.mxu0 0.0
        %1660 = vmatpush1.msra.mxu0 0.0
        %1661 = vmatprep.subr.mxu0 0.0
        %1662 = vmatpush1.msra.mxu0 0.0
        %1663 = vmatprep.subr.mxu0 0.0
        %1664 = vmatpush1.msra.mxu0 0.0
        %1665 = vmatprep.subr.mxu0 0.0
        %1666 = vmatpush1.msra.mxu0 0.0
        %1667 = vmatprep.subr.mxu0 0.0
        %1668 = vmatpush1.msra.mxu0 0.0
        %1669 = vmatprep.subr.mxu0 0.0
        %1670 = vmatpush1.msra.mxu0 0.0
        %1671 = vmatprep.subr.mxu0 0.0
        %1672 = vmatpush1.msra.mxu0 0.0
        %1673 = vmatprep.subr.mxu0 0.0
        %1674 = vmatpush1.msra.mxu0 0.0
        %1675 = vmatprep.subr.mxu0 %v1649
        %1676 = vmatpush1.msra.mxu0 %v1646
        %1677 = vmatprep.subr.mxu0 %v1570
        %1678 = vmatpush1.msra.mxu0 %v1569
        %1679 = vmatprep.subr.mxu0 %v1568
        %1680 = vmatpush1.msra.mxu0 %v1567
        %1681 = vmatprep.subr.mxu0 %v1566
        %1682 = vmatpush1.msra.mxu0 %v1565
        %1683 = vmatprep.subr.mxu0 0.0
        %1684 = vmatpush2.msra.mxu0 0.0
        %1685 = vmatprep.subr.mxu0 0.0
        %1686 = vmatpush2.msra.mxu0 0.0
        %1687 = vmatprep.subr.mxu0 0.0
        %1688 = vmatpush2.msra.mxu0 0.0
        %1689 = vmatprep.subr.mxu0 0.0
        %1690 = vmatpush2.msra.mxu0 0.0
        %1691 = vmatprep.subr.mxu0 0.0
        %1692 = vmatpush2.msra.mxu0 0.0
        %1693 = vmatprep.subr.mxu0 0.0
        %1694 = vmatpush2.msra.mxu0 0.0
        %1695 = vmatprep.subr.mxu0 0.0
        %1696 = vmatpush2.msra.mxu0 0.0
        %1697 = vmatprep.subr.mxu0 0.0
        %1698 = vmatpush2.msra.mxu0 0.0
        %1699 = vmatprep.subr.mxu0 0.0
        %1700 = vmatpush2.msra.mxu0 0.0
        %1701 = vmatprep.subr.mxu0 0.0
        %1702 = vmatpush2.msra.mxu0 0.0
        %1703 = vmatprep.subr.mxu0 0.0
        %1704 = vmatpush2.msra.mxu0 0.0
        %1705 = vmatprep.subr.mxu0 0.0
        %1706 = vmatpush2.msra.mxu0 0.0
        %1707 = vmatprep.subr.mxu0 0.0
        %1708 = vmatpush2.msra.mxu0 0.0
        %1709 = vmatprep.subr.mxu0 0.0
        %1710 = vmatpush2.msra.mxu0 0.0
        %1711 = vmatprep.subr.mxu0 0.0
        %1712 = vmatpush2.msra.mxu0 0.0
        %1713 = vmatprep.subr.mxu0 0.0
        %1714 = vmatpush2.msra.mxu0 0.0
        %1715 = vmatprep.mubr.f32.mxu0 0.0
        %1716 = vmatmul.mubr.f32.gmra.mxu0 %v1574
        %v1717 = vpop.f32.mrf.mxu0
        %v1718 = vadd.f32 0.0, %v1717
        %v1719 = vpop.f32.mrf.mxu0
        %v1720 = vadd.f32 0.0, %v1719
        %1721 = vmatprep.mubr.f32.mxu0 0.0
        %1722 = vmatmul.mubr.f32.gmra.mxu0 %v1577
        %v1723 = vpop.f32.mrf.mxu0
        %v1724 = vadd.f32 0.0, %v1723
        %v1725 = vpop.f32.mrf.mxu0
        %v1726 = vadd.f32 0.0, %v1725
        %1727 = vmatprep.mubr.f32.mxu0 0.0
        %1728 = vmatmul.mubr.f32.gmra.mxu0 %v1580
        %v1729 = vpop.f32.mrf.mxu0
        %v1730 = vadd.f32 0.0, %v1729
        %v1731 = vpop.f32.mrf.mxu0
        %v1732 = vadd.f32 0.0, %v1731
        %1733 = vmatprep.mubr.f32.mxu0 0.0
        %1734 = vmatmul.mubr.f32.gmra.mxu0 %v1583
        %v1735 = vpop.f32.mrf.mxu0
        %v1736 = vadd.f32 0.0, %v1735
        %v1737 = vpop.f32.mrf.mxu0
        %v1738 = vadd.f32 0.0, %v1737
        %1739 = vmatprep.mubr.f32.mxu0 0.0
        %1740 = vmatmul.mubr.f32.gmra.mxu0 %v1586
        %v1741 = vpop.f32.mrf.mxu0
        %v1742 = vadd.f32 0.0, %v1741
        %v1743 = vpop.f32.mrf.mxu0
        %v1744 = vadd.f32 0.0, %v1743
        %1745 = vmatprep.mubr.f32.mxu0 0.0
        %1746 = vmatmul.mubr.f32.gmra.mxu0 %v1589
        %v1747 = vpop.f32.mrf.mxu0
        %v1748 = vadd.f32 0.0, %v1747
        %v1749 = vpop.f32.mrf.mxu0
        %v1750 = vadd.f32 0.0, %v1749
        %1751 = vmatprep.mubr.f32.mxu0 0.0
        %1752 = vmatmul.mubr.f32.gmra.mxu0 %v1592
        %v1753 = vpop.f32.mrf.mxu0
        %v1754 = vadd.f32 0.0, %v1753
        %v1755 = vpop.f32.mrf.mxu0
        %v1756 = vadd.f32 0.0, %v1755
        %1757 = vmatprep.mubr.f32.mxu0 0.0
        %1758 = vmatmul.mubr.f32.gmra.mxu0 %v1595
        %v1759 = vpop.f32.mrf.mxu0
        %v1760 = vadd.f32 0.0, %v1759
        %v1761 = vpop.f32.mrf.mxu0
        %v1762 = vadd.f32 0.0, %v1761
        %1763 = vmatprep.mubr.f32.mxu0 0.0
        %1764 = vmatmul.mubr.f32.gmra.mxu0 %v1598
        %v1765 = vpop.f32.mrf.mxu0
        %v1766 = vadd.f32 0.0, %v1765
        %v1767 = vpop.f32.mrf.mxu0
        %v1768 = vadd.f32 0.0, %v1767
        %1769 = vmatprep.mubr.f32.mxu0 0.0
        %1770 = vmatmul.mubr.f32.gmra.mxu0 %v1601
        %v1771 = vpop.f32.mrf.mxu0
        %v1772 = vadd.f32 0.0, %v1771
        %v1773 = vpop.f32.mrf.mxu0
        %v1774 = vadd.f32 0.0, %v1773
        %1775 = vmatprep.mubr.f32.mxu0 0.0
        %1776 = vmatmul.mubr.f32.gmra.mxu0 %v1604
        %v1777 = vpop.f32.mrf.mxu0
        %v1778 = vadd.f32 0.0, %v1777
        %v1779 = vpop.f32.mrf.mxu0
        %v1780 = vadd.f32 0.0, %v1779
        %1781 = vmatprep.mubr.f32.mxu0 0.0
        %1782 = vmatmul.mubr.f32.gmra.mxu0 %v1607
        %v1783 = vpop.f32.mrf.mxu0
        %v1784 = vadd.f32 0.0, %v1783
        %v1785 = vpop.f32.mrf.mxu0
        %v1786 = vadd.f32 0.0, %v1785
        %1787 = vmatprep.mubr.f32.mxu0 0.0
        %1788 = vmatmul.mubr.f32.gmra.mxu0 %v1610
        %v1789 = vpop.f32.mrf.mxu0
        %v1790 = vadd.f32 0.0, %v1789
        %v1791 = vpop.f32.mrf.mxu0
        %v1792 = vadd.f32 0.0, %v1791
        %1793 = vmatprep.mubr.f32.mxu0 0.0
        %1794 = vmatmul.mubr.f32.gmra.mxu0 %v1613
        %v1795 = vpop.f32.mrf.mxu0
        %v1796 = vadd.f32 0.0, %v1795
        %v1797 = vpop.f32.mrf.mxu0
        %v1798 = vadd.f32 0.0, %v1797
        %1799 = vmatprep.mubr.f32.mxu0 0.0
        %1800 = vmatmul.mubr.f32.gmra.mxu0 %v1616
        %v1801 = vpop.f32.mrf.mxu0
        %v1802 = vadd.f32 0.0, %v1801
        %v1803 = vpop.f32.mrf.mxu0
        %v1804 = vadd.f32 0.0, %v1803
        %1805 = vmatprep.mubr.f32.mxu0 0.0
        %1806 = vmatmul.mubr.f32.gmra.mxu0 %v1619
        %v1807 = vpop.f32.mrf.mxu0
        %v1808 = vadd.f32 0.0, %v1807
        %v1809 = vpop.f32.mrf.mxu0
        %v1810 = vadd.f32 0.0, %v1809
        %1811 = vmatprep.mubr.f32.mxu0 0.0
        %1812 = vmatmul.mubr.f32.gmra.mxu0 %v1622
        %v1813 = vpop.f32.mrf.mxu0
        %v1814 = vadd.f32 0.0, %v1813
        %v1815 = vpop.f32.mrf.mxu0
        %v1816 = vadd.f32 0.0, %v1815
        %1817 = vmatprep.mubr.f32.mxu0 0.0
        %1818 = vmatmul.mubr.f32.gmra.mxu0 %v1625
        %v1819 = vpop.f32.mrf.mxu0
        %v1820 = vadd.f32 0.0, %v1819
        %v1821 = vpop.f32.mrf.mxu0
        %v1822 = vadd.f32 0.0, %v1821
        %1823 = vmatprep.mubr.f32.mxu0 0.0
        %1824 = vmatmul.mubr.f32.gmra.mxu0 %v1628
        %v1825 = vpop.f32.mrf.mxu0
        %v1826 = vadd.f32 0.0, %v1825
        %v1827 = vpop.f32.mrf.mxu0
        %v1828 = vadd.f32 0.0, %v1827
        %1829 = vmatprep.mubr.f32.mxu0 0.0
        %1830 = vmatmul.mubr.f32.gmra.mxu0 %v1631
        %v1831 = vpop.f32.mrf.mxu0
        %v1832 = vadd.f32 0.0, %v1831
        %v1833 = vpop.f32.mrf.mxu0
        %v1834 = vadd.f32 0.0, %v1833
        %1835 = vmatprep.mubr.f32.mxu0 0.0
        %1836 = vmatmul.mubr.f32.gmra.mxu0 %v1634
        %v1837 = vpop.f32.mrf.mxu0
        %v1838 = vadd.f32 0.0, %v1837
        %v1839 = vpop.f32.mrf.mxu0
        %v1840 = vadd.f32 0.0, %v1839
        %1841 = vmatprep.mubr.f32.mxu0 0.0
        %1842 = vmatmul.mubr.f32.gmra.mxu0 %v1637
        %v1843 = vpop.f32.mrf.mxu0
        %v1844 = vadd.f32 0.0, %v1843
        %v1845 = vpop.f32.mrf.mxu0
        %v1846 = vadd.f32 0.0, %v1845
        %1847 = vmatprep.mubr.f32.mxu0 0.0
        %1848 = vmatmul.mubr.f32.gmra.mxu0 %v1640
        %v1849 = vpop.f32.mrf.mxu0
        %v1850 = vadd.f32 0.0, %v1849
        %v1851 = vpop.f32.mrf.mxu0
        %v1852 = vadd.f32 0.0, %v1851
        %1853 = vmatprep.mubr.f32.mxu0 0.0
        %1854 = vmatmul.mubr.f32.gmra.mxu0 %v1643
        %v1855 = vpop.f32.mrf.mxu0
        %v1856 = vadd.f32 0.0, %v1855
        %v1857 = vpop.f32.mrf.mxu0
        %v1858 = vadd.f32 0.0, %v1857
        %1859 = vdwg.mxu0
        %v1860 = vadd.f32 %v1491, %v1718
        %v1861 = vadd.f32 %v1492, %v1720
        %v1862 = vadd.f32 %v1493, %v1724
        %v1863 = vadd.f32 %v1494, %v1726
        %v1864 = vadd.f32 %v1495, %v1730
        %v1865 = vadd.f32 %v1496, %v1732
        %v1866 = vadd.f32 %v1497, %v1736
        %v1867 = vadd.f32 %v1498, %v1738
        %v1868 = vadd.f32 %v1499, %v1742
        %v1869 = vadd.f32 %v1500, %v1744
        %v1870 = vadd.f32 %v1501, %v1748
        %v1871 = vadd.f32 %v1502, %v1750
        %v1872 = vadd.f32 %v1503, %v1754
        %v1873 = vadd.f32 %v1504, %v1756
        %v1874 = vadd.f32 %v1505, %v1760
        %v1875 = vadd.f32 %v1506, %v1762
        %v1876 = vadd.f32 %v1507, %v1766
        %v1877 = vadd.f32 %v1508, %v1768
        %v1878 = vadd.f32 %v1509, %v1772
        %v1879 = vadd.f32 %v1510, %v1774
        %v1880 = vadd.f32 %v1511, %v1778
        %v1881 = vadd.f32 %v1512, %v1780
        %v1882 = vadd.f32 %v1513, %v1784
        %v1883 = vadd.f32 %v1514, %v1786
        %v1884 = vadd.f32 %v1515, %v1790
        %v1885 = vadd.f32 %v1516, %v1792
        %v1886 = vadd.f32 %v1517, %v1796
        %v1887 = vadd.f32 %v1518, %v1798
        %v1888 = vadd.f32 %v1519, %v1802
        %v1889 = vadd.f32 %v1520, %v1804
        %v1890 = vadd.f32 %v1521, %v1808
        %v1891 = vadd.f32 %v1522, %v1810
        %v1892 = vadd.f32 %v1523, %v1814
        %v1893 = vadd.f32 %v1524, %v1816
        %v1894 = vadd.f32 %v1525, %v1820
        %v1895 = vadd.f32 %v1526, %v1822
        %v1896 = vadd.f32 %v1527, %v1826
        %v1897 = vadd.f32 %v1528, %v1828
        %v1898 = vadd.f32 %v1529, %v1832
        %v1899 = vadd.f32 %v1530, %v1834
        %v1900 = vadd.f32 %v1531, %v1838
        %v1901 = vadd.f32 %v1532, %v1840
        %v1902 = vadd.f32 %v1533, %v1844
        %v1903 = vadd.f32 %v1534, %v1846
        %v1904 = vadd.f32 %v1535, %v1850
        %v1905 = vadd.f32 %v1536, %v1852
        %v1906 = vadd.f32 %v1537, %v1856
        %v1907 = vadd.f32 %v1538, %v1858
        %s1908 = scalar_lea.vmem %s488, 32 [#allocation3]
        %v1909 = vld [vmem:[%s1908] sm:$0xff]
        %v1910 = vld [vmem:[%s1908 + $0x8] sm:$0xff]
        %v1911 = vld [vmem:[%s1908 + $0x10] sm:$0xff]
        %v1912 = vld [vmem:[%s1908 + $0x18] sm:$0xff]
        %v1913 = vld [vmem:[%s1908 + $0x20] sm:$0xff]
        %v1914 = vld [vmem:[%s1908 + $0x28] sm:$0xff]
        %v1915 = vld [vmem:[%s1908 + $0x30] sm:$0xff]
        %v1916 = vld [vmem:[%s1908 + $0x38] sm:$0xff]
        %v1917 = vld [vmem:[%s1908 + $0x40] sm:$0xff]
        %v1918 = vld [vmem:[%s1908 + $0x48] sm:$0xff]
        %v1919 = vld [vmem:[%s1908 + $0x50] sm:$0xff]
        %v1920 = vld [vmem:[%s1908 + $0x58] sm:$0xff]
        %v1921 = vld [vmem:[%s1908 + $0x60] sm:$0xff]
        %v1922 = vld [vmem:[%s1908 + $0x68] sm:$0xff]
        %v1923 = vld [vmem:[%s1908 + $0x70] sm:$0xff]
        %v1924 = vld [vmem:[%s1908 + $0x78] sm:$0xff]
        %v1925 = vld [vmem:[%s1908 + $0x80] sm:$0xff]
        %v1926 = vld [vmem:[%s1908 + $0x88] sm:$0xff]
        %v1927 = vld [vmem:[%s1908 + $0x90] sm:$0xff]
        %v1928 = vld [vmem:[%s1908 + $0x98] sm:$0xff]
        %v1929 = vld [vmem:[%s1908 + $0xa0] sm:$0xff]
        %v1930 = vld [vmem:[%s1908 + $0xa8] sm:$0xff]
        %v1931 = vld [vmem:[%s1908 + $0xb0] sm:$0xff]
        %v1932 = vld [vmem:[%s1908 + $0xb8] sm:$0xff]
        %s1933 = scalar_lea.vmem %s1, 256
        %v1934 = vld [vmem:[%s1933] sm:$0xff]
        %v1935 = vld [vmem:[%s1933 + $0x8] sm:$0xff]
        %v1936 = vld [vmem:[%s1933 + $0x10] sm:$0xff]
        %v1937 = vld [vmem:[%s1933 + $0x18] sm:$0xff]
        %v1938 = vld [vmem:[%s1933 + $0x20] sm:$0xff]
        %v1939 = vld [vmem:[%s1933 + $0x28] sm:$0xff]
        %v1940 = vld [vmem:[%s1933 + $0x30] sm:$0xf]
        %v1941 = vld [vmem:[%s1933 + $0x38] sm:$0xf]
        %v1943 = vsel %vm594, %v1909, 0
        %v1946 = vsel %vm594, %v1910, 0
        %v1949 = vsel %vm594, %v1911, 0
        %v1952 = vsel %vm594, %v1912, 0
        %v1955 = vsel %vm594, %v1913, 0
        %v1958 = vsel %vm594, %v1914, 0
        %v1961 = vsel %vm594, %v1915, 0
        %v1964 = vsel %vm594, %v1916, 0
        %v1967 = vsel %vm594, %v1917, 0
        %v1970 = vsel %vm594, %v1918, 0
        %v1973 = vsel %vm594, %v1919, 0
        %v1976 = vsel %vm594, %v1920, 0
        %v1979 = vsel %vm594, %v1921, 0
        %v1982 = vsel %vm594, %v1922, 0
        %v1985 = vsel %vm594, %v1923, 0
        %v1988 = vsel %vm594, %v1924, 0
        %v1991 = vsel %vm594, %v1925, 0
        %v1994 = vsel %vm594, %v1926, 0
        %v1997 = vsel %vm594, %v1927, 0
        %v2000 = vsel %vm594, %v1928, 0
        %v2003 = vsel %vm594, %v1929, 0
        %v2006 = vsel %vm594, %v1930, 0
        %v2009 = vsel %vm594, %v1931, 0
        %v2012 = vsel %vm594, %v1932, 0
        %v2015 = vsel %vm667, %v1940, 0
        %v2018 = vsel %vm667, %v1941, 0
        %2020 = vmatprep.subr.mxu0 0.0
        %2021 = vmatpush1.msra.mxu0 0.0
        %2022 = vmatprep.subr.mxu0 0.0
        %2023 = vmatpush1.msra.mxu0 0.0
        %2024 = vmatprep.subr.mxu0 0.0
        %2025 = vmatpush1.msra.mxu0 0.0
        %2026 = vmatprep.subr.mxu0 0.0
        %2027 = vmatpush1.msra.mxu0 0.0
        %2028 = vmatprep.subr.mxu0 0.0
        %2029 = vmatpush1.msra.mxu0 0.0
        %2030 = vmatprep.subr.mxu0 0.0
        %2031 = vmatpush1.msra.mxu0 0.0
        %2032 = vmatprep.subr.mxu0 0.0
        %2033 = vmatpush1.msra.mxu0 0.0
        %2034 = vmatprep.subr.mxu0 0.0
        %2035 = vmatpush1.msra.mxu0 0.0
        %2036 = vmatprep.subr.mxu0 0.0
        %2037 = vmatpush1.msra.mxu0 0.0
        %2038 = vmatprep.subr.mxu0 0.0
        %2039 = vmatpush1.msra.mxu0 0.0
        %2040 = vmatprep.subr.mxu0 0.0
        %2041 = vmatpush1.msra.mxu0 0.0
        %2042 = vmatprep.subr.mxu0 0.0
        %2043 = vmatpush1.msra.mxu0 0.0
        %2044 = vmatprep.subr.mxu0 %v2018
        %2045 = vmatpush1.msra.mxu0 %v2015
        %2046 = vmatprep.subr.mxu0 %v1939
        %2047 = vmatpush1.msra.mxu0 %v1938
        %2048 = vmatprep.subr.mxu0 %v1937
        %2049 = vmatpush1.msra.mxu0 %v1936
        %2050 = vmatprep.subr.mxu0 %v1935
        %2051 = vmatpush1.msra.mxu0 %v1934
        %2052 = vmatprep.subr.mxu0 0.0
        %2053 = vmatpush2.msra.mxu0 0.0
        %2054 = vmatprep.subr.mxu0 0.0
        %2055 = vmatpush2.msra.mxu0 0.0
        %2056 = vmatprep.subr.mxu0 0.0
        %2057 = vmatpush2.msra.mxu0 0.0
        %2058 = vmatprep.subr.mxu0 0.0
        %2059 = vmatpush2.msra.mxu0 0.0
        %2060 = vmatprep.subr.mxu0 0.0
        %2061 = vmatpush2.msra.mxu0 0.0
        %2062 = vmatprep.subr.mxu0 0.0
        %2063 = vmatpush2.msra.mxu0 0.0
        %2064 = vmatprep.subr.mxu0 0.0
        %2065 = vmatpush2.msra.mxu0 0.0
        %2066 = vmatprep.subr.mxu0 0.0
        %2067 = vmatpush2.msra.mxu0 0.0
        %2068 = vmatprep.subr.mxu0 0.0
        %2069 = vmatpush2.msra.mxu0 0.0
        %2070 = vmatprep.subr.mxu0 0.0
        %2071 = vmatpush2.msra.mxu0 0.0
        %2072 = vmatprep.subr.mxu0 0.0
        %2073 = vmatpush2.msra.mxu0 0.0
        %2074 = vmatprep.subr.mxu0 0.0
        %2075 = vmatpush2.msra.mxu0 0.0
        %2076 = vmatprep.subr.mxu0 0.0
        %2077 = vmatpush2.msra.mxu0 0.0
        %2078 = vmatprep.subr.mxu0 0.0
        %2079 = vmatpush2.msra.mxu0 0.0
        %2080 = vmatprep.subr.mxu0 0.0
        %2081 = vmatpush2.msra.mxu0 0.0
        %2082 = vmatprep.subr.mxu0 0.0
        %2083 = vmatpush2.msra.mxu0 0.0
        %2084 = vmatprep.mubr.f32.mxu0 0.0
        %2085 = vmatmul.mubr.f32.gmra.mxu0 %v1943
        %v2086 = vpop.f32.mrf.mxu0
        %v2087 = vadd.f32 0.0, %v2086
        %v2088 = vpop.f32.mrf.mxu0
        %v2089 = vadd.f32 0.0, %v2088
        %2090 = vmatprep.mubr.f32.mxu0 0.0
        %2091 = vmatmul.mubr.f32.gmra.mxu0 %v1946
        %v2092 = vpop.f32.mrf.mxu0
        %v2093 = vadd.f32 0.0, %v2092
        %v2094 = vpop.f32.mrf.mxu0
        %v2095 = vadd.f32 0.0, %v2094
        %2096 = vmatprep.mubr.f32.mxu0 0.0
        %2097 = vmatmul.mubr.f32.gmra.mxu0 %v1949
        %v2098 = vpop.f32.mrf.mxu0
        %v2099 = vadd.f32 0.0, %v2098
        %v2100 = vpop.f32.mrf.mxu0
        %v2101 = vadd.f32 0.0, %v2100
        %2102 = vmatprep.mubr.f32.mxu0 0.0
        %2103 = vmatmul.mubr.f32.gmra.mxu0 %v1952
        %v2104 = vpop.f32.mrf.mxu0
        %v2105 = vadd.f32 0.0, %v2104
        %v2106 = vpop.f32.mrf.mxu0
        %v2107 = vadd.f32 0.0, %v2106
        %2108 = vmatprep.mubr.f32.mxu0 0.0
        %2109 = vmatmul.mubr.f32.gmra.mxu0 %v1955
        %v2110 = vpop.f32.mrf.mxu0
        %v2111 = vadd.f32 0.0, %v2110
        %v2112 = vpop.f32.mrf.mxu0
        %v2113 = vadd.f32 0.0, %v2112
        %2114 = vmatprep.mubr.f32.mxu0 0.0
        %2115 = vmatmul.mubr.f32.gmra.mxu0 %v1958
        %v2116 = vpop.f32.mrf.mxu0
        %v2117 = vadd.f32 0.0, %v2116
        %v2118 = vpop.f32.mrf.mxu0
        %v2119 = vadd.f32 0.0, %v2118
        %2120 = vmatprep.mubr.f32.mxu0 0.0
        %2121 = vmatmul.mubr.f32.gmra.mxu0 %v1961
        %v2122 = vpop.f32.mrf.mxu0
        %v2123 = vadd.f32 0.0, %v2122
        %v2124 = vpop.f32.mrf.mxu0
        %v2125 = vadd.f32 0.0, %v2124
        %2126 = vmatprep.mubr.f32.mxu0 0.0
        %2127 = vmatmul.mubr.f32.gmra.mxu0 %v1964
        %v2128 = vpop.f32.mrf.mxu0
        %v2129 = vadd.f32 0.0, %v2128
        %v2130 = vpop.f32.mrf.mxu0
        %v2131 = vadd.f32 0.0, %v2130
        %2132 = vmatprep.mubr.f32.mxu0 0.0
        %2133 = vmatmul.mubr.f32.gmra.mxu0 %v1967
        %v2134 = vpop.f32.mrf.mxu0
        %v2135 = vadd.f32 0.0, %v2134
        %v2136 = vpop.f32.mrf.mxu0
        %v2137 = vadd.f32 0.0, %v2136
        %2138 = vmatprep.mubr.f32.mxu0 0.0
        %2139 = vmatmul.mubr.f32.gmra.mxu0 %v1970
        %v2140 = vpop.f32.mrf.mxu0
        %v2141 = vadd.f32 0.0, %v2140
        %v2142 = vpop.f32.mrf.mxu0
        %v2143 = vadd.f32 0.0, %v2142
        %2144 = vmatprep.mubr.f32.mxu0 0.0
        %2145 = vmatmul.mubr.f32.gmra.mxu0 %v1973
        %v2146 = vpop.f32.mrf.mxu0
        %v2147 = vadd.f32 0.0, %v2146
        %v2148 = vpop.f32.mrf.mxu0
        %v2149 = vadd.f32 0.0, %v2148
        %2150 = vmatprep.mubr.f32.mxu0 0.0
        %2151 = vmatmul.mubr.f32.gmra.mxu0 %v1976
        %v2152 = vpop.f32.mrf.mxu0
        %v2153 = vadd.f32 0.0, %v2152
        %v2154 = vpop.f32.mrf.mxu0
        %v2155 = vadd.f32 0.0, %v2154
        %2156 = vmatprep.mubr.f32.mxu0 0.0
        %2157 = vmatmul.mubr.f32.gmra.mxu0 %v1979
        %v2158 = vpop.f32.mrf.mxu0
        %v2159 = vadd.f32 0.0, %v2158
        %v2160 = vpop.f32.mrf.mxu0
        %v2161 = vadd.f32 0.0, %v2160
        %2162 = vmatprep.mubr.f32.mxu0 0.0
        %2163 = vmatmul.mubr.f32.gmra.mxu0 %v1982
        %v2164 = vpop.f32.mrf.mxu0
        %v2165 = vadd.f32 0.0, %v2164
        %v2166 = vpop.f32.mrf.mxu0
        %v2167 = vadd.f32 0.0, %v2166
        %2168 = vmatprep.mubr.f32.mxu0 0.0
        %2169 = vmatmul.mubr.f32.gmra.mxu0 %v1985
        %v2170 = vpop.f32.mrf.mxu0
        %v2171 = vadd.f32 0.0, %v2170
        %v2172 = vpop.f32.mrf.mxu0
        %v2173 = vadd.f32 0.0, %v2172
        %2174 = vmatprep.mubr.f32.mxu0 0.0
        %2175 = vmatmul.mubr.f32.gmra.mxu0 %v1988
        %v2176 = vpop.f32.mrf.mxu0
        %v2177 = vadd.f32 0.0, %v2176
        %v2178 = vpop.f32.mrf.mxu0
        %v2179 = vadd.f32 0.0, %v2178
        %2180 = vmatprep.mubr.f32.mxu0 0.0
        %2181 = vmatmul.mubr.f32.gmra.mxu0 %v1991
        %v2182 = vpop.f32.mrf.mxu0
        %v2183 = vadd.f32 0.0, %v2182
        %v2184 = vpop.f32.mrf.mxu0
        %v2185 = vadd.f32 0.0, %v2184
        %2186 = vmatprep.mubr.f32.mxu0 0.0
        %2187 = vmatmul.mubr.f32.gmra.mxu0 %v1994
        %v2188 = vpop.f32.mrf.mxu0
        %v2189 = vadd.f32 0.0, %v2188
        %v2190 = vpop.f32.mrf.mxu0
        %v2191 = vadd.f32 0.0, %v2190
        %2192 = vmatprep.mubr.f32.mxu0 0.0
        %2193 = vmatmul.mubr.f32.gmra.mxu0 %v1997
        %v2194 = vpop.f32.mrf.mxu0
        %v2195 = vadd.f32 0.0, %v2194
        %v2196 = vpop.f32.mrf.mxu0
        %v2197 = vadd.f32 0.0, %v2196
        %2198 = vmatprep.mubr.f32.mxu0 0.0
        %2199 = vmatmul.mubr.f32.gmra.mxu0 %v2000
        %v2200 = vpop.f32.mrf.mxu0
        %v2201 = vadd.f32 0.0, %v2200
        %v2202 = vpop.f32.mrf.mxu0
        %v2203 = vadd.f32 0.0, %v2202
        %2204 = vmatprep.mubr.f32.mxu0 0.0
        %2205 = vmatmul.mubr.f32.gmra.mxu0 %v2003
        %v2206 = vpop.f32.mrf.mxu0
        %v2207 = vadd.f32 0.0, %v2206
        %v2208 = vpop.f32.mrf.mxu0
        %v2209 = vadd.f32 0.0, %v2208
        %2210 = vmatprep.mubr.f32.mxu0 0.0
        %2211 = vmatmul.mubr.f32.gmra.mxu0 %v2006
        %v2212 = vpop.f32.mrf.mxu0
        %v2213 = vadd.f32 0.0, %v2212
        %v2214 = vpop.f32.mrf.mxu0
        %v2215 = vadd.f32 0.0, %v2214
        %2216 = vmatprep.mubr.f32.mxu0 0.0
        %2217 = vmatmul.mubr.f32.gmra.mxu0 %v2009
        %v2218 = vpop.f32.mrf.mxu0
        %v2219 = vadd.f32 0.0, %v2218
        %v2220 = vpop.f32.mrf.mxu0
        %v2221 = vadd.f32 0.0, %v2220
        %2222 = vmatprep.mubr.f32.mxu0 0.0
        %2223 = vmatmul.mubr.f32.gmra.mxu0 %v2012
        %v2224 = vpop.f32.mrf.mxu0
        %v2225 = vadd.f32 0.0, %v2224
        %v2226 = vpop.f32.mrf.mxu0
        %v2227 = vadd.f32 0.0, %v2226
        %2228 = vdwg.mxu0
        %v2229 = vadd.f32 %v1860, %v2087
        %v2230 = vadd.f32 %v1861, %v2089
        %v2231 = vadd.f32 %v1862, %v2093
        %v2232 = vadd.f32 %v1863, %v2095
        %v2233 = vadd.f32 %v1864, %v2099
        %v2234 = vadd.f32 %v1865, %v2101
        %v2235 = vadd.f32 %v1866, %v2105
        %v2236 = vadd.f32 %v1867, %v2107
        %v2237 = vadd.f32 %v1868, %v2111
        %v2238 = vadd.f32 %v1869, %v2113
        %v2239 = vadd.f32 %v1870, %v2117
        %v2240 = vadd.f32 %v1871, %v2119
        %v2241 = vadd.f32 %v1872, %v2123
        %v2242 = vadd.f32 %v1873, %v2125
        %v2243 = vadd.f32 %v1874, %v2129
        %v2244 = vadd.f32 %v1875, %v2131
        %v2245 = vadd.f32 %v1876, %v2135
        %v2246 = vadd.f32 %v1877, %v2137
        %v2247 = vadd.f32 %v1878, %v2141
        %v2248 = vadd.f32 %v1879, %v2143
        %v2249 = vadd.f32 %v1880, %v2147
        %v2250 = vadd.f32 %v1881, %v2149
        %v2251 = vadd.f32 %v1882, %v2153
        %v2252 = vadd.f32 %v1883, %v2155
        %v2253 = vadd.f32 %v1884, %v2159
        %v2254 = vadd.f32 %v1885, %v2161
        %v2255 = vadd.f32 %v1886, %v2165
        %v2256 = vadd.f32 %v1887, %v2167
        %v2257 = vadd.f32 %v1888, %v2171
        %v2258 = vadd.f32 %v1889, %v2173
        %v2259 = vadd.f32 %v1890, %v2177
        %v2260 = vadd.f32 %v1891, %v2179
        %v2261 = vadd.f32 %v1892, %v2183
        %v2262 = vadd.f32 %v1893, %v2185
        %v2263 = vadd.f32 %v1894, %v2189
        %v2264 = vadd.f32 %v1895, %v2191
        %v2265 = vadd.f32 %v1896, %v2195
        %v2266 = vadd.f32 %v1897, %v2197
        %v2267 = vadd.f32 %v1898, %v2201
        %v2268 = vadd.f32 %v1899, %v2203
        %v2269 = vadd.f32 %v1900, %v2207
        %v2270 = vadd.f32 %v1901, %v2209
        %v2271 = vadd.f32 %v1902, %v2213
        %v2272 = vadd.f32 %v1903, %v2215
        %v2273 = vadd.f32 %v1904, %v2219
        %v2274 = vadd.f32 %v1905, %v2221
        %v2275 = vadd.f32 %v1906, %v2225
        %v2276 = vadd.f32 %v1907, %v2227
        %v2277 = vld [vmem:[%s2] sm:$0x3]
        %v2279 = vlaneseq
        %v2280 = vshrl.u32 %v2279, 7
        %v2281 = vsub.s32 0, %v2280
        %v2282 = vrot.slane %v2277, %v2281
        %v2283 = vlaneseq
        %v2284 = vshrl.u32 %v2283, 7
        %v2285 = vsub.s32 1, %v2284
        %v2286 = vrot.slane %v2277, %v2285
        %v2289 = vadd.f32 %v2229, %v2282
        %v2290 = vadd.f32 %v2230, %v2286
        %v2291 = vadd.f32 %v2231, %v2282
        %v2292 = vadd.f32 %v2232, %v2286
        %v2293 = vadd.f32 %v2233, %v2282
        %v2294 = vadd.f32 %v2234, %v2286
        %v2295 = vadd.f32 %v2235, %v2282
        %v2296 = vadd.f32 %v2236, %v2286
        %v2297 = vadd.f32 %v2237, %v2282
        %v2298 = vadd.f32 %v2238, %v2286
        %v2299 = vadd.f32 %v2239, %v2282
        %v2300 = vadd.f32 %v2240, %v2286
        %v2301 = vadd.f32 %v2241, %v2282
        %v2302 = vadd.f32 %v2242, %v2286
        %v2303 = vadd.f32 %v2243, %v2282
        %v2304 = vadd.f32 %v2244, %v2286
        %v2305 = vadd.f32 %v2245, %v2282
        %v2306 = vadd.f32 %v2246, %v2286
        %v2307 = vadd.f32 %v2247, %v2282
        %v2308 = vadd.f32 %v2248, %v2286
        %v2309 = vadd.f32 %v2249, %v2282
        %v2310 = vadd.f32 %v2250, %v2286
        %v2311 = vadd.f32 %v2251, %v2282
        %v2312 = vadd.f32 %v2252, %v2286
        %v2313 = vadd.f32 %v2253, %v2282
        %v2314 = vadd.f32 %v2254, %v2286
        %v2315 = vadd.f32 %v2255, %v2282
        %v2316 = vadd.f32 %v2256, %v2286
        %v2317 = vadd.f32 %v2257, %v2282
        %v2318 = vadd.f32 %v2258, %v2286
        %v2319 = vadd.f32 %v2259, %v2282
        %v2320 = vadd.f32 %v2260, %v2286
        %v2321 = vadd.f32 %v2261, %v2282
        %v2322 = vadd.f32 %v2262, %v2286
        %v2323 = vadd.f32 %v2263, %v2282
        %v2324 = vadd.f32 %v2264, %v2286
        %v2325 = vadd.f32 %v2265, %v2282
        %v2326 = vadd.f32 %v2266, %v2286
        %v2327 = vadd.f32 %v2267, %v2282
        %v2328 = vadd.f32 %v2268, %v2286
        %v2329 = vadd.f32 %v2269, %v2282
        %v2330 = vadd.f32 %v2270, %v2286
        %v2331 = vadd.f32 %v2271, %v2282
        %v2332 = vadd.f32 %v2272, %v2286
        %v2333 = vadd.f32 %v2273, %v2282
        %v2334 = vadd.f32 %v2274, %v2286
        %v2335 = vadd.f32 %v2275, %v2282
        %v2336 = vadd.f32 %v2276, %v2286
        %v2337 = vmax.f32 %v2289, 0.0
        %v2338 = vmax.f32 %v2290, 0.0
        %v2339 = vmax.f32 %v2291, 0.0
        %v2340 = vmax.f32 %v2292, 0.0
        %v2341 = vmax.f32 %v2293, 0.0
        %v2342 = vmax.f32 %v2294, 0.0
        %v2343 = vmax.f32 %v2295, 0.0
        %v2344 = vmax.f32 %v2296, 0.0
        %v2345 = vmax.f32 %v2297, 0.0
        %v2346 = vmax.f32 %v2298, 0.0
        %v2347 = vmax.f32 %v2299, 0.0
        %v2348 = vmax.f32 %v2300, 0.0
        %v2349 = vmax.f32 %v2301, 0.0
        %v2350 = vmax.f32 %v2302, 0.0
        %v2351 = vmax.f32 %v2303, 0.0
        %v2352 = vmax.f32 %v2304, 0.0
        %v2353 = vmax.f32 %v2305, 0.0
        %v2354 = vmax.f32 %v2306, 0.0
        %v2355 = vmax.f32 %v2307, 0.0
        %v2356 = vmax.f32 %v2308, 0.0
        %v2357 = vmax.f32 %v2309, 0.0
        %v2358 = vmax.f32 %v2310, 0.0
        %v2359 = vmax.f32 %v2311, 0.0
        %v2360 = vmax.f32 %v2312, 0.0
        %v2361 = vmax.f32 %v2313, 0.0
        %v2362 = vmax.f32 %v2314, 0.0
        %v2363 = vmax.f32 %v2315, 0.0
        %v2364 = vmax.f32 %v2316, 0.0
        %v2365 = vmax.f32 %v2317, 0.0
        %v2366 = vmax.f32 %v2318, 0.0
        %v2367 = vmax.f32 %v2319, 0.0
        %v2368 = vmax.f32 %v2320, 0.0
        %v2369 = vmax.f32 %v2321, 0.0
        %v2370 = vmax.f32 %v2322, 0.0
        %v2371 = vmax.f32 %v2323, 0.0
        %v2372 = vmax.f32 %v2324, 0.0
        %v2373 = vmax.f32 %v2325, 0.0
        %v2374 = vmax.f32 %v2326, 0.0
        %v2375 = vmax.f32 %v2327, 0.0
        %v2376 = vmax.f32 %v2328, 0.0
        %v2377 = vmax.f32 %v2329, 0.0
        %v2378 = vmax.f32 %v2330, 0.0
        %v2379 = vmax.f32 %v2331, 0.0
        %v2380 = vmax.f32 %v2332, 0.0
        %v2381 = vmax.f32 %v2333, 0.0
        %v2382 = vmax.f32 %v2334, 0.0
        %v2383 = vmax.f32 %v2335, 0.0
        %v2384 = vmax.f32 %v2336, 0.0
        %v2385 = vmax.f32 %v2337, %v2338
        %v2386 = vmax.f32 %v2339, %v2340
        %v2387 = vmax.f32 %v2341, %v2342
        %v2388 = vmax.f32 %v2343, %v2344
        %v2389 = vmax.f32 %v2345, %v2346
        %v2390 = vmax.f32 %v2347, %v2348
        %v2391 = vmax.f32 %v2349, %v2350
        %v2392 = vmax.f32 %v2351, %v2352
        %v2393 = vmax.f32 %v2353, %v2354
        %v2394 = vmax.f32 %v2355, %v2356
        %v2395 = vmax.f32 %v2357, %v2358
        %v2396 = vmax.f32 %v2359, %v2360
        %v2397 = vmax.f32 %v2361, %v2362
        %v2398 = vmax.f32 %v2363, %v2364
        %v2399 = vmax.f32 %v2365, %v2366
        %v2400 = vmax.f32 %v2367, %v2368
        %v2401 = vmax.f32 %v2369, %v2370
        %v2402 = vmax.f32 %v2371, %v2372
        %v2403 = vmax.f32 %v2373, %v2374
        %v2404 = vmax.f32 %v2375, %v2376
        %v2405 = vmax.f32 %v2377, %v2378
        %v2406 = vmax.f32 %v2379, %v2380
        %v2407 = vmax.f32 %v2381, %v2382
        %v2408 = vmax.f32 %v2383, %v2384
        %v2409 = vmax.f32 %v2385, %v2386
        %v2410 = vmax.f32 %v2387, %v2388
        %v2411 = vmax.f32 %v2389, %v2390
        %v2412 = vmax.f32 %v2391, %v2392
        %v2413 = vmax.f32 %v2393, %v2394
        %v2414 = vmax.f32 %v2395, %v2396
        %v2415 = vmax.f32 %v2397, %v2398
        %v2416 = vmax.f32 %v2399, %v2400
        %v2417 = vmax.f32 %v2401, %v2402
        %v2418 = vmax.f32 %v2403, %v2404
        %v2419 = vmax.f32 %v2405, %v2406
        %v2420 = vmax.f32 %v2407, %v2408
        %vm2421 = vcmask 588800
        %2422 = vst.msk [vmem:[#allocation2] sm:$0xff] %vm2421, %v2409
        %2423 = vst.msk [vmem:[#allocation2 + $0x8] sm:$0xff] %vm2421, %v2410
        %2424 = vst.msk [vmem:[#allocation2 + $0x10] sm:$0xff] %vm2421, %v2411
        %2425 = vst.msk [vmem:[#allocation2 + $0x18] sm:$0xff] %vm2421, %v2412
        %2426 = vst.msk [vmem:[#allocation2 + $0x20] sm:$0xff] %vm2421, %v2413
        %2427 = vst.msk [vmem:[#allocation2 + $0x28] sm:$0xff] %vm2421, %v2414
        %2428 = vst.msk [vmem:[#allocation2 + $0x30] sm:$0xff] %vm2421, %v2415
        %2429 = vst.msk [vmem:[#allocation2 + $0x38] sm:$0xff] %vm2421, %v2416
        %2430 = vst.msk [vmem:[#allocation2 + $0x40] sm:$0xff] %vm2421, %v2417
        %2431 = vst.msk [vmem:[#allocation2 + $0x48] sm:$0xff] %vm2421, %v2418
        %2432 = vst.msk [vmem:[#allocation2 + $0x50] sm:$0xff] %vm2421, %v2419
        %2433 = vst.msk [vmem:[#allocation2 + $0x58] sm:$0xff] %vm2421, %v2420
        %v2434 = vld [vmem:[#allocation2] sm:$0xff]
        %v2435 = vld [vmem:[#allocation2 + $0x8] sm:$0xff]
        %v2436 = vld [vmem:[#allocation2 + $0x10] sm:$0xff]
        %v2437 = vld [vmem:[#allocation2 + $0x18] sm:$0xff]
        %v2438 = vld [vmem:[#allocation2 + $0x20] sm:$0xff]
        %v2439 = vld [vmem:[#allocation2 + $0x28] sm:$0xff]
        %v2440 = vld [vmem:[#allocation2 + $0x30] sm:$0xff]
        %v2441 = vld [vmem:[#allocation2 + $0x38] sm:$0xff]
        %v2442 = vld [vmem:[%s3] sm:$0xff]
        %v2443 = vld [vmem:[%s3 + $0x8] sm:$0xff]
        %v2444 = vld [vmem:[%s3 + $0x10] sm:$0xff]
        %v2445 = vld [vmem:[%s3 + $0x18] sm:$0xff]
        %v2446 = vld [vmem:[%s3 + $0x20] sm:$0xff]
        %v2447 = vld [vmem:[%s3 + $0x28] sm:$0xff]
        %v2448 = vld [vmem:[%s3 + $0x30] sm:$0xff]
        %v2449 = vld [vmem:[%s3 + $0x38] sm:$0xff]
        %v2450 = vld [vmem:[%s3 + $0x40] sm:$0xff]
        %v2451 = vld [vmem:[%s3 + $0x48] sm:$0xff]
        %v2452 = vld [vmem:[%s3 + $0x50] sm:$0xff]
        %v2453 = vld [vmem:[%s3 + $0x58] sm:$0xff]
        %v2454 = vld [vmem:[%s3 + $0x60] sm:$0xff]
        %v2455 = vld [vmem:[%s3 + $0x68] sm:$0xff]
        %v2456 = vld [vmem:[%s3 + $0x70] sm:$0xff]
        %v2457 = vld [vmem:[%s3 + $0x78] sm:$0xff]
        %v2458 = vld [vmem:[%s3 + $0x80] sm:$0xff]
        %v2459 = vld [vmem:[%s3 + $0x88] sm:$0xff]
        %s2460 = scalar_lea.vmem [#allocation2], 8
        %v2461 = vld [vmem:[%s2460] sm:$0xff]
        %v2462 = vld [vmem:[%s2460 + $0x8] sm:$0xff]
        %v2463 = vld [vmem:[%s2460 + $0x10] sm:$0xff]
        %v2464 = vld [vmem:[%s2460 + $0x18] sm:$0xff]
        %v2465 = vld [vmem:[%s2460 + $0x20] sm:$0xff]
        %v2466 = vld [vmem:[%s2460 + $0x28] sm:$0xff]
        %v2467 = vld [vmem:[%s2460 + $0x30] sm:$0xff]
        %v2468 = vld [vmem:[%s2460 + $0x38] sm:$0xff]
        %s2469 = scalar_lea.vmem %s3, 144
        %v2470 = vld [vmem:[%s2469] sm:$0xff]
        %v2471 = vld [vmem:[%s2469 + $0x8] sm:$0xff]
        %v2472 = vld [vmem:[%s2469 + $0x10] sm:$0xff]
        %v2473 = vld [vmem:[%s2469 + $0x18] sm:$0xff]
        %v2474 = vld [vmem:[%s2469 + $0x20] sm:$0xff]
        %v2475 = vld [vmem:[%s2469 + $0x28] sm:$0xff]
        %v2476 = vld [vmem:[%s2469 + $0x30] sm:$0xff]
        %v2477 = vld [vmem:[%s2469 + $0x38] sm:$0xff]
        %v2478 = vld [vmem:[%s2469 + $0x40] sm:$0xff]
        %v2479 = vld [vmem:[%s2469 + $0x48] sm:$0xff]
        %v2480 = vld [vmem:[%s2469 + $0x50] sm:$0xff]
        %v2481 = vld [vmem:[%s2469 + $0x58] sm:$0xff]
        %v2482 = vld [vmem:[%s2469 + $0x60] sm:$0xff]
        %v2483 = vld [vmem:[%s2469 + $0x68] sm:$0xff]
        %v2484 = vld [vmem:[%s2469 + $0x70] sm:$0xff]
        %v2485 = vld [vmem:[%s2469 + $0x78] sm:$0xff]
        %v2486 = vld [vmem:[%s2469 + $0x80] sm:$0xff]
        %v2487 = vld [vmem:[%s2469 + $0x88] sm:$0xff]
        %v2489 = vsel %vm2421, %v2461, 0
        %v2492 = vsel %vm2421, %v2462, 0
        %v2495 = vsel %vm2421, %v2463, 0
        %v2498 = vsel %vm2421, %v2464, 0
        %v2501 = vsel %vm2421, %v2465, 0
        %v2504 = vsel %vm2421, %v2466, 0
        %v2507 = vsel %vm2421, %v2467, 0
        %v2510 = vsel %vm2421, %v2468, 0
        %2512 = vmatprep.subr.mxu0 0.0
        %2513 = vmatpush1.msra.mxu0 0.0
        %2514 = vmatprep.subr.mxu0 0.0
        %2515 = vmatpush1.msra.mxu0 0.0
        %2516 = vmatprep.subr.mxu0 0.0
        %2517 = vmatpush1.msra.mxu0 0.0
        %2518 = vmatprep.subr.mxu0 0.0
        %2519 = vmatpush1.msra.mxu0 0.0
        %2520 = vmatprep.subr.mxu0 0.0
        %2521 = vmatpush1.msra.mxu0 0.0
        %2522 = vmatprep.subr.mxu0 0.0
        %2523 = vmatpush1.msra.mxu0 0.0
        %2524 = vmatprep.subr.mxu0 0.0
        %2525 = vmatpush1.msra.mxu0 0.0
        %2526 = vmatprep.subr.mxu0 %v2487
        %2527 = vmatpush1.msra.mxu0 %v2486
        %2528 = vmatprep.subr.mxu0 %v2485
        %2529 = vmatpush1.msra.mxu0 %v2484
        %2530 = vmatprep.subr.mxu0 %v2483
        %2531 = vmatpush1.msra.mxu0 %v2482
        %2532 = vmatprep.subr.mxu0 %v2481
        %2533 = vmatpush1.msra.mxu0 %v2480
        %2534 = vmatprep.subr.mxu0 %v2479
        %2535 = vmatpush1.msra.mxu0 %v2478
        %2536 = vmatprep.subr.mxu0 %v2477
        %2537 = vmatpush1.msra.mxu0 %v2476
        %2538 = vmatprep.subr.mxu0 %v2475
        %2539 = vmatpush1.msra.mxu0 %v2474
        %2540 = vmatprep.subr.mxu0 %v2473
        %2541 = vmatpush1.msra.mxu0 %v2472
        %2542 = vmatprep.subr.mxu0 %v2471
        %2543 = vmatpush1.msra.mxu0 %v2470
        %2544 = vmatprep.subr.mxu0 0.0
        %2545 = vmatpush2.msra.mxu0 0.0
        %2546 = vmatprep.subr.mxu0 0.0
        %2547 = vmatpush2.msra.mxu0 0.0
        %2548 = vmatprep.subr.mxu0 0.0
        %2549 = vmatpush2.msra.mxu0 0.0
        %2550 = vmatprep.subr.mxu0 0.0
        %2551 = vmatpush2.msra.mxu0 0.0
        %2552 = vmatprep.subr.mxu0 0.0
        %2553 = vmatpush2.msra.mxu0 0.0
        %2554 = vmatprep.subr.mxu0 0.0
        %2555 = vmatpush2.msra.mxu0 0.0
        %2556 = vmatprep.subr.mxu0 0.0
        %2557 = vmatpush2.msra.mxu0 0.0
        %2558 = vmatprep.subr.mxu0 0.0
        %2559 = vmatpush2.msra.mxu0 0.0
        %2560 = vmatprep.subr.mxu0 0.0
        %2561 = vmatpush2.msra.mxu0 0.0
        %2562 = vmatprep.subr.mxu0 0.0
        %2563 = vmatpush2.msra.mxu0 0.0
        %2564 = vmatprep.subr.mxu0 0.0
        %2565 = vmatpush2.msra.mxu0 0.0
        %2566 = vmatprep.subr.mxu0 0.0
        %2567 = vmatpush2.msra.mxu0 0.0
        %2568 = vmatprep.subr.mxu0 0.0
        %2569 = vmatpush2.msra.mxu0 0.0
        %2570 = vmatprep.subr.mxu0 0.0
        %2571 = vmatpush2.msra.mxu0 0.0
        %2572 = vmatprep.subr.mxu0 0.0
        %2573 = vmatpush2.msra.mxu0 0.0
        %2574 = vmatprep.subr.mxu0 0.0
        %2575 = vmatpush2.msra.mxu0 0.0
        %2576 = vmatprep.mubr.f32.mxu0 0.0
        %2577 = vmatmul.mubr.f32.gmra.mxu0 %v2489
        %v2578 = vpop.f32.mrf.mxu0
        %v2579 = vadd.f32 0.0, %v2578
        %v2580 = vpop.f32.mrf.mxu0
        %v2581 = vadd.f32 0.0, %v2580
        %2582 = vmatprep.mubr.f32.mxu0 0.0
        %2583 = vmatmul.mubr.f32.gmra.mxu0 %v2492
        %v2584 = vpop.f32.mrf.mxu0
        %v2585 = vadd.f32 0.0, %v2584
        %v2586 = vpop.f32.mrf.mxu0
        %v2587 = vadd.f32 0.0, %v2586
        %2588 = vmatprep.mubr.f32.mxu0 0.0
        %2589 = vmatmul.mubr.f32.gmra.mxu0 %v2495
        %v2590 = vpop.f32.mrf.mxu0
        %v2591 = vadd.f32 0.0, %v2590
        %v2592 = vpop.f32.mrf.mxu0
        %v2593 = vadd.f32 0.0, %v2592
        %2594 = vmatprep.mubr.f32.mxu0 0.0
        %2595 = vmatmul.mubr.f32.gmra.mxu0 %v2498
        %v2596 = vpop.f32.mrf.mxu0
        %v2597 = vadd.f32 0.0, %v2596
        %v2598 = vpop.f32.mrf.mxu0
        %v2599 = vadd.f32 0.0, %v2598
        %2600 = vmatprep.mubr.f32.mxu0 0.0
        %2601 = vmatmul.mubr.f32.gmra.mxu0 %v2501
        %v2602 = vpop.f32.mrf.mxu0
        %v2603 = vadd.f32 0.0, %v2602
        %v2604 = vpop.f32.mrf.mxu0
        %v2605 = vadd.f32 0.0, %v2604
        %2606 = vmatprep.mubr.f32.mxu0 0.0
        %2607 = vmatmul.mubr.f32.gmra.mxu0 %v2504
        %v2608 = vpop.f32.mrf.mxu0
        %v2609 = vadd.f32 0.0, %v2608
        %v2610 = vpop.f32.mrf.mxu0
        %v2611 = vadd.f32 0.0, %v2610
        %2612 = vmatprep.mubr.f32.mxu0 0.0
        %2613 = vmatmul.mubr.f32.gmra.mxu0 %v2507
        %v2614 = vpop.f32.mrf.mxu0
        %v2615 = vadd.f32 0.0, %v2614
        %v2616 = vpop.f32.mrf.mxu0
        %v2617 = vadd.f32 0.0, %v2616
        %2618 = vmatprep.mubr.f32.mxu0 0.0
        %2619 = vmatmul.mubr.f32.gmra.mxu0 %v2510
        %v2620 = vpop.f32.mrf.mxu0
        %v2621 = vadd.f32 0.0, %v2620
        %v2622 = vpop.f32.mrf.mxu0
        %v2623 = vadd.f32 0.0, %v2622
        %2624 = vdwg.mxu0
        %v2626 = vsel %vm2421, %v2434, 0
        %v2629 = vsel %vm2421, %v2435, 0
        %v2632 = vsel %vm2421, %v2436, 0
        %v2635 = vsel %vm2421, %v2437, 0
        %v2638 = vsel %vm2421, %v2438, 0
        %v2641 = vsel %vm2421, %v2439, 0
        %v2644 = vsel %vm2421, %v2440, 0
        %v2647 = vsel %vm2421, %v2441, 0
        %2649 = vmatprep.subr.mxu0 0.0
        %2650 = vmatpush1.msra.mxu0 0.0
        %2651 = vmatprep.subr.mxu0 0.0
        %2652 = vmatpush1.msra.mxu0 0.0
        %2653 = vmatprep.subr.mxu0 0.0
        %2654 = vmatpush1.msra.mxu0 0.0
        %2655 = vmatprep.subr.mxu0 0.0
        %2656 = vmatpush1.msra.mxu0 0.0
        %2657 = vmatprep.subr.mxu0 0.0
        %2658 = vmatpush1.msra.mxu0 0.0
        %2659 = vmatprep.subr.mxu0 0.0
        %2660 = vmatpush1.msra.mxu0 0.0
        %2661 = vmatprep.subr.mxu0 0.0
        %2662 = vmatpush1.msra.mxu0 0.0
        %2663 = vmatprep.subr.mxu0 %v2459
        %2664 = vmatpush1.msra.mxu0 %v2458
        %2665 = vmatprep.subr.mxu0 %v2457
        %2666 = vmatpush1.msra.mxu0 %v2456
        %2667 = vmatprep.subr.mxu0 %v2455
        %2668 = vmatpush1.msra.mxu0 %v2454
        %2669 = vmatprep.subr.mxu0 %v2453
        %2670 = vmatpush1.msra.mxu0 %v2452
        %2671 = vmatprep.subr.mxu0 %v2451
        %2672 = vmatpush1.msra.mxu0 %v2450
        %2673 = vmatprep.subr.mxu0 %v2449
        %2674 = vmatpush1.msra.mxu0 %v2448
        %2675 = vmatprep.subr.mxu0 %v2447
        %2676 = vmatpush1.msra.mxu0 %v2446
        %2677 = vmatprep.subr.mxu0 %v2445
        %2678 = vmatpush1.msra.mxu0 %v2444
        %2679 = vmatprep.subr.mxu0 %v2443
        %2680 = vmatpush1.msra.mxu0 %v2442
        %2681 = vmatprep.subr.mxu0 0.0
        %2682 = vmatpush2.msra.mxu0 0.0
        %2683 = vmatprep.subr.mxu0 0.0
        %2684 = vmatpush2.msra.mxu0 0.0
        %2685 = vmatprep.subr.mxu0 0.0
        %2686 = vmatpush2.msra.mxu0 0.0
        %2687 = vmatprep.subr.mxu0 0.0
        %2688 = vmatpush2.msra.mxu0 0.0
        %2689 = vmatprep.subr.mxu0 0.0
        %2690 = vmatpush2.msra.mxu0 0.0
        %2691 = vmatprep.subr.mxu0 0.0
        %2692 = vmatpush2.msra.mxu0 0.0
        %2693 = vmatprep.subr.mxu0 0.0
        %2694 = vmatpush2.msra.mxu0 0.0
        %2695 = vmatprep.subr.mxu0 0.0
        %2696 = vmatpush2.msra.mxu0 0.0
        %2697 = vmatprep.subr.mxu0 0.0
        %2698 = vmatpush2.msra.mxu0 0.0
        %2699 = vmatprep.subr.mxu0 0.0
        %2700 = vmatpush2.msra.mxu0 0.0
        %2701 = vmatprep.subr.mxu0 0.0
        %2702 = vmatpush2.msra.mxu0 0.0
        %2703 = vmatprep.subr.mxu0 0.0
        %2704 = vmatpush2.msra.mxu0 0.0
        %2705 = vmatprep.subr.mxu0 0.0
        %2706 = vmatpush2.msra.mxu0 0.0
        %2707 = vmatprep.subr.mxu0 0.0
        %2708 = vmatpush2.msra.mxu0 0.0
        %2709 = vmatprep.subr.mxu0 0.0
        %2710 = vmatpush2.msra.mxu0 0.0
        %2711 = vmatprep.subr.mxu0 0.0
        %2712 = vmatpush2.msra.mxu0 0.0
        %2713 = vmatprep.mubr.f32.mxu0 0.0
        %2714 = vmatmul.mubr.f32.gmra.mxu0 %v2626
        %v2715 = vpop.f32.mrf.mxu0
        %v2716 = vadd.f32 %v2579, %v2715
        %v2717 = vpop.f32.mrf.mxu0
        %v2718 = vadd.f32 %v2581, %v2717
        %2719 = vmatprep.mubr.f32.mxu0 0.0
        %2720 = vmatmul.mubr.f32.gmra.mxu0 %v2629
        %v2721 = vpop.f32.mrf.mxu0
        %v2722 = vadd.f32 %v2585, %v2721
        %v2723 = vpop.f32.mrf.mxu0
        %v2724 = vadd.f32 %v2587, %v2723
        %2725 = vmatprep.mubr.f32.mxu0 0.0
        %2726 = vmatmul.mubr.f32.gmra.mxu0 %v2632
        %v2727 = vpop.f32.mrf.mxu0
        %v2728 = vadd.f32 %v2591, %v2727
        %v2729 = vpop.f32.mrf.mxu0
        %v2730 = vadd.f32 %v2593, %v2729
        %2731 = vmatprep.mubr.f32.mxu0 0.0
        %2732 = vmatmul.mubr.f32.gmra.mxu0 %v2635
        %v2733 = vpop.f32.mrf.mxu0
        %v2734 = vadd.f32 %v2597, %v2733
        %v2735 = vpop.f32.mrf.mxu0
        %v2736 = vadd.f32 %v2599, %v2735
        %2737 = vmatprep.mubr.f32.mxu0 0.0
        %2738 = vmatmul.mubr.f32.gmra.mxu0 %v2638
        %v2739 = vpop.f32.mrf.mxu0
        %v2740 = vadd.f32 %v2603, %v2739
        %v2741 = vpop.f32.mrf.mxu0
        %v2742 = vadd.f32 %v2605, %v2741
        %2743 = vmatprep.mubr.f32.mxu0 0.0
        %2744 = vmatmul.mubr.f32.gmra.mxu0 %v2641
        %v2745 = vpop.f32.mrf.mxu0
        %v2746 = vadd.f32 %v2609, %v2745
        %v2747 = vpop.f32.mrf.mxu0
        %v2748 = vadd.f32 %v2611, %v2747
        %2749 = vmatprep.mubr.f32.mxu0 0.0
        %2750 = vmatmul.mubr.f32.gmra.mxu0 %v2644
        %v2751 = vpop.f32.mrf.mxu0
        %v2752 = vadd.f32 %v2615, %v2751
        %v2753 = vpop.f32.mrf.mxu0
        %v2754 = vadd.f32 %v2617, %v2753
        %2755 = vmatprep.mubr.f32.mxu0 0.0
        %2756 = vmatmul.mubr.f32.gmra.mxu0 %v2647
        %v2757 = vpop.f32.mrf.mxu0
        %v2758 = vadd.f32 %v2621, %v2757
        %v2759 = vpop.f32.mrf.mxu0
        %v2760 = vadd.f32 %v2623, %v2759
        %2761 = vdwg.mxu0
        %s2762 = scalar_lea.vmem [#allocation2], 16
        %v2763 = vld [vmem:[%s2762] sm:$0xff]
        %v2764 = vld [vmem:[%s2762 + $0x8] sm:$0xff]
        %v2765 = vld [vmem:[%s2762 + $0x10] sm:$0xff]
        %v2766 = vld [vmem:[%s2762 + $0x18] sm:$0xff]
        %v2767 = vld [vmem:[%s2762 + $0x20] sm:$0xff]
        %v2768 = vld [vmem:[%s2762 + $0x28] sm:$0xff]
        %v2769 = vld [vmem:[%s2762 + $0x30] sm:$0xff]
        %v2770 = vld [vmem:[%s2762 + $0x38] sm:$0xff]
        %s2771 = scalar_lea.vmem %s3, 288
        %v2772 = vld [vmem:[%s2771] sm:$0xff]
        %v2773 = vld [vmem:[%s2771 + $0x8] sm:$0xff]
        %v2774 = vld [vmem:[%s2771 + $0x10] sm:$0xff]
        %v2775 = vld [vmem:[%s2771 + $0x18] sm:$0xff]
        %v2776 = vld [vmem:[%s2771 + $0x20] sm:$0xff]
        %v2777 = vld [vmem:[%s2771 + $0x28] sm:$0xff]
        %v2778 = vld [vmem:[%s2771 + $0x30] sm:$0xff]
        %v2779 = vld [vmem:[%s2771 + $0x38] sm:$0xff]
        %v2780 = vld [vmem:[%s2771 + $0x40] sm:$0xff]
        %v2781 = vld [vmem:[%s2771 + $0x48] sm:$0xff]
        %v2782 = vld [vmem:[%s2771 + $0x50] sm:$0xff]
        %v2783 = vld [vmem:[%s2771 + $0x58] sm:$0xff]
        %v2784 = vld [vmem:[%s2771 + $0x60] sm:$0xff]
        %v2785 = vld [vmem:[%s2771 + $0x68] sm:$0xff]
        %v2786 = vld [vmem:[%s2771 + $0x70] sm:$0xff]
        %v2787 = vld [vmem:[%s2771 + $0x78] sm:$0xff]
        %v2788 = vld [vmem:[%s2771 + $0x80] sm:$0xff]
        %v2789 = vld [vmem:[%s2771 + $0x88] sm:$0xff]
        %v2791 = vsel %vm2421, %v2763, 0
        %v2794 = vsel %vm2421, %v2764, 0
        %v2797 = vsel %vm2421, %v2765, 0
        %v2800 = vsel %vm2421, %v2766, 0
        %v2803 = vsel %vm2421, %v2767, 0
        %v2806 = vsel %vm2421, %v2768, 0
        %v2809 = vsel %vm2421, %v2769, 0
        %v2812 = vsel %vm2421, %v2770, 0
        %2814 = vmatprep.subr.mxu0 0.0
        %2815 = vmatpush1.msra.mxu0 0.0
        %2816 = vmatprep.subr.mxu0 0.0
        %2817 = vmatpush1.msra.mxu0 0.0
        %2818 = vmatprep.subr.mxu0 0.0
        %2819 = vmatpush1.msra.mxu0 0.0
        %2820 = vmatprep.subr.mxu0 0.0
        %2821 = vmatpush1.msra.mxu0 0.0
        %2822 = vmatprep.subr.mxu0 0.0
        %2823 = vmatpush1.msra.mxu0 0.0
        %2824 = vmatprep.subr.mxu0 0.0
        %2825 = vmatpush1.msra.mxu0 0.0
        %2826 = vmatprep.subr.mxu0 0.0
        %2827 = vmatpush1.msra.mxu0 0.0
        %2828 = vmatprep.subr.mxu0 %v2789
        %2829 = vmatpush1.msra.mxu0 %v2788
        %2830 = vmatprep.subr.mxu0 %v2787
        %2831 = vmatpush1.msra.mxu0 %v2786
        %2832 = vmatprep.subr.mxu0 %v2785
        %2833 = vmatpush1.msra.mxu0 %v2784
        %2834 = vmatprep.subr.mxu0 %v2783
        %2835 = vmatpush1.msra.mxu0 %v2782
        %2836 = vmatprep.subr.mxu0 %v2781
        %2837 = vmatpush1.msra.mxu0 %v2780
        %2838 = vmatprep.subr.mxu0 %v2779
        %2839 = vmatpush1.msra.mxu0 %v2778
        %2840 = vmatprep.subr.mxu0 %v2777
        %2841 = vmatpush1.msra.mxu0 %v2776
        %2842 = vmatprep.subr.mxu0 %v2775
        %2843 = vmatpush1.msra.mxu0 %v2774
        %2844 = vmatprep.subr.mxu0 %v2773
        %2845 = vmatpush1.msra.mxu0 %v2772
        %2846 = vmatprep.subr.mxu0 0.0
        %2847 = vmatpush2.msra.mxu0 0.0
        %2848 = vmatprep.subr.mxu0 0.0
        %2849 = vmatpush2.msra.mxu0 0.0
        %2850 = vmatprep.subr.mxu0 0.0
        %2851 = vmatpush2.msra.mxu0 0.0
        %2852 = vmatprep.subr.mxu0 0.0
        %2853 = vmatpush2.msra.mxu0 0.0
        %2854 = vmatprep.subr.mxu0 0.0
        %2855 = vmatpush2.msra.mxu0 0.0
        %2856 = vmatprep.subr.mxu0 0.0
        %2857 = vmatpush2.msra.mxu0 0.0
        %2858 = vmatprep.subr.mxu0 0.0
        %2859 = vmatpush2.msra.mxu0 0.0
        %2860 = vmatprep.subr.mxu0 0.0
        %2861 = vmatpush2.msra.mxu0 0.0
        %2862 = vmatprep.subr.mxu0 0.0
        %2863 = vmatpush2.msra.mxu0 0.0
        %2864 = vmatprep.subr.mxu0 0.0
        %2865 = vmatpush2.msra.mxu0 0.0
        %2866 = vmatprep.subr.mxu0 0.0
        %2867 = vmatpush2.msra.mxu0 0.0
        %2868 = vmatprep.subr.mxu0 0.0
        %2869 = vmatpush2.msra.mxu0 0.0
        %2870 = vmatprep.subr.mxu0 0.0
        %2871 = vmatpush2.msra.mxu0 0.0
        %2872 = vmatprep.subr.mxu0 0.0
        %2873 = vmatpush2.msra.mxu0 0.0
        %2874 = vmatprep.subr.mxu0 0.0
        %2875 = vmatpush2.msra.mxu0 0.0
        %2876 = vmatprep.subr.mxu0 0.0
        %2877 = vmatpush2.msra.mxu0 0.0
        %2878 = vmatprep.mubr.f32.mxu0 0.0
        %2879 = vmatmul.mubr.f32.gmra.mxu0 %v2791
        %v2880 = vpop.f32.mrf.mxu0
        %v2881 = vadd.f32 0.0, %v2880
        %v2882 = vpop.f32.mrf.mxu0
        %v2883 = vadd.f32 0.0, %v2882
        %2884 = vmatprep.mubr.f32.mxu0 0.0
        %2885 = vmatmul.mubr.f32.gmra.mxu0 %v2794
        %v2886 = vpop.f32.mrf.mxu0
        %v2887 = vadd.f32 0.0, %v2886
        %v2888 = vpop.f32.mrf.mxu0
        %v2889 = vadd.f32 0.0, %v2888
        %2890 = vmatprep.mubr.f32.mxu0 0.0
        %2891 = vmatmul.mubr.f32.gmra.mxu0 %v2797
        %v2892 = vpop.f32.mrf.mxu0
        %v2893 = vadd.f32 0.0, %v2892
        %v2894 = vpop.f32.mrf.mxu0
        %v2895 = vadd.f32 0.0, %v2894
        %2896 = vmatprep.mubr.f32.mxu0 0.0
        %2897 = vmatmul.mubr.f32.gmra.mxu0 %v2800
        %v2898 = vpop.f32.mrf.mxu0
        %v2899 = vadd.f32 0.0, %v2898
        %v2900 = vpop.f32.mrf.mxu0
        %v2901 = vadd.f32 0.0, %v2900
        %2902 = vmatprep.mubr.f32.mxu0 0.0
        %2903 = vmatmul.mubr.f32.gmra.mxu0 %v2803
        %v2904 = vpop.f32.mrf.mxu0
        %v2905 = vadd.f32 0.0, %v2904
        %v2906 = vpop.f32.mrf.mxu0
        %v2907 = vadd.f32 0.0, %v2906
        %2908 = vmatprep.mubr.f32.mxu0 0.0
        %2909 = vmatmul.mubr.f32.gmra.mxu0 %v2806
        %v2910 = vpop.f32.mrf.mxu0
        %v2911 = vadd.f32 0.0, %v2910
        %v2912 = vpop.f32.mrf.mxu0
        %v2913 = vadd.f32 0.0, %v2912
        %2914 = vmatprep.mubr.f32.mxu0 0.0
        %2915 = vmatmul.mubr.f32.gmra.mxu0 %v2809
        %v2916 = vpop.f32.mrf.mxu0
        %v2917 = vadd.f32 0.0, %v2916
        %v2918 = vpop.f32.mrf.mxu0
        %v2919 = vadd.f32 0.0, %v2918
        %2920 = vmatprep.mubr.f32.mxu0 0.0
        %2921 = vmatmul.mubr.f32.gmra.mxu0 %v2812
        %v2922 = vpop.f32.mrf.mxu0
        %v2923 = vadd.f32 0.0, %v2922
        %v2924 = vpop.f32.mrf.mxu0
        %v2925 = vadd.f32 0.0, %v2924
        %2926 = vdwg.mxu0
        %v2927 = vadd.f32 %v2716, %v2881
        %v2928 = vadd.f32 %v2718, %v2883
        %v2929 = vadd.f32 %v2722, %v2887
        %v2930 = vadd.f32 %v2724, %v2889
        %v2931 = vadd.f32 %v2728, %v2893
        %v2932 = vadd.f32 %v2730, %v2895
        %v2933 = vadd.f32 %v2734, %v2899
        %v2934 = vadd.f32 %v2736, %v2901
        %v2935 = vadd.f32 %v2740, %v2905
        %v2936 = vadd.f32 %v2742, %v2907
        %v2937 = vadd.f32 %v2746, %v2911
        %v2938 = vadd.f32 %v2748, %v2913
        %v2939 = vadd.f32 %v2752, %v2917
        %v2940 = vadd.f32 %v2754, %v2919
        %v2941 = vadd.f32 %v2758, %v2923
        %v2942 = vadd.f32 %v2760, %v2925
        %s2943 = scalar_lea.vmem [#allocation2], 24
        %v2944 = vld [vmem:[%s2943] sm:$0xff]
        %v2945 = vld [vmem:[%s2943 + $0x8] sm:$0xff]
        %v2946 = vld [vmem:[%s2943 + $0x10] sm:$0xff]
        %v2947 = vld [vmem:[%s2943 + $0x18] sm:$0xff]
        %v2948 = vld [vmem:[%s2943 + $0x20] sm:$0xff]
        %v2949 = vld [vmem:[%s2943 + $0x28] sm:$0xff]
        %v2950 = vld [vmem:[%s2943 + $0x30] sm:$0xff]
        %v2951 = vld [vmem:[%s2943 + $0x38] sm:$0xff]
        %s2952 = scalar_lea.vmem %s3, 432
        %v2953 = vld [vmem:[%s2952] sm:$0xff]
        %v2954 = vld [vmem:[%s2952 + $0x8] sm:$0xff]
        %v2955 = vld [vmem:[%s2952 + $0x10] sm:$0xff]
        %v2956 = vld [vmem:[%s2952 + $0x18] sm:$0xff]
        %v2957 = vld [vmem:[%s2952 + $0x20] sm:$0xff]
        %v2958 = vld [vmem:[%s2952 + $0x28] sm:$0xff]
        %v2959 = vld [vmem:[%s2952 + $0x30] sm:$0xff]
        %v2960 = vld [vmem:[%s2952 + $0x38] sm:$0xff]
        %v2961 = vld [vmem:[%s2952 + $0x40] sm:$0xff]
        %v2962 = vld [vmem:[%s2952 + $0x48] sm:$0xff]
        %v2963 = vld [vmem:[%s2952 + $0x50] sm:$0xff]
        %v2964 = vld [vmem:[%s2952 + $0x58] sm:$0xff]
        %v2965 = vld [vmem:[%s2952 + $0x60] sm:$0xff]
        %v2966 = vld [vmem:[%s2952 + $0x68] sm:$0xff]
        %v2967 = vld [vmem:[%s2952 + $0x70] sm:$0xff]
        %v2968 = vld [vmem:[%s2952 + $0x78] sm:$0xff]
        %v2969 = vld [vmem:[%s2952 + $0x80] sm:$0xff]
        %v2970 = vld [vmem:[%s2952 + $0x88] sm:$0xff]
        %v2972 = vsel %vm2421, %v2944, 0
        %v2975 = vsel %vm2421, %v2945, 0
        %v2978 = vsel %vm2421, %v2946, 0
        %v2981 = vsel %vm2421, %v2947, 0
        %v2984 = vsel %vm2421, %v2948, 0
        %v2987 = vsel %vm2421, %v2949, 0
        %v2990 = vsel %vm2421, %v2950, 0
        %v2993 = vsel %vm2421, %v2951, 0
        %2995 = vmatprep.subr.mxu0 0.0
        %2996 = vmatpush1.msra.mxu0 0.0
        %2997 = vmatprep.subr.mxu0 0.0
        %2998 = vmatpush1.msra.mxu0 0.0
        %2999 = vmatprep.subr.mxu0 0.0
        %3000 = vmatpush1.msra.mxu0 0.0
        %3001 = vmatprep.subr.mxu0 0.0
        %3002 = vmatpush1.msra.mxu0 0.0
        %3003 = vmatprep.subr.mxu0 0.0
        %3004 = vmatpush1.msra.mxu0 0.0
        %3005 = vmatprep.subr.mxu0 0.0
        %3006 = vmatpush1.msra.mxu0 0.0
        %3007 = vmatprep.subr.mxu0 0.0
        %3008 = vmatpush1.msra.mxu0 0.0
        %3009 = vmatprep.subr.mxu0 %v2970
        %3010 = vmatpush1.msra.mxu0 %v2969
        %3011 = vmatprep.subr.mxu0 %v2968
        %3012 = vmatpush1.msra.mxu0 %v2967
        %3013 = vmatprep.subr.mxu0 %v2966
        %3014 = vmatpush1.msra.mxu0 %v2965
        %3015 = vmatprep.subr.mxu0 %v2964
        %3016 = vmatpush1.msra.mxu0 %v2963
        %3017 = vmatprep.subr.mxu0 %v2962
        %3018 = vmatpush1.msra.mxu0 %v2961
        %3019 = vmatprep.subr.mxu0 %v2960
        %3020 = vmatpush1.msra.mxu0 %v2959
        %3021 = vmatprep.subr.mxu0 %v2958
        %3022 = vmatpush1.msra.mxu0 %v2957
        %3023 = vmatprep.subr.mxu0 %v2956
        %3024 = vmatpush1.msra.mxu0 %v2955
        %3025 = vmatprep.subr.mxu0 %v2954
        %3026 = vmatpush1.msra.mxu0 %v2953
        %3027 = vmatprep.subr.mxu0 0.0
        %3028 = vmatpush2.msra.mxu0 0.0
        %3029 = vmatprep.subr.mxu0 0.0
        %3030 = vmatpush2.msra.mxu0 0.0
        %3031 = vmatprep.subr.mxu0 0.0
        %3032 = vmatpush2.msra.mxu0 0.0
        %3033 = vmatprep.subr.mxu0 0.0
        %3034 = vmatpush2.msra.mxu0 0.0
        %3035 = vmatprep.subr.mxu0 0.0
        %3036 = vmatpush2.msra.mxu0 0.0
        %3037 = vmatprep.subr.mxu0 0.0
        %3038 = vmatpush2.msra.mxu0 0.0
        %3039 = vmatprep.subr.mxu0 0.0
        %3040 = vmatpush2.msra.mxu0 0.0
        %3041 = vmatprep.subr.mxu0 0.0
        %3042 = vmatpush2.msra.mxu0 0.0
        %3043 = vmatprep.subr.mxu0 0.0
        %3044 = vmatpush2.msra.mxu0 0.0
        %3045 = vmatprep.subr.mxu0 0.0
        %3046 = vmatpush2.msra.mxu0 0.0
        %3047 = vmatprep.subr.mxu0 0.0
        %3048 = vmatpush2.msra.mxu0 0.0
        %3049 = vmatprep.subr.mxu0 0.0
        %3050 = vmatpush2.msra.mxu0 0.0
        %3051 = vmatprep.subr.mxu0 0.0
        %3052 = vmatpush2.msra.mxu0 0.0
        %3053 = vmatprep.subr.mxu0 0.0
        %3054 = vmatpush2.msra.mxu0 0.0
        %3055 = vmatprep.subr.mxu0 0.0
        %3056 = vmatpush2.msra.mxu0 0.0
        %3057 = vmatprep.subr.mxu0 0.0
        %3058 = vmatpush2.msra.mxu0 0.0
        %3059 = vmatprep.mubr.f32.mxu0 0.0
        %3060 = vmatmul.mubr.f32.gmra.mxu0 %v2972
        %v3061 = vpop.f32.mrf.mxu0
        %v3062 = vadd.f32 0.0, %v3061
        %v3063 = vpop.f32.mrf.mxu0
        %v3064 = vadd.f32 0.0, %v3063
        %3065 = vmatprep.mubr.f32.mxu0 0.0
        %3066 = vmatmul.mubr.f32.gmra.mxu0 %v2975
        %v3067 = vpop.f32.mrf.mxu0
        %v3068 = vadd.f32 0.0, %v3067
        %v3069 = vpop.f32.mrf.mxu0
        %v3070 = vadd.f32 0.0, %v3069
        %3071 = vmatprep.mubr.f32.mxu0 0.0
        %3072 = vmatmul.mubr.f32.gmra.mxu0 %v2978
        %v3073 = vpop.f32.mrf.mxu0
        %v3074 = vadd.f32 0.0, %v3073
        %v3075 = vpop.f32.mrf.mxu0
        %v3076 = vadd.f32 0.0, %v3075
        %3077 = vmatprep.mubr.f32.mxu0 0.0
        %3078 = vmatmul.mubr.f32.gmra.mxu0 %v2981
        %v3079 = vpop.f32.mrf.mxu0
        %v3080 = vadd.f32 0.0, %v3079
        %v3081 = vpop.f32.mrf.mxu0
        %v3082 = vadd.f32 0.0, %v3081
        %3083 = vmatprep.mubr.f32.mxu0 0.0
        %3084 = vmatmul.mubr.f32.gmra.mxu0 %v2984
        %v3085 = vpop.f32.mrf.mxu0
        %v3086 = vadd.f32 0.0, %v3085
        %v3087 = vpop.f32.mrf.mxu0
        %v3088 = vadd.f32 0.0, %v3087
        %3089 = vmatprep.mubr.f32.mxu0 0.0
        %3090 = vmatmul.mubr.f32.gmra.mxu0 %v2987
        %v3091 = vpop.f32.mrf.mxu0
        %v3092 = vadd.f32 0.0, %v3091
        %v3093 = vpop.f32.mrf.mxu0
        %v3094 = vadd.f32 0.0, %v3093
        %3095 = vmatprep.mubr.f32.mxu0 0.0
        %3096 = vmatmul.mubr.f32.gmra.mxu0 %v2990
        %v3097 = vpop.f32.mrf.mxu0
        %v3098 = vadd.f32 0.0, %v3097
        %v3099 = vpop.f32.mrf.mxu0
        %v3100 = vadd.f32 0.0, %v3099
        %3101 = vmatprep.mubr.f32.mxu0 0.0
        %3102 = vmatmul.mubr.f32.gmra.mxu0 %v2993
        %v3103 = vpop.f32.mrf.mxu0
        %v3104 = vadd.f32 0.0, %v3103
        %v3105 = vpop.f32.mrf.mxu0
        %v3106 = vadd.f32 0.0, %v3105
        %3107 = vdwg.mxu0
        %v3108 = vadd.f32 %v2927, %v3062
        %v3109 = vadd.f32 %v2928, %v3064
        %v3110 = vadd.f32 %v2929, %v3068
        %v3111 = vadd.f32 %v2930, %v3070
        %v3112 = vadd.f32 %v2931, %v3074
        %v3113 = vadd.f32 %v2932, %v3076
        %v3114 = vadd.f32 %v2933, %v3080
        %v3115 = vadd.f32 %v2934, %v3082
        %v3116 = vadd.f32 %v2935, %v3086
        %v3117 = vadd.f32 %v2936, %v3088
        %v3118 = vadd.f32 %v2937, %v3092
        %v3119 = vadd.f32 %v2938, %v3094
        %v3120 = vadd.f32 %v2939, %v3098
        %v3121 = vadd.f32 %v2940, %v3100
        %v3122 = vadd.f32 %v2941, %v3104
        %v3123 = vadd.f32 %v2942, %v3106
        %s3124 = scalar_lea.vmem [#allocation2], 32
        %v3125 = vld [vmem:[%s3124] sm:$0xff]
        %v3126 = vld [vmem:[%s3124 + $0x8] sm:$0xff]
        %v3127 = vld [vmem:[%s3124 + $0x10] sm:$0xff]
        %v3128 = vld [vmem:[%s3124 + $0x18] sm:$0xff]
        %v3129 = vld [vmem:[%s3124 + $0x20] sm:$0xff]
        %v3130 = vld [vmem:[%s3124 + $0x28] sm:$0xff]
        %v3131 = vld [vmem:[%s3124 + $0x30] sm:$0xff]
        %v3132 = vld [vmem:[%s3124 + $0x38] sm:$0xff]
        %s3133 = scalar_lea.vmem %s3, 576
        %v3134 = vld [vmem:[%s3133] sm:$0xff]
        %v3135 = vld [vmem:[%s3133 + $0x8] sm:$0xff]
        %v3136 = vld [vmem:[%s3133 + $0x10] sm:$0xff]
        %v3137 = vld [vmem:[%s3133 + $0x18] sm:$0xff]
        %v3138 = vld [vmem:[%s3133 + $0x20] sm:$0xff]
        %v3139 = vld [vmem:[%s3133 + $0x28] sm:$0xff]
        %v3140 = vld [vmem:[%s3133 + $0x30] sm:$0xff]
        %v3141 = vld [vmem:[%s3133 + $0x38] sm:$0xff]
        %v3142 = vld [vmem:[%s3133 + $0x40] sm:$0xff]
        %v3143 = vld [vmem:[%s3133 + $0x48] sm:$0xff]
        %v3144 = vld [vmem:[%s3133 + $0x50] sm:$0xff]
        %v3145 = vld [vmem:[%s3133 + $0x58] sm:$0xff]
        %v3146 = vld [vmem:[%s3133 + $0x60] sm:$0xff]
        %v3147 = vld [vmem:[%s3133 + $0x68] sm:$0xff]
        %v3148 = vld [vmem:[%s3133 + $0x70] sm:$0xff]
        %v3149 = vld [vmem:[%s3133 + $0x78] sm:$0xff]
        %v3150 = vld [vmem:[%s3133 + $0x80] sm:$0xff]
        %v3151 = vld [vmem:[%s3133 + $0x88] sm:$0xff]
        %v3153 = vsel %vm2421, %v3125, 0
        %v3156 = vsel %vm2421, %v3126, 0
        %v3159 = vsel %vm2421, %v3127, 0
        %v3162 = vsel %vm2421, %v3128, 0
        %v3165 = vsel %vm2421, %v3129, 0
        %v3168 = vsel %vm2421, %v3130, 0
        %v3171 = vsel %vm2421, %v3131, 0
        %v3174 = vsel %vm2421, %v3132, 0
        %3176 = vmatprep.subr.mxu0 0.0
        %3177 = vmatpush1.msra.mxu0 0.0
        %3178 = vmatprep.subr.mxu0 0.0
        %3179 = vmatpush1.msra.mxu0 0.0
        %3180 = vmatprep.subr.mxu0 0.0
        %3181 = vmatpush1.msra.mxu0 0.0
        %3182 = vmatprep.subr.mxu0 0.0
        %3183 = vmatpush1.msra.mxu0 0.0
        %3184 = vmatprep.subr.mxu0 0.0
        %3185 = vmatpush1.msra.mxu0 0.0
        %3186 = vmatprep.subr.mxu0 0.0
        %3187 = vmatpush1.msra.mxu0 0.0
        %3188 = vmatprep.subr.mxu0 0.0
        %3189 = vmatpush1.msra.mxu0 0.0
        %3190 = vmatprep.subr.mxu0 %v3151
        %3191 = vmatpush1.msra.mxu0 %v3150
        %3192 = vmatprep.subr.mxu0 %v3149
        %3193 = vmatpush1.msra.mxu0 %v3148
        %3194 = vmatprep.subr.mxu0 %v3147
        %3195 = vmatpush1.msra.mxu0 %v3146
        %3196 = vmatprep.subr.mxu0 %v3145
        %3197 = vmatpush1.msra.mxu0 %v3144
        %3198 = vmatprep.subr.mxu0 %v3143
        %3199 = vmatpush1.msra.mxu0 %v3142
        %3200 = vmatprep.subr.mxu0 %v3141
        %3201 = vmatpush1.msra.mxu0 %v3140
        %3202 = vmatprep.subr.mxu0 %v3139
        %3203 = vmatpush1.msra.mxu0 %v3138
        %3204 = vmatprep.subr.mxu0 %v3137
        %3205 = vmatpush1.msra.mxu0 %v3136
        %3206 = vmatprep.subr.mxu0 %v3135
        %3207 = vmatpush1.msra.mxu0 %v3134
        %3208 = vmatprep.subr.mxu0 0.0
        %3209 = vmatpush2.msra.mxu0 0.0
        %3210 = vmatprep.subr.mxu0 0.0
        %3211 = vmatpush2.msra.mxu0 0.0
        %3212 = vmatprep.subr.mxu0 0.0
        %3213 = vmatpush2.msra.mxu0 0.0
        %3214 = vmatprep.subr.mxu0 0.0
        %3215 = vmatpush2.msra.mxu0 0.0
        %3216 = vmatprep.subr.mxu0 0.0
        %3217 = vmatpush2.msra.mxu0 0.0
        %3218 = vmatprep.subr.mxu0 0.0
        %3219 = vmatpush2.msra.mxu0 0.0
        %3220 = vmatprep.subr.mxu0 0.0
        %3221 = vmatpush2.msra.mxu0 0.0
        %3222 = vmatprep.subr.mxu0 0.0
        %3223 = vmatpush2.msra.mxu0 0.0
        %3224 = vmatprep.subr.mxu0 0.0
        %3225 = vmatpush2.msra.mxu0 0.0
        %3226 = vmatprep.subr.mxu0 0.0
        %3227 = vmatpush2.msra.mxu0 0.0
        %3228 = vmatprep.subr.mxu0 0.0
        %3229 = vmatpush2.msra.mxu0 0.0
        %3230 = vmatprep.subr.mxu0 0.0
        %3231 = vmatpush2.msra.mxu0 0.0
        %3232 = vmatprep.subr.mxu0 0.0
        %3233 = vmatpush2.msra.mxu0 0.0
        %3234 = vmatprep.subr.mxu0 0.0
        %3235 = vmatpush2.msra.mxu0 0.0
        %3236 = vmatprep.subr.mxu0 0.0
        %3237 = vmatpush2.msra.mxu0 0.0
        %3238 = vmatprep.subr.mxu0 0.0
        %3239 = vmatpush2.msra.mxu0 0.0
        %3240 = vmatprep.mubr.f32.mxu0 0.0
        %3241 = vmatmul.mubr.f32.gmra.mxu0 %v3153
        %v3242 = vpop.f32.mrf.mxu0
        %v3243 = vadd.f32 0.0, %v3242
        %v3244 = vpop.f32.mrf.mxu0
        %v3245 = vadd.f32 0.0, %v3244
        %3246 = vmatprep.mubr.f32.mxu0 0.0
        %3247 = vmatmul.mubr.f32.gmra.mxu0 %v3156
        %v3248 = vpop.f32.mrf.mxu0
        %v3249 = vadd.f32 0.0, %v3248
        %v3250 = vpop.f32.mrf.mxu0
        %v3251 = vadd.f32 0.0, %v3250
        %3252 = vmatprep.mubr.f32.mxu0 0.0
        %3253 = vmatmul.mubr.f32.gmra.mxu0 %v3159
        %v3254 = vpop.f32.mrf.mxu0
        %v3255 = vadd.f32 0.0, %v3254
        %v3256 = vpop.f32.mrf.mxu0
        %v3257 = vadd.f32 0.0, %v3256
        %3258 = vmatprep.mubr.f32.mxu0 0.0
        %3259 = vmatmul.mubr.f32.gmra.mxu0 %v3162
        %v3260 = vpop.f32.mrf.mxu0
        %v3261 = vadd.f32 0.0, %v3260
        %v3262 = vpop.f32.mrf.mxu0
        %v3263 = vadd.f32 0.0, %v3262
        %3264 = vmatprep.mubr.f32.mxu0 0.0
        %3265 = vmatmul.mubr.f32.gmra.mxu0 %v3165
        %v3266 = vpop.f32.mrf.mxu0
        %v3267 = vadd.f32 0.0, %v3266
        %v3268 = vpop.f32.mrf.mxu0
        %v3269 = vadd.f32 0.0, %v3268
        %3270 = vmatprep.mubr.f32.mxu0 0.0
        %3271 = vmatmul.mubr.f32.gmra.mxu0 %v3168
        %v3272 = vpop.f32.mrf.mxu0
        %v3273 = vadd.f32 0.0, %v3272
        %v3274 = vpop.f32.mrf.mxu0
        %v3275 = vadd.f32 0.0, %v3274
        %3276 = vmatprep.mubr.f32.mxu0 0.0
        %3277 = vmatmul.mubr.f32.gmra.mxu0 %v3171
        %v3278 = vpop.f32.mrf.mxu0
        %v3279 = vadd.f32 0.0, %v3278
        %v3280 = vpop.f32.mrf.mxu0
        %v3281 = vadd.f32 0.0, %v3280
        %3282 = vmatprep.mubr.f32.mxu0 0.0
        %3283 = vmatmul.mubr.f32.gmra.mxu0 %v3174
        %v3284 = vpop.f32.mrf.mxu0
        %v3285 = vadd.f32 0.0, %v3284
        %v3286 = vpop.f32.mrf.mxu0
        %v3287 = vadd.f32 0.0, %v3286
        %3288 = vdwg.mxu0
        %v3289 = vadd.f32 %v3108, %v3243
        %v3290 = vadd.f32 %v3109, %v3245
        %v3291 = vadd.f32 %v3110, %v3249
        %v3292 = vadd.f32 %v3111, %v3251
        %v3293 = vadd.f32 %v3112, %v3255
        %v3294 = vadd.f32 %v3113, %v3257
        %v3295 = vadd.f32 %v3114, %v3261
        %v3296 = vadd.f32 %v3115, %v3263
        %v3297 = vadd.f32 %v3116, %v3267
        %v3298 = vadd.f32 %v3117, %v3269
        %v3299 = vadd.f32 %v3118, %v3273
        %v3300 = vadd.f32 %v3119, %v3275
        %v3301 = vadd.f32 %v3120, %v3279
        %v3302 = vadd.f32 %v3121, %v3281
        %v3303 = vadd.f32 %v3122, %v3285
        %v3304 = vadd.f32 %v3123, %v3287
        %v3305 = vld [vmem:[%s4] sm:$0x3]
        %v3307 = vlaneseq
        %v3308 = vshrl.u32 %v3307, 7
        %v3309 = vsub.s32 0, %v3308
        %v3310 = vrot.slane %v3305, %v3309
        %v3311 = vlaneseq
        %v3312 = vshrl.u32 %v3311, 7
        %v3313 = vsub.s32 1, %v3312
        %v3314 = vrot.slane %v3305, %v3313
        %v3317 = vadd.f32 %v3289, %v3310
        %v3318 = vadd.f32 %v3290, %v3314
        %v3319 = vadd.f32 %v3291, %v3310
        %v3320 = vadd.f32 %v3292, %v3314
        %v3321 = vadd.f32 %v3293, %v3310
        %v3322 = vadd.f32 %v3294, %v3314
        %v3323 = vadd.f32 %v3295, %v3310
        %v3324 = vadd.f32 %v3296, %v3314
        %v3325 = vadd.f32 %v3297, %v3310
        %v3326 = vadd.f32 %v3298, %v3314
        %v3327 = vadd.f32 %v3299, %v3310
        %v3328 = vadd.f32 %v3300, %v3314
        %v3329 = vadd.f32 %v3301, %v3310
        %v3330 = vadd.f32 %v3302, %v3314
        %v3331 = vadd.f32 %v3303, %v3310
        %v3332 = vadd.f32 %v3304, %v3314
        %v3333 = vmax.f32 %v3317, 0.0
        %v3334 = vmax.f32 %v3318, 0.0
        %v3335 = vmax.f32 %v3319, 0.0
        %v3336 = vmax.f32 %v3320, 0.0
        %v3337 = vmax.f32 %v3321, 0.0
        %v3338 = vmax.f32 %v3322, 0.0
        %v3339 = vmax.f32 %v3323, 0.0
        %v3340 = vmax.f32 %v3324, 0.0
        %v3341 = vmax.f32 %v3325, 0.0
        %v3342 = vmax.f32 %v3326, 0.0
        %v3343 = vmax.f32 %v3327, 0.0
        %v3344 = vmax.f32 %v3328, 0.0
        %v3345 = vmax.f32 %v3329, 0.0
        %v3346 = vmax.f32 %v3330, 0.0
        %v3347 = vmax.f32 %v3331, 0.0
        %v3348 = vmax.f32 %v3332, 0.0
        %v3349 = vmax.f32 %v3333, %v3334
        %v3350 = vmax.f32 %v3335, %v3336
        %v3351 = vmax.f32 %v3337, %v3338
        %v3352 = vmax.f32 %v3339, %v3340
        %v3353 = vmax.f32 %v3341, %v3342
        %v3354 = vmax.f32 %v3343, %v3344
        %v3355 = vmax.f32 %v3345, %v3346
        %v3356 = vmax.f32 %v3347, %v3348
        %v3357 = vmax.f32 %v3349, %v3350
        %v3358 = vld [vmem:[%s5] sm:$0xff]
        %v3359 = vld [vmem:[%s5 + $0x8] sm:$0xff]
        %v3360 = vld [vmem:[%s5 + $0x10] sm:$0xff]
        %v3361 = vld [vmem:[%s5 + $0x18] sm:$0xff]
        %v3362 = vld [vmem:[%s5 + $0x20] sm:$0xff]
        %v3363 = vld [vmem:[%s5 + $0x28] sm:$0xff]
        %v3364 = vld [vmem:[%s5 + $0x30] sm:$0xff]
        %v3365 = vld [vmem:[%s5 + $0x38] sm:$0xff]
        %v3366 = vmax.f32 %v3351, %v3352
        %s3367 = scalar_lea.vmem %s5, 64
        %v3368 = vld [vmem:[%s3367] sm:$0xff]
        %v3369 = vld [vmem:[%s3367 + $0x8] sm:$0xff]
        %v3370 = vld [vmem:[%s3367 + $0x10] sm:$0xff]
        %v3371 = vld [vmem:[%s3367 + $0x18] sm:$0xff]
        %v3372 = vld [vmem:[%s3367 + $0x20] sm:$0xff]
        %v3373 = vld [vmem:[%s3367 + $0x28] sm:$0xff]
        %v3374 = vld [vmem:[%s3367 + $0x30] sm:$0xff]
        %v3375 = vld [vmem:[%s3367 + $0x38] sm:$0xff]
        %vm3376 = vcmask 523264
        %v3378 = vsel %vm3376, %v3366, 0
        %3380 = vmatprep.subr.mxu0 0.0
        %3381 = vmatpush1.msra.mxu0 0.0
        %3382 = vmatprep.subr.mxu0 0.0
        %3383 = vmatpush1.msra.mxu0 0.0
        %3384 = vmatprep.subr.mxu0 0.0
        %3385 = vmatpush1.msra.mxu0 0.0
        %3386 = vmatprep.subr.mxu0 0.0
        %3387 = vmatpush1.msra.mxu0 0.0
        %3388 = vmatprep.subr.mxu0 0.0
        %3389 = vmatpush1.msra.mxu0 0.0
        %3390 = vmatprep.subr.mxu0 0.0
        %3391 = vmatpush1.msra.mxu0 0.0
        %3392 = vmatprep.subr.mxu0 0.0
        %3393 = vmatpush1.msra.mxu0 0.0
        %3394 = vmatprep.subr.mxu0 0.0
        %3395 = vmatpush1.msra.mxu0 0.0
        %3396 = vmatprep.subr.mxu0 0.0
        %3397 = vmatpush1.msra.mxu0 %v3375
        %3398 = vmatprep.subr.mxu0 0.0
        %3399 = vmatpush1.msra.mxu0 %v3374
        %3400 = vmatprep.subr.mxu0 0.0
        %3401 = vmatpush1.msra.mxu0 %v3373
        %3402 = vmatprep.subr.mxu0 0.0
        %3403 = vmatpush1.msra.mxu0 %v3372
        %3404 = vmatprep.subr.mxu0 0.0
        %3405 = vmatpush1.msra.mxu0 %v3371
        %3406 = vmatprep.subr.mxu0 0.0
        %3407 = vmatpush1.msra.mxu0 %v3370
        %3408 = vmatprep.subr.mxu0 0.0
        %3409 = vmatpush1.msra.mxu0 %v3369
        %3410 = vmatprep.subr.mxu0 0.0
        %3411 = vmatpush1.msra.mxu0 %v3368
        %3412 = vmatprep.subr.mxu0 0.0
        %3413 = vmatpush2.msra.mxu0 0.0
        %3414 = vmatprep.subr.mxu0 0.0
        %3415 = vmatpush2.msra.mxu0 0.0
        %3416 = vmatprep.subr.mxu0 0.0
        %3417 = vmatpush2.msra.mxu0 0.0
        %3418 = vmatprep.subr.mxu0 0.0
        %3419 = vmatpush2.msra.mxu0 0.0
        %3420 = vmatprep.subr.mxu0 0.0
        %3421 = vmatpush2.msra.mxu0 0.0
        %3422 = vmatprep.subr.mxu0 0.0
        %3423 = vmatpush2.msra.mxu0 0.0
        %3424 = vmatprep.subr.mxu0 0.0
        %3425 = vmatpush2.msra.mxu0 0.0
        %3426 = vmatprep.subr.mxu0 0.0
        %3427 = vmatpush2.msra.mxu0 0.0
        %3428 = vmatprep.subr.mxu0 0.0
        %3429 = vmatpush2.msra.mxu0 0.0
        %3430 = vmatprep.subr.mxu0 0.0
        %3431 = vmatpush2.msra.mxu0 0.0
        %3432 = vmatprep.subr.mxu0 0.0
        %3433 = vmatpush2.msra.mxu0 0.0
        %3434 = vmatprep.subr.mxu0 0.0
        %3435 = vmatpush2.msra.mxu0 0.0
        %3436 = vmatprep.subr.mxu0 0.0
        %3437 = vmatpush2.msra.mxu0 0.0
        %3438 = vmatprep.subr.mxu0 0.0
        %3439 = vmatpush2.msra.mxu0 0.0
        %3440 = vmatprep.subr.mxu0 0.0
        %3441 = vmatpush2.msra.mxu0 0.0
        %3442 = vmatprep.subr.mxu0 0.0
        %3443 = vmatpush2.msra.mxu0 0.0
        %3444 = vmatprep.mubr.f32.mxu0 0.0
        %3445 = vmatmul.mubr.f32.gmra.mxu0 %v3378
        %v3446 = vpop.f32.mrf.mxu0
        %v3447 = vadd.f32 0.0, %v3446
        %v3448 = vpop.f32.mrf.mxu0
        %3449 = vdwg.mxu0
        %v3451 = vsel %vm3376, %v3357, 0
        %3453 = vmatprep.subr.mxu0 0.0
        %3454 = vmatpush1.msra.mxu0 0.0
        %3455 = vmatprep.subr.mxu0 0.0
        %3456 = vmatpush1.msra.mxu0 0.0
        %3457 = vmatprep.subr.mxu0 0.0
        %3458 = vmatpush1.msra.mxu0 0.0
        %3459 = vmatprep.subr.mxu0 0.0
        %3460 = vmatpush1.msra.mxu0 0.0
        %3461 = vmatprep.subr.mxu0 0.0
        %3462 = vmatpush1.msra.mxu0 0.0
        %3463 = vmatprep.subr.mxu0 0.0
        %3464 = vmatpush1.msra.mxu0 0.0
        %3465 = vmatprep.subr.mxu0 0.0
        %3466 = vmatpush1.msra.mxu0 0.0
        %3467 = vmatprep.subr.mxu0 0.0
        %3468 = vmatpush1.msra.mxu0 0.0
        %3469 = vmatprep.subr.mxu0 0.0
        %3470 = vmatpush1.msra.mxu0 %v3365
        %3471 = vmatprep.subr.mxu0 0.0
        %3472 = vmatpush1.msra.mxu0 %v3364
        %3473 = vmatprep.subr.mxu0 0.0
        %3474 = vmatpush1.msra.mxu0 %v3363
        %3475 = vmatprep.subr.mxu0 0.0
        %3476 = vmatpush1.msra.mxu0 %v3362
        %3477 = vmatprep.subr.mxu0 0.0
        %3478 = vmatpush1.msra.mxu0 %v3361
        %3479 = vmatprep.subr.mxu0 0.0
        %3480 = vmatpush1.msra.mxu0 %v3360
        %3481 = vmatprep.subr.mxu0 0.0
        %3482 = vmatpush1.msra.mxu0 %v3359
        %3483 = vmatprep.subr.mxu0 0.0
        %3484 = vmatpush1.msra.mxu0 %v3358
        %3485 = vmatprep.subr.mxu0 0.0
        %3486 = vmatpush2.msra.mxu0 0.0
        %3487 = vmatprep.subr.mxu0 0.0
        %3488 = vmatpush2.msra.mxu0 0.0
        %3489 = vmatprep.subr.mxu0 0.0
        %3490 = vmatpush2.msra.mxu0 0.0
        %3491 = vmatprep.subr.mxu0 0.0
        %3492 = vmatpush2.msra.mxu0 0.0
        %3493 = vmatprep.subr.mxu0 0.0
        %3494 = vmatpush2.msra.mxu0 0.0
        %3495 = vmatprep.subr.mxu0 0.0
        %3496 = vmatpush2.msra.mxu0 0.0
        %3497 = vmatprep.subr.mxu0 0.0
        %3498 = vmatpush2.msra.mxu0 0.0
        %3499 = vmatprep.subr.mxu0 0.0
        %3500 = vmatpush2.msra.mxu0 0.0
        %3501 = vmatprep.subr.mxu0 0.0
        %3502 = vmatpush2.msra.mxu0 0.0
        %3503 = vmatprep.subr.mxu0 0.0
        %3504 = vmatpush2.msra.mxu0 0.0
        %3505 = vmatprep.subr.mxu0 0.0
        %3506 = vmatpush2.msra.mxu0 0.0
        %3507 = vmatprep.subr.mxu0 0.0
        %3508 = vmatpush2.msra.mxu0 0.0
        %3509 = vmatprep.subr.mxu0 0.0
        %3510 = vmatpush2.msra.mxu0 0.0
        %3511 = vmatprep.subr.mxu0 0.0
        %3512 = vmatpush2.msra.mxu0 0.0
        %3513 = vmatprep.subr.mxu0 0.0
        %3514 = vmatpush2.msra.mxu0 0.0
        %3515 = vmatprep.subr.mxu0 0.0
        %3516 = vmatpush2.msra.mxu0 0.0
        %3517 = vmatprep.mubr.f32.mxu0 0.0
        %3518 = vmatmul.mubr.f32.gmra.mxu0 %v3451
        %v3519 = vpop.f32.mrf.mxu0
        %v3520 = vadd.f32 %v3447, %v3519
        %v3521 = vpop.f32.mrf.mxu0
        %3522 = vdwg.mxu0
        %v3523 = vmax.f32 %v3353, %v3354
        %s3524 = scalar_lea.vmem %s5, 128
        %v3525 = vld [vmem:[%s3524] sm:$0xff]
        %v3526 = vld [vmem:[%s3524 + $0x8] sm:$0xff]
        %v3527 = vld [vmem:[%s3524 + $0x10] sm:$0xff]
        %v3528 = vld [vmem:[%s3524 + $0x18] sm:$0xff]
        %v3529 = vld [vmem:[%s3524 + $0x20] sm:$0xff]
        %v3530 = vld [vmem:[%s3524 + $0x28] sm:$0xff]
        %v3531 = vld [vmem:[%s3524 + $0x30] sm:$0xff]
        %v3532 = vld [vmem:[%s3524 + $0x38] sm:$0xff]
        %v3534 = vsel %vm3376, %v3523, 0
        %3536 = vmatprep.subr.mxu0 0.0
        %3537 = vmatpush1.msra.mxu0 0.0
        %3538 = vmatprep.subr.mxu0 0.0
        %3539 = vmatpush1.msra.mxu0 0.0
        %3540 = vmatprep.subr.mxu0 0.0
        %3541 = vmatpush1.msra.mxu0 0.0
        %3542 = vmatprep.subr.mxu0 0.0
        %3543 = vmatpush1.msra.mxu0 0.0
        %3544 = vmatprep.subr.mxu0 0.0
        %3545 = vmatpush1.msra.mxu0 0.0
        %3546 = vmatprep.subr.mxu0 0.0
        %3547 = vmatpush1.msra.mxu0 0.0
        %3548 = vmatprep.subr.mxu0 0.0
        %3549 = vmatpush1.msra.mxu0 0.0
        %3550 = vmatprep.subr.mxu0 0.0
        %3551 = vmatpush1.msra.mxu0 0.0
        %3552 = vmatprep.subr.mxu0 0.0
        %3553 = vmatpush1.msra.mxu0 %v3532
        %3554 = vmatprep.subr.mxu0 0.0
        %3555 = vmatpush1.msra.mxu0 %v3531
        %3556 = vmatprep.subr.mxu0 0.0
        %3557 = vmatpush1.msra.mxu0 %v3530
        %3558 = vmatprep.subr.mxu0 0.0
        %3559 = vmatpush1.msra.mxu0 %v3529
        %3560 = vmatprep.subr.mxu0 0.0
        %3561 = vmatpush1.msra.mxu0 %v3528
        %3562 = vmatprep.subr.mxu0 0.0
        %3563 = vmatpush1.msra.mxu0 %v3527
        %3564 = vmatprep.subr.mxu0 0.0
        %3565 = vmatpush1.msra.mxu0 %v3526
        %3566 = vmatprep.subr.mxu0 0.0
        %3567 = vmatpush1.msra.mxu0 %v3525
        %3568 = vmatprep.subr.mxu0 0.0
        %3569 = vmatpush2.msra.mxu0 0.0
        %3570 = vmatprep.subr.mxu0 0.0
        %3571 = vmatpush2.msra.mxu0 0.0
        %3572 = vmatprep.subr.mxu0 0.0
        %3573 = vmatpush2.msra.mxu0 0.0
        %3574 = vmatprep.subr.mxu0 0.0
        %3575 = vmatpush2.msra.mxu0 0.0
        %3576 = vmatprep.subr.mxu0 0.0
        %3577 = vmatpush2.msra.mxu0 0.0
        %3578 = vmatprep.subr.mxu0 0.0
        %3579 = vmatpush2.msra.mxu0 0.0
        %3580 = vmatprep.subr.mxu0 0.0
        %3581 = vmatpush2.msra.mxu0 0.0
        %3582 = vmatprep.subr.mxu0 0.0
        %3583 = vmatpush2.msra.mxu0 0.0
        %3584 = vmatprep.subr.mxu0 0.0
        %3585 = vmatpush2.msra.mxu0 0.0
        %3586 = vmatprep.subr.mxu0 0.0
        %3587 = vmatpush2.msra.mxu0 0.0
        %3588 = vmatprep.subr.mxu0 0.0
        %3589 = vmatpush2.msra.mxu0 0.0
        %3590 = vmatprep.subr.mxu0 0.0
        %3591 = vmatpush2.msra.mxu0 0.0
        %3592 = vmatprep.subr.mxu0 0.0
        %3593 = vmatpush2.msra.mxu0 0.0
        %3594 = vmatprep.subr.mxu0 0.0
        %3595 = vmatpush2.msra.mxu0 0.0
        %3596 = vmatprep.subr.mxu0 0.0
        %3597 = vmatpush2.msra.mxu0 0.0
        %3598 = vmatprep.subr.mxu0 0.0
        %3599 = vmatpush2.msra.mxu0 0.0
        %3600 = vmatprep.mubr.f32.mxu0 0.0
        %3601 = vmatmul.mubr.f32.gmra.mxu0 %v3534
        %v3602 = vpop.f32.mrf.mxu0
        %v3603 = vadd.f32 0.0, %v3602
        %v3604 = vpop.f32.mrf.mxu0
        %3605 = vdwg.mxu0
        %v3606 = vadd.f32 %v3520, %v3603
        %v3607 = vmax.f32 %v3355, %v3356
        %s3608 = scalar_lea.vmem %s5, 192
        %v3609 = vld [vmem:[%s3608] sm:$0xff]
        %v3610 = vld [vmem:[%s3608 + $0x8] sm:$0xff]
        %v3611 = vld [vmem:[%s3608 + $0x10] sm:$0xff]
        %v3612 = vld [vmem:[%s3608 + $0x18] sm:$0xff]
        %v3613 = vld [vmem:[%s3608 + $0x20] sm:$0xff]
        %v3614 = vld [vmem:[%s3608 + $0x28] sm:$0xff]
        %v3615 = vld [vmem:[%s3608 + $0x30] sm:$0xff]
        %v3616 = vld [vmem:[%s3608 + $0x38] sm:$0xff]
        %v3618 = vsel %vm3376, %v3607, 0
        %3620 = vmatprep.subr.mxu0 0.0
        %3621 = vmatpush1.msra.mxu0 0.0
        %3622 = vmatprep.subr.mxu0 0.0
        %3623 = vmatpush1.msra.mxu0 0.0
        %3624 = vmatprep.subr.mxu0 0.0
        %3625 = vmatpush1.msra.mxu0 0.0
        %3626 = vmatprep.subr.mxu0 0.0
        %3627 = vmatpush1.msra.mxu0 0.0
        %3628 = vmatprep.subr.mxu0 0.0
        %3629 = vmatpush1.msra.mxu0 0.0
        %3630 = vmatprep.subr.mxu0 0.0
        %3631 = vmatpush1.msra.mxu0 0.0
        %3632 = vmatprep.subr.mxu0 0.0
        %3633 = vmatpush1.msra.mxu0 0.0
        %3634 = vmatprep.subr.mxu0 0.0
        %3635 = vmatpush1.msra.mxu0 0.0
        %3636 = vmatprep.subr.mxu0 0.0
        %3637 = vmatpush1.msra.mxu0 %v3616
        %3638 = vmatprep.subr.mxu0 0.0
        %3639 = vmatpush1.msra.mxu0 %v3615
        %3640 = vmatprep.subr.mxu0 0.0
        %3641 = vmatpush1.msra.mxu0 %v3614
        %3642 = vmatprep.subr.mxu0 0.0
        %3643 = vmatpush1.msra.mxu0 %v3613
        %3644 = vmatprep.subr.mxu0 0.0
        %3645 = vmatpush1.msra.mxu0 %v3612
        %3646 = vmatprep.subr.mxu0 0.0
        %3647 = vmatpush1.msra.mxu0 %v3611
        %3648 = vmatprep.subr.mxu0 0.0
        %3649 = vmatpush1.msra.mxu0 %v3610
        %3650 = vmatprep.subr.mxu0 0.0
        %3651 = vmatpush1.msra.mxu0 %v3609
        %3652 = vmatprep.subr.mxu0 0.0
        %3653 = vmatpush2.msra.mxu0 0.0
        %3654 = vmatprep.subr.mxu0 0.0
        %3655 = vmatpush2.msra.mxu0 0.0
        %3656 = vmatprep.subr.mxu0 0.0
        %3657 = vmatpush2.msra.mxu0 0.0
        %3658 = vmatprep.subr.mxu0 0.0
        %3659 = vmatpush2.msra.mxu0 0.0
        %3660 = vmatprep.subr.mxu0 0.0
        %3661 = vmatpush2.msra.mxu0 0.0
        %3662 = vmatprep.subr.mxu0 0.0
        %3663 = vmatpush2.msra.mxu0 0.0
        %3664 = vmatprep.subr.mxu0 0.0
        %3665 = vmatpush2.msra.mxu0 0.0
        %3666 = vmatprep.subr.mxu0 0.0
        %3667 = vmatpush2.msra.mxu0 0.0
        %3668 = vmatprep.subr.mxu0 0.0
        %3669 = vmatpush2.msra.mxu0 0.0
        %3670 = vmatprep.subr.mxu0 0.0
        %3671 = vmatpush2.msra.mxu0 0.0
        %3672 = vmatprep.subr.mxu0 0.0
        %3673 = vmatpush2.msra.mxu0 0.0
        %3674 = vmatprep.subr.mxu0 0.0
        %3675 = vmatpush2.msra.mxu0 0.0
        %3676 = vmatprep.subr.mxu0 0.0
        %3677 = vmatpush2.msra.mxu0 0.0
        %3678 = vmatprep.subr.mxu0 0.0
        %3679 = vmatpush2.msra.mxu0 0.0
        %3680 = vmatprep.subr.mxu0 0.0
        %3681 = vmatpush2.msra.mxu0 0.0
        %3682 = vmatprep.subr.mxu0 0.0
        %3683 = vmatpush2.msra.mxu0 0.0
        %3684 = vmatprep.mubr.f32.mxu0 0.0
        %3685 = vmatmul.mubr.f32.gmra.mxu0 %v3618
        %v3686 = vpop.f32.mrf.mxu0
        %v3687 = vadd.f32 0.0, %v3686
        %v3688 = vpop.f32.mrf.mxu0
        %3689 = vdwg.mxu0
        %v3690 = vadd.f32 %v3606, %v3687
        %v3691 = vld [vmem:[%s6] sm:$0x1]
        %v3693 = vlaneseq
        %v3694 = vshrl.u32 %v3693, 7
        %v3695 = vsub.s32 0, %v3694
        %v3696 = vrot.slane %v3691, %v3695
        %v3698 = vadd.f32 %v3690, %v3696
        %v3699 = vmax.f32 %v3698, 0.0
        %v3700 = vld [vmem:[%s7] sm:$0xff]
        %v3701 = vld [vmem:[%s7 + $0x8] sm:$0xff]
        %v3702 = vld [vmem:[%s7 + $0x10] sm:$0xff]
        %v3703 = vld [vmem:[%s7 + $0x18] sm:$0xff]
        %v3704 = vld [vmem:[%s8] sm:$0x1]
        %v3706 = vlaneseq
        %v3707 = vshrl.u32 %v3706, 7
        %v3708 = vsub.s32 0, %v3707
        %v3709 = vrot.slane %v3704, %v3708
        %vm3711 = vcmask 261120
        %v3713 = vsel %vm3711, %v3699, 0
        %3715 = vmatprep.subr.mxu0 0.0
        %3716 = vmatpush1.msra.mxu0 0.0
        %3717 = vmatprep.subr.mxu0 0.0
        %3718 = vmatpush1.msra.mxu0 0.0
        %3719 = vmatprep.subr.mxu0 0.0
        %3720 = vmatpush1.msra.mxu0 0.0
        %3721 = vmatprep.subr.mxu0 0.0
        %3722 = vmatpush1.msra.mxu0 0.0
        %3723 = vmatprep.subr.mxu0 0.0
        %3724 = vmatpush1.msra.mxu0 0.0
        %3725 = vmatprep.subr.mxu0 0.0
        %3726 = vmatpush1.msra.mxu0 0.0
        %3727 = vmatprep.subr.mxu0 0.0
        %3728 = vmatpush1.msra.mxu0 0.0
        %3729 = vmatprep.subr.mxu0 0.0
        %3730 = vmatpush1.msra.mxu0 0.0
        %3731 = vmatprep.subr.mxu0 0.0
        %3732 = vmatpush1.msra.mxu0 0.0
        %3733 = vmatprep.subr.mxu0 0.0
        %3734 = vmatpush1.msra.mxu0 0.0
        %3735 = vmatprep.subr.mxu0 0.0
        %3736 = vmatpush1.msra.mxu0 0.0
        %3737 = vmatprep.subr.mxu0 0.0
        %3738 = vmatpush1.msra.mxu0 0.0
        %3739 = vmatprep.subr.mxu0 0.0
        %3740 = vmatpush1.msra.mxu0 %v3703
        %3741 = vmatprep.subr.mxu0 0.0
        %3742 = vmatpush1.msra.mxu0 %v3702
        %3743 = vmatprep.subr.mxu0 0.0
        %3744 = vmatpush1.msra.mxu0 %v3701
        %3745 = vmatprep.subr.mxu0 0.0
        %3746 = vmatpush1.msra.mxu0 %v3700
        %3747 = vmatprep.subr.mxu0 0.0
        %3748 = vmatpush2.msra.mxu0 0.0
        %3749 = vmatprep.subr.mxu0 0.0
        %3750 = vmatpush2.msra.mxu0 0.0
        %3751 = vmatprep.subr.mxu0 0.0
        %3752 = vmatpush2.msra.mxu0 0.0
        %3753 = vmatprep.subr.mxu0 0.0
        %3754 = vmatpush2.msra.mxu0 0.0
        %3755 = vmatprep.subr.mxu0 0.0
        %3756 = vmatpush2.msra.mxu0 0.0
        %3757 = vmatprep.subr.mxu0 0.0
        %3758 = vmatpush2.msra.mxu0 0.0
        %3759 = vmatprep.subr.mxu0 0.0
        %3760 = vmatpush2.msra.mxu0 0.0
        %3761 = vmatprep.subr.mxu0 0.0
        %3762 = vmatpush2.msra.mxu0 0.0
        %3763 = vmatprep.subr.mxu0 0.0
        %3764 = vmatpush2.msra.mxu0 0.0
        %3765 = vmatprep.subr.mxu0 0.0
        %3766 = vmatpush2.msra.mxu0 0.0
        %3767 = vmatprep.subr.mxu0 0.0
        %3768 = vmatpush2.msra.mxu0 0.0
        %3769 = vmatprep.subr.mxu0 0.0
        %3770 = vmatpush2.msra.mxu0 0.0
        %3771 = vmatprep.subr.mxu0 0.0
        %3772 = vmatpush2.msra.mxu0 0.0
        %3773 = vmatprep.subr.mxu0 0.0
        %3774 = vmatpush2.msra.mxu0 0.0
        %3775 = vmatprep.subr.mxu0 0.0
        %3776 = vmatpush2.msra.mxu0 0.0
        %3777 = vmatprep.subr.mxu0 0.0
        %3778 = vmatpush2.msra.mxu0 0.0
        %3779 = vmatprep.mubr.f32.mxu0 0.0
        %3780 = vmatmul.mubr.f32.gmra.mxu0 %v3713
        %v3781 = vpop.f32.mrf.mxu0
        %v3782 = vadd.f32 %v3709, %v3781
        %v3783 = vpop.f32.mrf.mxu0
        %3784 = vdwg.mxu0
        %v3785 = vmax.f32 %v3782, 0.0
        %v3786 = vld [vmem:[%s9] sm:$0xff]
        %v3787 = vld [vmem:[%s9 + $0x8] sm:$0xff]
        %v3788 = vld [vmem:[%s9 + $0x10] sm:$0xff]
        %v3789 = vld [vmem:[%s9 + $0x18] sm:$0xff]
        %v3790 = vld [vmem:[%s10] sm:$0x1]
        %v3792 = vlaneseq
        %v3793 = vshrl.u32 %v3792, 7
        %v3794 = vsub.s32 0, %v3793
        %v3795 = vrot.slane %v3790, %v3794
        %v3798 = vsel %vm3711, %v3785, 0
        %3800 = vmatprep.subr.mxu0 0.0
        %3801 = vmatpush1.msra.mxu0 0.0
        %3802 = vmatprep.subr.mxu0 0.0
        %3803 = vmatpush1.msra.mxu0 0.0
        %3804 = vmatprep.subr.mxu0 0.0
        %3805 = vmatpush1.msra.mxu0 0.0
        %3806 = vmatprep.subr.mxu0 0.0
        %3807 = vmatpush1.msra.mxu0 0.0
        %3808 = vmatprep.subr.mxu0 0.0
        %3809 = vmatpush1.msra.mxu0 0.0
        %3810 = vmatprep.subr.mxu0 0.0
        %3811 = vmatpush1.msra.mxu0 0.0
        %3812 = vmatprep.subr.mxu0 0.0
        %3813 = vmatpush1.msra.mxu0 0.0
        %3814 = vmatprep.subr.mxu0 0.0
        %3815 = vmatpush1.msra.mxu0 0.0
        %3816 = vmatprep.subr.mxu0 0.0
        %3817 = vmatpush1.msra.mxu0 0.0
        %3818 = vmatprep.subr.mxu0 0.0
        %3819 = vmatpush1.msra.mxu0 0.0
        %3820 = vmatprep.subr.mxu0 0.0
        %3821 = vmatpush1.msra.mxu0 0.0
        %3822 = vmatprep.subr.mxu0 0.0
        %3823 = vmatpush1.msra.mxu0 0.0
        %3824 = vmatprep.subr.mxu0 0.0
        %3825 = vmatpush1.msra.mxu0 %v3789
        %3826 = vmatprep.subr.mxu0 0.0
        %3827 = vmatpush1.msra.mxu0 %v3788
        %3828 = vmatprep.subr.mxu0 0.0
        %3829 = vmatpush1.msra.mxu0 %v3787
        %3830 = vmatprep.subr.mxu0 0.0
        %3831 = vmatpush1.msra.mxu0 %v3786
        %3832 = vmatprep.subr.mxu0 0.0
        %3833 = vmatpush2.msra.mxu0 0.0
        %3834 = vmatprep.subr.mxu0 0.0
        %3835 = vmatpush2.msra.mxu0 0.0
        %3836 = vmatprep.subr.mxu0 0.0
        %3837 = vmatpush2.msra.mxu0 0.0
        %3838 = vmatprep.subr.mxu0 0.0
        %3839 = vmatpush2.msra.mxu0 0.0
        %3840 = vmatprep.subr.mxu0 0.0
        %3841 = vmatpush2.msra.mxu0 0.0
        %3842 = vmatprep.subr.mxu0 0.0
        %3843 = vmatpush2.msra.mxu0 0.0
        %3844 = vmatprep.subr.mxu0 0.0
        %3845 = vmatpush2.msra.mxu0 0.0
        %3846 = vmatprep.subr.mxu0 0.0
        %3847 = vmatpush2.msra.mxu0 0.0
        %3848 = vmatprep.subr.mxu0 0.0
        %3849 = vmatpush2.msra.mxu0 0.0
        %3850 = vmatprep.subr.mxu0 0.0
        %3851 = vmatpush2.msra.mxu0 0.0
        %3852 = vmatprep.subr.mxu0 0.0
        %3853 = vmatpush2.msra.mxu0 0.0
        %3854 = vmatprep.subr.mxu0 0.0
        %3855 = vmatpush2.msra.mxu0 0.0
        %3856 = vmatprep.subr.mxu0 0.0
        %3857 = vmatpush2.msra.mxu0 0.0
        %3858 = vmatprep.subr.mxu0 0.0
        %3859 = vmatpush2.msra.mxu0 0.0
        %3860 = vmatprep.subr.mxu0 0.0
        %3861 = vmatpush2.msra.mxu0 0.0
        %3862 = vmatprep.subr.mxu0 0.0
        %3863 = vmatpush2.msra.mxu0 0.0
        %3864 = vmatprep.mubr.f32.mxu0 0.0
        %3865 = vmatmul.mubr.f32.gmra.mxu0 %v3798
        %v3866 = vpop.f32.mrf.mxu0
        %v3867 = vadd.f32 %v3795, %v3866
        %v3868 = vpop.f32.mrf.mxu0
        %3869 = vdwg.mxu0
        %v3870 = vmax.f32 %v3867, 0.0
        %vm3871 = vcmask 130048
        %3872 = vst.msk [vmem:[%s527] sm:$0xff] %vm3871, %v3870
        %p3873 = scmp.lt.s32.totalorder %s22, 1
        %s3874 = scalar_select %p3873, %s22, 1
        %s3875 = smul.addr %s3874, 8
        %s3876 = scalar_lea.vmem %s11, %s3875
        // Predicated region
        $region103: #{lenet5_forward.1} parent=97 // pred_check
          %p3877 = pneg %p276
        $region104: #{lenet5_forward.1} parent=97 // pred_check_branch
          %3879 = sbr.rel (%p3877) target = $region106
        $region105: #{lenet5_forward.1} parent=97 // pred_region
          _
        $region106: #{lenet5_forward.1} parent=97 // pred_fallthru
          _
      $region98: #{lenet5_forward.1} parent=5 // pred_fallthru
        _
      %p3880 = scmp.le.s32.totalorder 2, %s17
      // Predicated region
      $region107: #{lenet5_forward.1} parent=5 // pred_check
        %p3881 = pneg %p3880
      $region108: #{lenet5_forward.1} parent=5 // pred_check_branch
        %3883 = sbr.rel (%p3881) target = $region110
      $region109: #{lenet5_forward.1} parent=5 // pred_region
        %s3884 = ssub.s32 %s17, 2
        // Predicated region
        $region111: #{lenet5_forward.1} parent=109 // pred_check
          %p3885 = pneg %p282
        $region112: #{lenet5_forward.1} parent=109 // pred_check_branch
          %3887 = sbr.rel (%p3885) target = $region114
        $region113: #{lenet5_forward.1} parent=109 // pred_region
          %p3888 = scmp.lt.s32.totalorder %s23, 1
          %s3889 = scalar_select %p3888, %s23, 1
          %s3890 = smul.addr %s3889, 8
          %s3891 = scalar_lea.vmem %s11, %s3890
        $region114: #{lenet5_forward.1} parent=109 // pred_fallthru
          _
      $region110: #{lenet5_forward.1} parent=5 // pred_fallthru
        _
    $region6: #{lenet5_forward.1} parent=1 // loop_footer
      %s21 = sadd.s32 1, %s17
    $region7: #{lenet5_forward.1} parent=1 // loop_footer_branch
      %16 = sbr.rel target = $region3
    $region8: #{lenet5_forward.1} parent=1 // loop_exit
      _

</llo_original>
